<compile_context>
chip_gen: v5e
topology: v5e:2x2
jax: 0.10.0
libtpu: 0.0.40
codegen_flags: <defaults>
</compile_context>

<pallas_src>
import functools

import numpy as np
import jax
import jax.numpy as jnp
from jax.experimental import pallas as pl
from jax.experimental.pallas import tpu as pltpu


# ------------------------------ Pallas kernel -------------------------------

def _basic_block_kernel(x_ref, mask_ref, w1_ref, s1_ref, b1_ref,
                        w2_ref, s2_ref, b2_ref, out_ref,
                        patch_ref, *, C, L, offsets):
    """Fused conv1+bn1+relu -> conv2+bn2 -> +residual -> relu for one batch n.

    x_ref:     (1, C, L)   f32   activations, spatial flattened on lanes
    mask_ref:  (27, L)     f32   channel-invariant tap validity (1.0 = in-volume)
    w*_ref:    (C, 27*C)   bf16  conv weights, cols ordered (kd, kh, kw, cin)
    s*_ref:    (C, 1)      f32   folded BatchNorm scale
    b*_ref:    (C, 1)      f32   folded BatchNorm bias
    out_ref:   (1, C, L)   f32
    patch_ref: (27*C, L)   bf16  im2col matrix (scratch; f32 fallback if C%16!=0)
    """
    x = x_ref[0]                                        # (C, L) f32

    def im2col(src):
        # Build the (27*C, L) im2col matrix straight into (bf16) VMEM:
        # one static lane rotation (XLU) per tap, masked in f32 (v5e-friendly),
        # cast exactly once on store.  No staging buffer, no margins.
        for k, off in enumerate(offsets):               # static unroll, 27 taps
            rows = slice(k * C, (k + 1) * C)
            if off == 0:
                # centre tap: no shift, mask row is all-ones
                patch_ref[rows, :] = src.astype(patch_ref.dtype)
            else:
                # out[:, l] = src[:, (l + off) % L]  (== jnp.roll(src, -off))
                tap = pltpu.roll(src, (-off) % L, 1)
                tap = tap * mask_ref[k:k + 1, :]        # kill wrapped / OOB taps
                patch_ref[rows, :] = tap.astype(patch_ref.dtype)

    def conv_bn(w_ref, s_ref, b_ref):
        patches = patch_ref[...]
        if patches.dtype != jnp.bfloat16:               # trace-time branch (fallback path)
            patches = patches.astype(jnp.bfloat16)
        # Single big-K MXU matmul: (C, 27*C) x (27*C, L), f32 accumulation.
        acc = jnp.dot(w_ref[...], patches, preferred_element_type=jnp.float32)
        # Folded BN applied once to the final accumulator (per-channel affine).
        return acc * s_ref[...] + b_ref[...]            # (C, L) f32

    # stage 1: conv1 -> bn1 -> relu
    im2col(x)
    h = jnp.maximum(conv_bn(w1_ref, s1_ref, b1_ref), 0.0)

    # stage 2: conv2 -> bn2 -> +residual -> relu   (h never leaves VMEM)
    im2col(h)
    y = conv_bn(w2_ref, s2_ref, b2_ref) + x
    out_ref[0] = jnp.maximum(y, 0.0).astype(out_ref.dtype)


# ------------------------------ wrapper glue --------------------------------

def _fold_bn(gamma, beta, mean, var, eps=1e-5):
    scale = gamma / jnp.sqrt(var + eps)
    bias = beta - mean * scale
    return scale, bias


def _conv_weight_matrix(w_pt):
    """PyTorch (Cout, Cin, 3, 3, 3) -> (Cout, 27*Cin) bf16, cols = (kd,kh,kw,cin)."""
    co, ci = w_pt.shape[0], w_pt.shape[1]
    return jnp.transpose(w_pt, (0, 2, 3, 4, 1)).reshape(co, 27 * ci).astype(jnp.bfloat16)


def _tap_geometry(D, H, W):
    """Static tap offsets (flattened spatial) and channel-invariant validity mask (27, L)."""
    L = D * H * W
    l = np.arange(L)
    d, h, w = l // (H * W), (l // W) % H, l % W
    offsets, rows = [], []
    for kd in range(3):
        for kh in range(3):
            for kw in range(3):
                offsets.append((kd - 1) * H * W + (kh - 1) * W + (kw - 1))
                ok = ((d + kd - 1 >= 0) & (d + kd - 1 < D) &
                      (h + kh - 1 >= 0) & (h + kh - 1 < H) &
                      (w + kw - 1 >= 0) & (w + kw - 1 < W))
                rows.append(ok)
    mask = np.stack(rows).astype(np.float32)            # (27, L) -- no C replication
    return tuple(int(o) for o in offsets), jnp.asarray(mask)


def basic_block_forward(x_ncdhw, params):
    """BasicBlock forward.  x_ncdhw: (N, C, D, H, W), PyTorch layout."""
    N, C, D, H, W = x_ncdhw.shape
    L = D * H * W                                        # lane extent; ideally a multiple of 256
    offsets, mask = _tap_geometry(D, H, W)

    # bf16 patch rows are written in C-row blocks at offsets k*C; keeping them
    # aligned to the (16, 128) bf16 tile needs C % 16 == 0 (true for ResNet-18
    # planes 64/128/256/512).  Otherwise fall back to an f32 patch scratch.
    patch_dtype = jnp.bfloat16 if C % 16 == 0 else jnp.float32

    x_flat = x_ncdhw.reshape(N, C, L).astype(jnp.float32)
    w1 = _conv_weight_matrix(params["conv1_w"])
    w2 = _conv_weight_matrix(params["conv2_w"])
    s1, b1 = _fold_bn(params["bn1_gamma"], params["bn1_beta"],
                      params["bn1_mean"], params["bn1_var"])
    s2, b2 = _fold_bn(params["bn2_gamma"], params["bn2_beta"],
                      params["bn2_mean"], params["bn2_var"])
    s1 = s1.reshape(C, 1).astype(jnp.float32)
    b1 = b1.reshape(C, 1).astype(jnp.float32)
    s2 = s2.reshape(C, 1).astype(jnp.float32)
    b2 = b2.reshape(C, 1).astype(jnp.float32)

    kern = functools.partial(_basic_block_kernel, C=C, L=L, offsets=offsets)

    full2d = lambda n: (0, 0)
    grid_spec = pltpu.PrefetchScalarGridSpec(
        num_scalar_prefetch=0,
        grid=(N,),
        in_specs=[
            pl.BlockSpec((1, C, L), lambda n: (n, 0, 0)),   # x (also the residual)
            pl.BlockSpec((27, L), full2d),                  # channel-invariant tap mask
            pl.BlockSpec((C, 27 * C), full2d),              # w1 (bf16)
            pl.BlockSpec((C, 1), full2d),                   # scale1
            pl.BlockSpec((C, 1), full2d),                   # bias1
            pl.BlockSpec((C, 27 * C), full2d),              # w2 (bf16)
            pl.BlockSpec((C, 1), full2d),                   # scale2
            pl.BlockSpec((C, 1), full2d),                   # bias2
        ],
        out_specs=pl.BlockSpec((1, C, L), lambda n: (n, 0, 0)),
        scratch_shapes=[pltpu.VMEM((27 * C, L), patch_dtype)],   # im2col patches
    )

    # Advisory cost + VMEM budget (explicit limit matters most on v7x's 64 MiB).
    flops = N * 2 * 2 * (27 * C) * C * L                     # two MXU matmuls per batch
    bytes_accessed = (2 * N * C * L * 4                      # x + out
                      + 27 * L * 4                           # mask
                      + 2 * C * 27 * C * 2                   # weights
                      + 4 * C * 4)                           # folded BN scale/bias
    vmem_est = (27 * C * L * jnp.dtype(patch_dtype).itemsize # patch scratch
                + 4 * C * L * 4                              # x/out blocks, double-buffered
                + 2 * 27 * L * 4                             # mask
                + 4 * C * 27 * C * 2                         # weights
                + (2 << 20))                                 # headroom
    vmem_limit = int(min(max(vmem_est, 32 << 20), 64 << 20))

    out = pl.pallas_call(
        kern,
        out_shape=jax.ShapeDtypeStruct((N, C, L), jnp.float32),
        grid_spec=grid_spec,
        compiler_params=pltpu.CompilerParams(
            dimension_semantics=("parallel",),
            vmem_limit_bytes=vmem_limit),
        cost_estimate=pl.CostEstimate(flops=flops, transcendentals=0,
                                      bytes_accessed=bytes_accessed),
    )(x_flat, mask, w1, s1, b1, w2, s2, b2)
    return out.reshape(N, C, D, H, W)


# --------------------------- pure-JAX reference -----------------------------

def _reference_forward(x_ncdhw, params):
    x = jnp.transpose(x_ncdhw, (0, 2, 3, 4, 1)).astype(jnp.float32)

    def conv(inp, w_pt):
        w = jnp.transpose(w_pt, (2, 3, 4, 1, 0))  # DHWIO
        return jax.lax.conv_general_dilated(
            inp, w, window_strides=(1, 1, 1), padding="SAME",
            dimension_numbers=("NDHWC", "DHWIO", "NDHWC"))

    s1, b1 = _fold_bn(params["bn1_gamma"], params["bn1_beta"],
                      params["bn1_mean"], params["bn1_var"])
    s2, b2 = _fold_bn(params["bn2_gamma"], params["bn2_beta"],
                      params["bn2_mean"], params["bn2_var"])

    h = jnp.maximum(conv(x, params["conv1_w"]) * s1 + b1, 0.0)
    out = jnp.maximum(conv(h, params["conv2_w"]) * s2 + b2 + x, 0.0)
    return jnp.transpose(out, (0, 4, 1, 2, 3))


# --------------------------------- main --------------------------------------

if __name__ == "__main__":
    # Small demo shape: inplanes == planes, stride=1.  C=16 keeps the bf16
    # im2col rows tile-aligned; L = 8*8*8 = 512 is a multiple of 256 (MXU-friendly).
    N, C, D, H, W = 2, 16, 8, 8, 8
    key = jax.random.PRNGKey(0)
    ks = jax.random.split(key, 11)

    wscale = 0.05  # ~Kaiming for fan_in = 27*C
    params = {
        "conv1_w": wscale * jax.random.normal(ks[0], (C, C, 3, 3, 3), jnp.float32),
        "conv2_w": wscale * jax.random.normal(ks[1], (C, C, 3, 3, 3), jnp.float32),
        "bn1_gamma": 1.0 + 0.1 * jax.random.normal(ks[2], (C,), jnp.float32),
        "bn1_beta": 0.1 * jax.random.normal(ks[3], (C,), jnp.float32),
        "bn1_mean": 0.05 * jax.random.normal(ks[4], (C,), jnp.float32),
        "bn1_var": 1.0 + 0.1 * jax.random.uniform(ks[5], (C,), jnp.float32),
        "bn2_gamma": 1.0 + 0.1 * jax.random.normal(ks[6], (C,), jnp.float32),
        "bn2_beta": 0.1 * jax.random.normal(ks[7], (C,), jnp.float32),
        "bn2_mean": 0.05 * jax.random.normal(ks[8], (C,), jnp.float32),
        "bn2_var": 1.0 + 0.1 * jax.random.uniform(ks[9], (C,), jnp.float32),
    }

    x = jax.random.normal(ks[10], (N, C, D, H, W), jnp.float32)

    out = jax.block_until_ready(basic_block_forward(x, params))
    ref = jax.block_until_ready(_reference_forward(x, params))

    assert out.shape == (N, C, D, H, W)
    # bf16 MXU operands with K = 27*C = 432 (f32 accumulation) vs the pure-f32
    # reference -> loose tolerance; acceptable for inference.
    assert jnp.allclose(out, ref, atol=7.5e-2, rtol=5e-2), \
        f"max err {jnp.max(jnp.abs(out - ref))}"

    print("KERNEL_OK")
</pallas_src>

<mosaic_0001>
module attributes {stable_mosaic.version = 11 : i64} {
  func.func @_basic_block_kernel(%arg0: i32, %arg1: memref<1x16x512xf32, #tpu.memory_space<vmem>>, %arg2: memref<27x512xf32, #tpu.memory_space<vmem>>, %arg3: memref<16x432xbf16, #tpu.memory_space<vmem>>, %arg4: memref<16x1xf32, #tpu.memory_space<vmem>>, %arg5: memref<16x1xf32, #tpu.memory_space<vmem>>, %arg6: memref<16x432xbf16, #tpu.memory_space<vmem>>, %arg7: memref<16x1xf32, #tpu.memory_space<vmem>>, %arg8: memref<16x1xf32, #tpu.memory_space<vmem>>, %arg9: memref<1x16x512xf32, #tpu.memory_space<vmem>>, %arg10: memref<432x512xbf16, #tpu.memory_space<vmem>>) attributes {dimension_semantics = [#tpu.dimension_semantics<parallel>], iteration_bounds = array<i64: 2>, scalar_prefetch = 0 : i64, scratch_operands = 1 : i64, tpu.core_type = #tpu.core_type<tc>, window_params = [{transform_indices = @transform_0, window_bounds = array<i64: 1, 16, 512>}, {pipeline_mode = #tpu.pipeline_mode<synchronous>, transform_indices = @transform_1, window_bounds = array<i64: 27, 512>}, {pipeline_mode = #tpu.pipeline_mode<synchronous>, transform_indices = @transform_2, window_bounds = array<i64: 16, 432>}, {pipeline_mode = #tpu.pipeline_mode<synchronous>, transform_indices = @transform_3, window_bounds = array<i64: 16, 1>}, {pipeline_mode = #tpu.pipeline_mode<synchronous>, transform_indices = @transform_4, window_bounds = array<i64: 16, 1>}, {pipeline_mode = #tpu.pipeline_mode<synchronous>, transform_indices = @transform_5, window_bounds = array<i64: 16, 432>}, {pipeline_mode = #tpu.pipeline_mode<synchronous>, transform_indices = @transform_6, window_bounds = array<i64: 16, 1>}, {pipeline_mode = #tpu.pipeline_mode<synchronous>, transform_indices = @transform_7, window_bounds = array<i64: 16, 1>}, {transform_indices = @transform_8, window_bounds = array<i64: 1, 16, 512>}]} {
    %c0 = arith.constant 0 : index
    %c0_0 = arith.constant 0 : index
    %c0_1 = arith.constant 0 : index
    %0 = vector.load %arg1[%c0, %c0_0, %c0_1] : memref<1x16x512xf32, #tpu.memory_space<vmem>>, vector<1x16x512xf32>
    %1 = vector.shape_cast %0 : vector<1x16x512xf32> to vector<16x512xf32>
    %c73_i32 = arith.constant 73 : i32
    %2 = tpu.dynamic_rotate %1 by %c73_i32 dim 1 : vector<16x512xf32>, i32 -> vector<16x512xf32>
    %c0_2 = arith.constant 0 : index
    %c0_3 = arith.constant 0 : index
    %3 = vector.load %arg2[%c0_2, %c0_3] : memref<27x512xf32, #tpu.memory_space<vmem>>, vector<1x512xf32>
    %4 = vector.broadcast %3 : vector<1x512xf32> to vector<16x512xf32>
    %5 = arith.mulf %2, %4 : vector<16x512xf32>
    %6 = arith.truncf %5 : vector<16x512xf32> to vector<16x512xbf16>
    %c0_4 = arith.constant 0 : index
    %c0_5 = arith.constant 0 : index
    %7 = vector.load %arg10[%c0_4, %c0_5] : memref<432x512xbf16, #tpu.memory_space<vmem>>, vector<16x512xbf16>
    tpu.vector_store %arg10[%c0_4, %c0_5], %6 {strides = array<i32>} : memref<432x512xbf16, #tpu.memory_space<vmem>>, vector<16x512xbf16>,
    %c72_i32 = arith.constant 72 : i32
    %8 = tpu.dynamic_rotate %1 by %c72_i32 dim 1 : vector<16x512xf32>, i32 -> vector<16x512xf32>
    %c1 = arith.constant 1 : index
    %c0_6 = arith.constant 0 : index
    %9 = vector.load %arg2[%c1, %c0_6] : memref<27x512xf32, #tpu.memory_space<vmem>>, vector<1x512xf32>
    %10 = vector.broadcast %9 : vector<1x512xf32> to vector<16x512xf32>
    %11 = arith.mulf %8, %10 : vector<16x512xf32>
    %12 = arith.truncf %11 : vector<16x512xf32> to vector<16x512xbf16>
    %c16 = arith.constant 16 : index
    %c0_7 = arith.constant 0 : index
    %13 = vector.load %arg10[%c16, %c0_7] : memref<432x512xbf16, #tpu.memory_space<vmem>>, vector<16x512xbf16>
    tpu.vector_store %arg10[%c16, %c0_7], %12 {strides = array<i32>} : memref<432x512xbf16, #tpu.memory_space<vmem>>, vector<16x512xbf16>,
    %c71_i32 = arith.constant 71 : i32
    %14 = tpu.dynamic_rotate %1 by %c71_i32 dim 1 : vector<16x512xf32>, i32 -> vector<16x512xf32>
    %c2 = arith.constant 2 : index
    %c0_8 = arith.constant 0 : index
    %15 = vector.load %arg2[%c2, %c0_8] : memref<27x512xf32, #tpu.memory_space<vmem>>, vector<1x512xf32>
    %16 = vector.broadcast %15 : vector<1x512xf32> to vector<16x512xf32>
    %17 = arith.mulf %14, %16 : vector<16x512xf32>
    %18 = arith.truncf %17 : vector<16x512xf32> to vector<16x512xbf16>
    %c32 = arith.constant 32 : index
    %c0_9 = arith.constant 0 : index
    %19 = vector.load %arg10[%c32, %c0_9] : memref<432x512xbf16, #tpu.memory_space<vmem>>, vector<16x512xbf16>
    tpu.vector_store %arg10[%c32, %c0_9], %18 {strides = array<i32>} : memref<432x512xbf16, #tpu.memory_space<vmem>>, vector<16x512xbf16>,
    %c65_i32 = arith.constant 65 : i32
    %20 = tpu.dynamic_rotate %1 by %c65_i32 dim 1 : vector<16x512xf32>, i32 -> vector<16x512xf32>
    %c3 = arith.constant 3 : index
    %c0_10 = arith.constant 0 : index
    %21 = vector.load %arg2[%c3, %c0_10] : memref<27x512xf32, #tpu.memory_space<vmem>>, vector<1x512xf32>
    %22 = vector.broadcast %21 : vector<1x512xf32> to vector<16x512xf32>
    %23 = arith.mulf %20, %22 : vector<16x512xf32>
    %24 = arith.truncf %23 : vector<16x512xf32> to vector<16x512xbf16>
    %c48 = arith.constant 48 : index
    %c0_11 = arith.constant 0 : index
    %25 = vector.load %arg10[%c48, %c0_11] : memref<432x512xbf16, #tpu.memory_space<vmem>>, vector<16x512xbf16>
    tpu.vector_store %arg10[%c48, %c0_11], %24 {strides = array<i32>} : memref<432x512xbf16, #tpu.memory_space<vmem>>, vector<16x512xbf16>,
    %c64_i32 = arith.constant 64 : i32
    %26 = tpu.dynamic_rotate %1 by %c64_i32 dim 1 : vector<16x512xf32>, i32 -> vector<16x512xf32>
    %c4 = arith.constant 4 : index
    %c0_12 = arith.constant 0 : index
    %27 = vector.load %arg2[%c4, %c0_12] : memref<27x512xf32, #tpu.memory_space<vmem>>, vector<1x512xf32>
    %28 = vector.broadcast %27 : vector<1x512xf32> to vector<16x512xf32>
    %29 = arith.mulf %26, %28 : vector<16x512xf32>
    %30 = arith.truncf %29 : vector<16x512xf32> to vector<16x512xbf16>
    %c64 = arith.constant 64 : index
    %c0_13 = arith.constant 0 : index
    %31 = vector.load %arg10[%c64, %c0_13] : memref<432x512xbf16, #tpu.memory_space<vmem>>, vector<16x512xbf16>
    tpu.vector_store %arg10[%c64, %c0_13], %30 {strides = array<i32>} : memref<432x512xbf16, #tpu.memory_space<vmem>>, vector<16x512xbf16>,
    %c63_i32 = arith.constant 63 : i32
    %32 = tpu.dynamic_rotate %1 by %c63_i32 dim 1 : vector<16x512xf32>, i32 -> vector<16x512xf32>
    %c5 = arith.constant 5 : index
    %c0_14 = arith.constant 0 : index
    %33 = vector.load %arg2[%c5, %c0_14] : memref<27x512xf32, #tpu.memory_space<vmem>>, vector<1x512xf32>
    %34 = vector.broadcast %33 : vector<1x512xf32> to vector<16x512xf32>
    %35 = arith.mulf %32, %34 : vector<16x512xf32>
    %36 = arith.truncf %35 : vector<16x512xf32> to vector<16x512xbf16>
    %c80 = arith.constant 80 : index
    %c0_15 = arith.constant 0 : index
    %37 = vector.load %arg10[%c80, %c0_15] : memref<432x512xbf16, #tpu.memory_space<vmem>>, vector<16x512xbf16>
    tpu.vector_store %arg10[%c80, %c0_15], %36 {strides = array<i32>} : memref<432x512xbf16, #tpu.memory_space<vmem>>, vector<16x512xbf16>,
    %c57_i32 = arith.constant 57 : i32
    %38 = tpu.dynamic_rotate %1 by %c57_i32 dim 1 : vector<16x512xf32>, i32 -> vector<16x512xf32>
    %c6 = arith.constant 6 : index
    %c0_16 = arith.constant 0 : index
    %39 = vector.load %arg2[%c6, %c0_16] : memref<27x512xf32, #tpu.memory_space<vmem>>, vector<1x512xf32>
    %40 = vector.broadcast %39 : vector<1x512xf32> to vector<16x512xf32>
    %41 = arith.mulf %38, %40 : vector<16x512xf32>
    %42 = arith.truncf %41 : vector<16x512xf32> to vector<16x512xbf16>
    %c96 = arith.constant 96 : index
    %c0_17 = arith.constant 0 : index
    %43 = vector.load %arg10[%c96, %c0_17] : memref<432x512xbf16, #tpu.memory_space<vmem>>, vector<16x512xbf16>
    tpu.vector_store %arg10[%c96, %c0_17], %42 {strides = array<i32>} : memref<432x512xbf16, #tpu.memory_space<vmem>>, vector<16x512xbf16>,
    %c56_i32 = arith.constant 56 : i32
    %44 = tpu.dynamic_rotate %1 by %c56_i32 dim 1 : vector<16x512xf32>, i32 -> vector<16x512xf32>
    %c7 = arith.constant 7 : index
    %c0_18 = arith.constant 0 : index
    %45 = vector.load %arg2[%c7, %c0_18] : memref<27x512xf32, #tpu.memory_space<vmem>>, vector<1x512xf32>
    %46 = vector.broadcast %45 : vector<1x512xf32> to vector<16x512xf32>
    %47 = arith.mulf %44, %46 : vector<16x512xf32>
    %48 = arith.truncf %47 : vector<16x512xf32> to vector<16x512xbf16>
    %c112 = arith.constant 112 : index
    %c0_19 = arith.constant 0 : index
    %49 = vector.load %arg10[%c112, %c0_19] : memref<432x512xbf16, #tpu.memory_space<vmem>>, vector<16x512xbf16>
    tpu.vector_store %arg10[%c112, %c0_19], %48 {strides = array<i32>} : memref<432x512xbf16, #tpu.memory_space<vmem>>, vector<16x512xbf16>,
    %c55_i32 = arith.constant 55 : i32
    %50 = tpu.dynamic_rotate %1 by %c55_i32 dim 1 : vector<16x512xf32>, i32 -> vector<16x512xf32>
    %c8 = arith.constant 8 : index
    %c0_20 = arith.constant 0 : index
    %51 = vector.load %arg2[%c8, %c0_20] : memref<27x512xf32, #tpu.memory_space<vmem>>, vector<1x512xf32>
    %52 = vector.broadcast %51 : vector<1x512xf32> to vector<16x512xf32>
    %53 = arith.mulf %50, %52 : vector<16x512xf32>
    %54 = arith.truncf %53 : vector<16x512xf32> to vector<16x512xbf16>
    %c128 = arith.constant 128 : index
    %c0_21 = arith.constant 0 : index
    %55 = vector.load %arg10[%c128, %c0_21] : memref<432x512xbf16, #tpu.memory_space<vmem>>, vector<16x512xbf16>
    tpu.vector_store %arg10[%c128, %c0_21], %54 {strides = array<i32>} : memref<432x512xbf16, #tpu.memory_space<vmem>>, vector<16x512xbf16>,
    %c9_i32 = arith.constant 9 : i32
    %56 = tpu.dynamic_rotate %1 by %c9_i32 dim 1 : vector<16x512xf32>, i32 -> vector<16x512xf32>
    %c9 = arith.constant 9 : index
    %c0_22 = arith.constant 0 : index
    %57 = vector.load %arg2[%c9, %c0_22] : memref<27x512xf32, #tpu.memory_space<vmem>>, vector<1x512xf32>
    %58 = vector.broadcast %57 : vector<1x512xf32> to vector<16x512xf32>
    %59 = arith.mulf %56, %58 : vector<16x512xf32>
    %60 = arith.truncf %59 : vector<16x512xf32> to vector<16x512xbf16>
    %c144 = arith.constant 144 : index
    %c0_23 = arith.constant 0 : index
    %61 = vector.load %arg10[%c144, %c0_23] : memref<432x512xbf16, #tpu.memory_space<vmem>>, vector<16x512xbf16>
    tpu.vector_store %arg10[%c144, %c0_23], %60 {strides = array<i32>} : memref<432x512xbf16, #tpu.memory_space<vmem>>, vector<16x512xbf16>,
    %c8_i32 = arith.constant 8 : i32
    %62 = tpu.dynamic_rotate %1 by %c8_i32 dim 1 : vector<16x512xf32>, i32 -> vector<16x512xf32>
    %c10 = arith.constant 10 : index
    %c0_24 = arith.constant 0 : index
    %63 = vector.load %arg2[%c10, %c0_24] : memref<27x512xf32, #tpu.memory_space<vmem>>, vector<1x512xf32>
    %64 = vector.broadcast %63 : vector<1x512xf32> to vector<16x512xf32>
    %65 = arith.mulf %62, %64 : vector<16x512xf32>
    %66 = arith.truncf %65 : vector<16x512xf32> to vector<16x512xbf16>
    %c160 = arith.constant 160 : index
    %c0_25 = arith.constant 0 : index
    %67 = vector.load %arg10[%c160, %c0_25] : memref<432x512xbf16, #tpu.memory_space<vmem>>, vector<16x512xbf16>
    tpu.vector_store %arg10[%c160, %c0_25], %66 {strides = array<i32>} : memref<432x512xbf16, #tpu.memory_space<vmem>>, vector<16x512xbf16>,
    %c7_i32 = arith.constant 7 : i32
    %68 = tpu.dynamic_rotate %1 by %c7_i32 dim 1 : vector<16x512xf32>, i32 -> vector<16x512xf32>
    %c11 = arith.constant 11 : index
    %c0_26 = arith.constant 0 : index
    %69 = vector.load %arg2[%c11, %c0_26] : memref<27x512xf32, #tpu.memory_space<vmem>>, vector<1x512xf32>
    %70 = vector.broadcast %69 : vector<1x512xf32> to vector<16x512xf32>
    %71 = arith.mulf %68, %70 : vector<16x512xf32>
    %72 = arith.truncf %71 : vector<16x512xf32> to vector<16x512xbf16>
    %c176 = arith.constant 176 : index
    %c0_27 = arith.constant 0 : index
    %73 = vector.load %arg10[%c176, %c0_27] : memref<432x512xbf16, #tpu.memory_space<vmem>>, vector<16x512xbf16>
    tpu.vector_store %arg10[%c176, %c0_27], %72 {strides = array<i32>} : memref<432x512xbf16, #tpu.memory_space<vmem>>, vector<16x512xbf16>,
    %c1_i32 = arith.constant 1 : i32
    %74 = tpu.dynamic_rotate %1 by %c1_i32 dim 1 : vector<16x512xf32>, i32 -> vector<16x512xf32>
    %c12 = arith.constant 12 : index
    %c0_28 = arith.constant 0 : index
    %75 = vector.load %arg2[%c12, %c0_28] : memref<27x512xf32, #tpu.memory_space<vmem>>, vector<1x512xf32>
    %76 = vector.broadcast %75 : vector<1x512xf32> to vector<16x512xf32>
    %77 = arith.mulf %74, %76 : vector<16x512xf32>
    %78 = arith.truncf %77 : vector<16x512xf32> to vector<16x512xbf16>
    %c192 = arith.constant 192 : index
    %c0_29 = arith.constant 0 : index
    %79 = vector.load %arg10[%c192, %c0_29] : memref<432x512xbf16, #tpu.memory_space<vmem>>, vector<16x512xbf16>
    tpu.vector_store %arg10[%c192, %c0_29], %78 {strides = array<i32>} : memref<432x512xbf16, #tpu.memory_space<vmem>>, vector<16x512xbf16>,
    %80 = arith.truncf %1 : vector<16x512xf32> to vector<16x512xbf16>
    %c208 = arith.constant 208 : index
    %c0_30 = arith.constant 0 : index
    %81 = vector.load %arg10[%c208, %c0_30] : memref<432x512xbf16, #tpu.memory_space<vmem>>, vector<16x512xbf16>
    tpu.vector_store %arg10[%c208, %c0_30], %80 {strides = array<i32>} : memref<432x512xbf16, #tpu.memory_space<vmem>>, vector<16x512xbf16>,
    %c511_i32 = arith.constant 511 : i32
    %82 = tpu.dynamic_rotate %1 by %c511_i32 dim 1 : vector<16x512xf32>, i32 -> vector<16x512xf32>
    %c14 = arith.constant 14 : index
    %c0_31 = arith.constant 0 : index
    %83 = vector.load %arg2[%c14, %c0_31] : memref<27x512xf32, #tpu.memory_space<vmem>>, vector<1x512xf32>
    %84 = vector.broadcast %83 : vector<1x512xf32> to vector<16x512xf32>
    %85 = arith.mulf %82, %84 : vector<16x512xf32>
    %86 = arith.truncf %85 : vector<16x512xf32> to vector<16x512xbf16>
    %c224 = arith.constant 224 : index
    %c0_32 = arith.constant 0 : index
    %87 = vector.load %arg10[%c224, %c0_32] : memref<432x512xbf16, #tpu.memory_space<vmem>>, vector<16x512xbf16>
    tpu.vector_store %arg10[%c224, %c0_32], %86 {strides = array<i32>} : memref<432x512xbf16, #tpu.memory_space<vmem>>, vector<16x512xbf16>,
    %c505_i32 = arith.constant 505 : i32
    %88 = tpu.dynamic_rotate %1 by %c505_i32 dim 1 : vector<16x512xf32>, i32 -> vector<16x512xf32>
    %c15 = arith.constant 15 : index
    %c0_33 = arith.constant 0 : index
    %89 = vector.load %arg2[%c15, %c0_33] : memref<27x512xf32, #tpu.memory_space<vmem>>, vector<1x512xf32>
    %90 = vector.broadcast %89 : vector<1x512xf32> to vector<16x512xf32>
    %91 = arith.mulf %88, %90 : vector<16x512xf32>
    %92 = arith.truncf %91 : vector<16x512xf32> to vector<16x512xbf16>
    %c240 = arith.constant 240 : index
    %c0_34 = arith.constant 0 : index
    %93 = vector.load %arg10[%c240, %c0_34] : memref<432x512xbf16, #tpu.memory_space<vmem>>, vector<16x512xbf16>
    tpu.vector_store %arg10[%c240, %c0_34], %92 {strides = array<i32>} : memref<432x512xbf16, #tpu.memory_space<vmem>>, vector<16x512xbf16>,
    %c504_i32 = arith.constant 504 : i32
    %94 = tpu.dynamic_rotate %1 by %c504_i32 dim 1 : vector<16x512xf32>, i32 -> vector<16x512xf32>
    %c16_35 = arith.constant 16 : index
    %c0_36 = arith.constant 0 : index
    %95 = vector.load %arg2[%c16_35, %c0_36] : memref<27x512xf32, #tpu.memory_space<vmem>>, vector<1x512xf32>
    %96 = vector.broadcast %95 : vector<1x512xf32> to vector<16x512xf32>
    %97 = arith.mulf %94, %96 : vector<16x512xf32>
    %98 = arith.truncf %97 : vector<16x512xf32> to vector<16x512xbf16>
    %c256 = arith.constant 256 : index
    %c0_37 = arith.constant 0 : index
    %99 = vector.load %arg10[%c256, %c0_37] : memref<432x512xbf16, #tpu.memory_space<vmem>>, vector<16x512xbf16>
    tpu.vector_store %arg10[%c256, %c0_37], %98 {strides = array<i32>} : memref<432x512xbf16, #tpu.memory_space<vmem>>, vector<16x512xbf16>,
    %c503_i32 = arith.constant 503 : i32
    %100 = tpu.dynamic_rotate %1 by %c503_i32 dim 1 : vector<16x512xf32>, i32 -> vector<16x512xf32>
    %c17 = arith.constant 17 : index
    %c0_38 = arith.constant 0 : index
    %101 = vector.load %arg2[%c17, %c0_38] : memref<27x512xf32, #tpu.memory_space<vmem>>, vector<1x512xf32>
    %102 = vector.broadcast %101 : vector<1x512xf32> to vector<16x512xf32>
    %103 = arith.mulf %100, %102 : vector<16x512xf32>
    %104 = arith.truncf %103 : vector<16x512xf32> to vector<16x512xbf16>
    %c272 = arith.constant 272 : index
    %c0_39 = arith.constant 0 : index
    %105 = vector.load %arg10[%c272, %c0_39] : memref<432x512xbf16, #tpu.memory_space<vmem>>, vector<16x512xbf16>
    tpu.vector_store %arg10[%c272, %c0_39], %104 {strides = array<i32>} : memref<432x512xbf16, #tpu.memory_space<vmem>>, vector<16x512xbf16>,
    %c457_i32 = arith.constant 457 : i32
    %106 = tpu.dynamic_rotate %1 by %c457_i32 dim 1 : vector<16x512xf32>, i32 -> vector<16x512xf32>
    %c18 = arith.constant 18 : index
    %c0_40 = arith.constant 0 : index
    %107 = vector.load %arg2[%c18, %c0_40] : memref<27x512xf32, #tpu.memory_space<vmem>>, vector<1x512xf32>
    %108 = vector.broadcast %107 : vector<1x512xf32> to vector<16x512xf32>
    %109 = arith.mulf %106, %108 : vector<16x512xf32>
    %110 = arith.truncf %109 : vector<16x512xf32> to vector<16x512xbf16>
    %c288 = arith.constant 288 : index
    %c0_41 = arith.constant 0 : index
    %111 = vector.load %arg10[%c288, %c0_41] : memref<432x512xbf16, #tpu.memory_space<vmem>>, vector<16x512xbf16>
    tpu.vector_store %arg10[%c288, %c0_41], %110 {strides = array<i32>} : memref<432x512xbf16, #tpu.memory_space<vmem>>, vector<16x512xbf16>,
    %c456_i32 = arith.constant 456 : i32
    %112 = tpu.dynamic_rotate %1 by %c456_i32 dim 1 : vector<16x512xf32>, i32 -> vector<16x512xf32>
    %c19 = arith.constant 19 : index
    %c0_42 = arith.constant 0 : index
    %113 = vector.load %arg2[%c19, %c0_42] : memref<27x512xf32, #tpu.memory_space<vmem>>, vector<1x512xf32>
    %114 = vector.broadcast %113 : vector<1x512xf32> to vector<16x512xf32>
    %115 = arith.mulf %112, %114 : vector<16x512xf32>
    %116 = arith.truncf %115 : vector<16x512xf32> to vector<16x512xbf16>
    %c304 = arith.constant 304 : index
    %c0_43 = arith.constant 0 : index
    %117 = vector.load %arg10[%c304, %c0_43] : memref<432x512xbf16, #tpu.memory_space<vmem>>, vector<16x512xbf16>
    tpu.vector_store %arg10[%c304, %c0_43], %116 {strides = array<i32>} : memref<432x512xbf16, #tpu.memory_space<vmem>>, vector<16x512xbf16>,
    %c455_i32 = arith.constant 455 : i32
    %118 = tpu.dynamic_rotate %1 by %c455_i32 dim 1 : vector<16x512xf32>, i32 -> vector<16x512xf32>
    %c20 = arith.constant 20 : index
    %c0_44 = arith.constant 0 : index
    %119 = vector.load %arg2[%c20, %c0_44] : memref<27x512xf32, #tpu.memory_space<vmem>>, vector<1x512xf32>
    %120 = vector.broadcast %119 : vector<1x512xf32> to vector<16x512xf32>
    %121 = arith.mulf %118, %120 : vector<16x512xf32>
    %122 = arith.truncf %121 : vector<16x512xf32> to vector<16x512xbf16>
    %c320 = arith.constant 320 : index
    %c0_45 = arith.constant 0 : index
    %123 = vector.load %arg10[%c320, %c0_45] : memref<432x512xbf16, #tpu.memory_space<vmem>>, vector<16x512xbf16>
    tpu.vector_store %arg10[%c320, %c0_45], %122 {strides = array<i32>} : memref<432x512xbf16, #tpu.memory_space<vmem>>, vector<16x512xbf16>,
    %c449_i32 = arith.constant 449 : i32
    %124 = tpu.dynamic_rotate %1 by %c449_i32 dim 1 : vector<16x512xf32>, i32 -> vector<16x512xf32>
    %c21 = arith.constant 21 : index
    %c0_46 = arith.constant 0 : index
    %125 = vector.load %arg2[%c21, %c0_46] : memref<27x512xf32, #tpu.memory_space<vmem>>, vector<1x512xf32>
    %126 = vector.broadcast %125 : vector<1x512xf32> to vector<16x512xf32>
    %127 = arith.mulf %124, %126 : vector<16x512xf32>
    %128 = arith.truncf %127 : vector<16x512xf32> to vector<16x512xbf16>
    %c336 = arith.constant 336 : index
    %c0_47 = arith.constant 0 : index
    %129 = vector.load %arg10[%c336, %c0_47] : memref<432x512xbf16, #tpu.memory_space<vmem>>, vector<16x512xbf16>
    tpu.vector_store %arg10[%c336, %c0_47], %128 {strides = array<i32>} : memref<432x512xbf16, #tpu.memory_space<vmem>>, vector<16x512xbf16>,
    %c448_i32 = arith.constant 448 : i32
    %130 = tpu.dynamic_rotate %1 by %c448_i32 dim 1 : vector<16x512xf32>, i32 -> vector<16x512xf32>
    %c22 = arith.constant 22 : index
    %c0_48 = arith.constant 0 : index
    %131 = vector.load %arg2[%c22, %c0_48] : memref<27x512xf32, #tpu.memory_space<vmem>>, vector<1x512xf32>
    %132 = vector.broadcast %131 : vector<1x512xf32> to vector<16x512xf32>
    %133 = arith.mulf %130, %132 : vector<16x512xf32>
    %134 = arith.truncf %133 : vector<16x512xf32> to vector<16x512xbf16>
    %c352 = arith.constant 352 : index
    %c0_49 = arith.constant 0 : index
    %135 = vector.load %arg10[%c352, %c0_49] : memref<432x512xbf16, #tpu.memory_space<vmem>>, vector<16x512xbf16>
    tpu.vector_store %arg10[%c352, %c0_49], %134 {strides = array<i32>} : memref<432x512xbf16, #tpu.memory_space<vmem>>, vector<16x512xbf16>,
    %c447_i32 = arith.constant 447 : i32
    %136 = tpu.dynamic_rotate %1 by %c447_i32 dim 1 : vector<16x512xf32>, i32 -> vector<16x512xf32>
    %c23 = arith.constant 23 : index
    %c0_50 = arith.constant 0 : index
    %137 = vector.load %arg2[%c23, %c0_50] : memref<27x512xf32, #tpu.memory_space<vmem>>, vector<1x512xf32>
    %138 = vector.broadcast %137 : vector<1x512xf32> to vector<16x512xf32>
    %139 = arith.mulf %136, %138 : vector<16x512xf32>
    %140 = arith.truncf %139 : vector<16x512xf32> to vector<16x512xbf16>
    %c368 = arith.constant 368 : index
    %c0_51 = arith.constant 0 : index
    %141 = vector.load %arg10[%c368, %c0_51] : memref<432x512xbf16, #tpu.memory_space<vmem>>, vector<16x512xbf16>
    tpu.vector_store %arg10[%c368, %c0_51], %140 {strides = array<i32>} : memref<432x512xbf16, #tpu.memory_space<vmem>>, vector<16x512xbf16>,
    %c441_i32 = arith.constant 441 : i32
    %142 = tpu.dynamic_rotate %1 by %c441_i32 dim 1 : vector<16x512xf32>, i32 -> vector<16x512xf32>
    %c24 = arith.constant 24 : index
    %c0_52 = arith.constant 0 : index
    %143 = vector.load %arg2[%c24, %c0_52] : memref<27x512xf32, #tpu.memory_space<vmem>>, vector<1x512xf32>
    %144 = vector.broadcast %143 : vector<1x512xf32> to vector<16x512xf32>
    %145 = arith.mulf %142, %144 : vector<16x512xf32>
    %146 = arith.truncf %145 : vector<16x512xf32> to vector<16x512xbf16>
    %c384 = arith.constant 384 : index
    %c0_53 = arith.constant 0 : index
    %147 = vector.load %arg10[%c384, %c0_53] : memref<432x512xbf16, #tpu.memory_space<vmem>>, vector<16x512xbf16>
    tpu.vector_store %arg10[%c384, %c0_53], %146 {strides = array<i32>} : memref<432x512xbf16, #tpu.memory_space<vmem>>, vector<16x512xbf16>,
    %c440_i32 = arith.constant 440 : i32
    %148 = tpu.dynamic_rotate %1 by %c440_i32 dim 1 : vector<16x512xf32>, i32 -> vector<16x512xf32>
    %c25 = arith.constant 25 : index
    %c0_54 = arith.constant 0 : index
    %149 = vector.load %arg2[%c25, %c0_54] : memref<27x512xf32, #tpu.memory_space<vmem>>, vector<1x512xf32>
    %150 = vector.broadcast %149 : vector<1x512xf32> to vector<16x512xf32>
    %151 = arith.mulf %148, %150 : vector<16x512xf32>
    %152 = arith.truncf %151 : vector<16x512xf32> to vector<16x512xbf16>
    %c400 = arith.constant 400 : index
    %c0_55 = arith.constant 0 : index
    %153 = vector.load %arg10[%c400, %c0_55] : memref<432x512xbf16, #tpu.memory_space<vmem>>, vector<16x512xbf16>
    tpu.vector_store %arg10[%c400, %c0_55], %152 {strides = array<i32>} : memref<432x512xbf16, #tpu.memory_space<vmem>>, vector<16x512xbf16>,
    %c439_i32 = arith.constant 439 : i32
    %154 = tpu.dynamic_rotate %1 by %c439_i32 dim 1 : vector<16x512xf32>, i32 -> vector<16x512xf32>
    %c26 = arith.constant 26 : index
    %c0_56 = arith.constant 0 : index
    %155 = vector.load %arg2[%c26, %c0_56] : memref<27x512xf32, #tpu.memory_space<vmem>>, vector<1x512xf32>
    %156 = vector.broadcast %155 : vector<1x512xf32> to vector<16x512xf32>
    %157 = arith.mulf %154, %156 : vector<16x512xf32>
    %158 = arith.truncf %157 : vector<16x512xf32> to vector<16x512xbf16>
    %c416 = arith.constant 416 : index
    %c0_57 = arith.constant 0 : index
    %159 = vector.load %arg10[%c416, %c0_57] : memref<432x512xbf16, #tpu.memory_space<vmem>>, vector<16x512xbf16>
    tpu.vector_store %arg10[%c416, %c0_57], %158 {strides = array<i32>} : memref<432x512xbf16, #tpu.memory_space<vmem>>, vector<16x512xbf16>,
    %c0_58 = arith.constant 0 : index
    %c0_59 = arith.constant 0 : index
    %160 = vector.load %arg10[%c0_58, %c0_59] : memref<432x512xbf16, #tpu.memory_space<vmem>>, vector<432x512xbf16>
    %c0_60 = arith.constant 0 : index
    %c0_61 = arith.constant 0 : index
    %161 = vector.load %arg3[%c0_60, %c0_61] : memref<16x432xbf16, #tpu.memory_space<vmem>>, vector<16x432xbf16>
    %cst = arith.constant dense<0.000000e+00> : vector<16x512xf32>
    %162 = tpu.matmul %161, %160, %cst {dimension_numbers = #tpu.dot_dimension_numbers<[1], [0], [0], [1], [0, 0, 1, 1], [], []>} : vector<16x432xbf16>, vector<432x512xbf16>, vector<16x512xf32> -> vector<16x512xf32>
    %c0_62 = arith.constant 0 : index
    %c0_63 = arith.constant 0 : index
    %163 = vector.load %arg4[%c0_62, %c0_63] : memref<16x1xf32, #tpu.memory_space<vmem>>, vector<16x1xf32>
    %164 = vector.broadcast %163 : vector<16x1xf32> to vector<16x512xf32>
    %165 = arith.mulf %162, %164 : vector<16x512xf32>
    %c0_64 = arith.constant 0 : index
    %c0_65 = arith.constant 0 : index
    %166 = vector.load %arg5[%c0_64, %c0_65] : memref<16x1xf32, #tpu.memory_space<vmem>>, vector<16x1xf32>
    %167 = vector.broadcast %166 : vector<16x1xf32> to vector<16x512xf32>
    %168 = arith.addf %165, %167 : vector<16x512xf32>
    %cst_66 = arith.constant 0.000000e+00 : f32
    %169 = vector.broadcast %cst_66 : f32 to vector<16x512xf32>
    %170 = arith.maximumf %168, %169 : vector<16x512xf32>
    %c73_i32_67 = arith.constant 73 : i32
    %171 = tpu.dynamic_rotate %170 by %c73_i32_67 dim 1 : vector<16x512xf32>, i32 -> vector<16x512xf32>
    %c0_68 = arith.constant 0 : index
    %c0_69 = arith.constant 0 : index
    %172 = vector.load %arg2[%c0_68, %c0_69] : memref<27x512xf32, #tpu.memory_space<vmem>>, vector<1x512xf32>
    %173 = vector.broadcast %172 : vector<1x512xf32> to vector<16x512xf32>
    %174 = arith.mulf %171, %173 : vector<16x512xf32>
    %175 = arith.truncf %174 : vector<16x512xf32> to vector<16x512xbf16>
    %c0_70 = arith.constant 0 : index
    %c0_71 = arith.constant 0 : index
    %176 = vector.load %arg10[%c0_70, %c0_71] : memref<432x512xbf16, #tpu.memory_space<vmem>>, vector<16x512xbf16>
    tpu.vector_store %arg10[%c0_70, %c0_71], %175 {strides = array<i32>} : memref<432x512xbf16, #tpu.memory_space<vmem>>, vector<16x512xbf16>,
    %c72_i32_72 = arith.constant 72 : i32
    %177 = tpu.dynamic_rotate %170 by %c72_i32_72 dim 1 : vector<16x512xf32>, i32 -> vector<16x512xf32>
    %c1_73 = arith.constant 1 : index
    %c0_74 = arith.constant 0 : index
    %178 = vector.load %arg2[%c1_73, %c0_74] : memref<27x512xf32, #tpu.memory_space<vmem>>, vector<1x512xf32>
    %179 = vector.broadcast %178 : vector<1x512xf32> to vector<16x512xf32>
    %180 = arith.mulf %177, %179 : vector<16x512xf32>
    %181 = arith.truncf %180 : vector<16x512xf32> to vector<16x512xbf16>
    %c16_75 = arith.constant 16 : index
    %c0_76 = arith.constant 0 : index
    %182 = vector.load %arg10[%c16_75, %c0_76] : memref<432x512xbf16, #tpu.memory_space<vmem>>, vector<16x512xbf16>
    tpu.vector_store %arg10[%c16_75, %c0_76], %181 {strides = array<i32>} : memref<432x512xbf16, #tpu.memory_space<vmem>>, vector<16x512xbf16>,
    %c71_i32_77 = arith.constant 71 : i32
    %183 = tpu.dynamic_rotate %170 by %c71_i32_77 dim 1 : vector<16x512xf32>, i32 -> vector<16x512xf32>
    %c2_78 = arith.constant 2 : index
    %c0_79 = arith.constant 0 : index
    %184 = vector.load %arg2[%c2_78, %c0_79] : memref<27x512xf32, #tpu.memory_space<vmem>>, vector<1x512xf32>
    %185 = vector.broadcast %184 : vector<1x512xf32> to vector<16x512xf32>
    %186 = arith.mulf %183, %185 : vector<16x512xf32>
    %187 = arith.truncf %186 : vector<16x512xf32> to vector<16x512xbf16>
    %c32_80 = arith.constant 32 : index
    %c0_81 = arith.constant 0 : index
    %188 = vector.load %arg10[%c32_80, %c0_81] : memref<432x512xbf16, #tpu.memory_space<vmem>>, vector<16x512xbf16>
    tpu.vector_store %arg10[%c32_80, %c0_81], %187 {strides = array<i32>} : memref<432x512xbf16, #tpu.memory_space<vmem>>, vector<16x512xbf16>,
    %c65_i32_82 = arith.constant 65 : i32
    %189 = tpu.dynamic_rotate %170 by %c65_i32_82 dim 1 : vector<16x512xf32>, i32 -> vector<16x512xf32>
    %c3_83 = arith.constant 3 : index
    %c0_84 = arith.constant 0 : index
    %190 = vector.load %arg2[%c3_83, %c0_84] : memref<27x512xf32, #tpu.memory_space<vmem>>, vector<1x512xf32>
    %191 = vector.broadcast %190 : vector<1x512xf32> to vector<16x512xf32>
    %192 = arith.mulf %189, %191 : vector<16x512xf32>
    %193 = arith.truncf %192 : vector<16x512xf32> to vector<16x512xbf16>
    %c48_85 = arith.constant 48 : index
    %c0_86 = arith.constant 0 : index
    %194 = vector.load %arg10[%c48_85, %c0_86] : memref<432x512xbf16, #tpu.memory_space<vmem>>, vector<16x512xbf16>
    tpu.vector_store %arg10[%c48_85, %c0_86], %193 {strides = array<i32>} : memref<432x512xbf16, #tpu.memory_space<vmem>>, vector<16x512xbf16>,
    %c64_i32_87 = arith.constant 64 : i32
    %195 = tpu.dynamic_rotate %170 by %c64_i32_87 dim 1 : vector<16x512xf32>, i32 -> vector<16x512xf32>
    %c4_88 = arith.constant 4 : index
    %c0_89 = arith.constant 0 : index
    %196 = vector.load %arg2[%c4_88, %c0_89] : memref<27x512xf32, #tpu.memory_space<vmem>>, vector<1x512xf32>
    %197 = vector.broadcast %196 : vector<1x512xf32> to vector<16x512xf32>
    %198 = arith.mulf %195, %197 : vector<16x512xf32>
    %199 = arith.truncf %198 : vector<16x512xf32> to vector<16x512xbf16>
    %c64_90 = arith.constant 64 : index
    %c0_91 = arith.constant 0 : index
    %200 = vector.load %arg10[%c64_90, %c0_91] : memref<432x512xbf16, #tpu.memory_space<vmem>>, vector<16x512xbf16>
    tpu.vector_store %arg10[%c64_90, %c0_91], %199 {strides = array<i32>} : memref<432x512xbf16, #tpu.memory_space<vmem>>, vector<16x512xbf16>,
    %c63_i32_92 = arith.constant 63 : i32
    %201 = tpu.dynamic_rotate %170 by %c63_i32_92 dim 1 : vector<16x512xf32>, i32 -> vector<16x512xf32>
    %c5_93 = arith.constant 5 : index
    %c0_94 = arith.constant 0 : index
    %202 = vector.load %arg2[%c5_93, %c0_94] : memref<27x512xf32, #tpu.memory_space<vmem>>, vector<1x512xf32>
    %203 = vector.broadcast %202 : vector<1x512xf32> to vector<16x512xf32>
    %204 = arith.mulf %201, %203 : vector<16x512xf32>
    %205 = arith.truncf %204 : vector<16x512xf32> to vector<16x512xbf16>
    %c80_95 = arith.constant 80 : index
    %c0_96 = arith.constant 0 : index
    %206 = vector.load %arg10[%c80_95, %c0_96] : memref<432x512xbf16, #tpu.memory_space<vmem>>, vector<16x512xbf16>
    tpu.vector_store %arg10[%c80_95, %c0_96], %205 {strides = array<i32>} : memref<432x512xbf16, #tpu.memory_space<vmem>>, vector<16x512xbf16>,
    %c57_i32_97 = arith.constant 57 : i32
    %207 = tpu.dynamic_rotate %170 by %c57_i32_97 dim 1 : vector<16x512xf32>, i32 -> vector<16x512xf32>
    %c6_98 = arith.constant 6 : index
    %c0_99 = arith.constant 0 : index
    %208 = vector.load %arg2[%c6_98, %c0_99] : memref<27x512xf32, #tpu.memory_space<vmem>>, vector<1x512xf32>
    %209 = vector.broadcast %208 : vector<1x512xf32> to vector<16x512xf32>
    %210 = arith.mulf %207, %209 : vector<16x512xf32>
    %211 = arith.truncf %210 : vector<16x512xf32> to vector<16x512xbf16>
    %c96_100 = arith.constant 96 : index
    %c0_101 = arith.constant 0 : index
    %212 = vector.load %arg10[%c96_100, %c0_101] : memref<432x512xbf16, #tpu.memory_space<vmem>>, vector<16x512xbf16>
    tpu.vector_store %arg10[%c96_100, %c0_101], %211 {strides = array<i32>} : memref<432x512xbf16, #tpu.memory_space<vmem>>, vector<16x512xbf16>,
    %c56_i32_102 = arith.constant 56 : i32
    %213 = tpu.dynamic_rotate %170 by %c56_i32_102 dim 1 : vector<16x512xf32>, i32 -> vector<16x512xf32>
    %c7_103 = arith.constant 7 : index
    %c0_104 = arith.constant 0 : index
    %214 = vector.load %arg2[%c7_103, %c0_104] : memref<27x512xf32, #tpu.memory_space<vmem>>, vector<1x512xf32>
    %215 = vector.broadcast %214 : vector<1x512xf32> to vector<16x512xf32>
    %216 = arith.mulf %213, %215 : vector<16x512xf32>
    %217 = arith.truncf %216 : vector<16x512xf32> to vector<16x512xbf16>
    %c112_105 = arith.constant 112 : index
    %c0_106 = arith.constant 0 : index
    %218 = vector.load %arg10[%c112_105, %c0_106] : memref<432x512xbf16, #tpu.memory_space<vmem>>, vector<16x512xbf16>
    tpu.vector_store %arg10[%c112_105, %c0_106], %217 {strides = array<i32>} : memref<432x512xbf16, #tpu.memory_space<vmem>>, vector<16x512xbf16>,
    %c55_i32_107 = arith.constant 55 : i32
    %219 = tpu.dynamic_rotate %170 by %c55_i32_107 dim 1 : vector<16x512xf32>, i32 -> vector<16x512xf32>
    %c8_108 = arith.constant 8 : index
    %c0_109 = arith.constant 0 : index
    %220 = vector.load %arg2[%c8_108, %c0_109] : memref<27x512xf32, #tpu.memory_space<vmem>>, vector<1x512xf32>
    %221 = vector.broadcast %220 : vector<1x512xf32> to vector<16x512xf32>
    %222 = arith.mulf %219, %221 : vector<16x512xf32>
    %223 = arith.truncf %222 : vector<16x512xf32> to vector<16x512xbf16>
    %c128_110 = arith.constant 128 : index
    %c0_111 = arith.constant 0 : index
    %224 = vector.load %arg10[%c128_110, %c0_111] : memref<432x512xbf16, #tpu.memory_space<vmem>>, vector<16x512xbf16>
    tpu.vector_store %arg10[%c128_110, %c0_111], %223 {strides = array<i32>} : memref<432x512xbf16, #tpu.memory_space<vmem>>, vector<16x512xbf16>,
    %c9_i32_112 = arith.constant 9 : i32
    %225 = tpu.dynamic_rotate %170 by %c9_i32_112 dim 1 : vector<16x512xf32>, i32 -> vector<16x512xf32>
    %c9_113 = arith.constant 9 : index
    %c0_114 = arith.constant 0 : index
    %226 = vector.load %arg2[%c9_113, %c0_114] : memref<27x512xf32, #tpu.memory_space<vmem>>, vector<1x512xf32>
    %227 = vector.broadcast %226 : vector<1x512xf32> to vector<16x512xf32>
    %228 = arith.mulf %225, %227 : vector<16x512xf32>
    %229 = arith.truncf %228 : vector<16x512xf32> to vector<16x512xbf16>
    %c144_115 = arith.constant 144 : index
    %c0_116 = arith.constant 0 : index
    %230 = vector.load %arg10[%c144_115, %c0_116] : memref<432x512xbf16, #tpu.memory_space<vmem>>, vector<16x512xbf16>
    tpu.vector_store %arg10[%c144_115, %c0_116], %229 {strides = array<i32>} : memref<432x512xbf16, #tpu.memory_space<vmem>>, vector<16x512xbf16>,
    %c8_i32_117 = arith.constant 8 : i32
    %231 = tpu.dynamic_rotate %170 by %c8_i32_117 dim 1 : vector<16x512xf32>, i32 -> vector<16x512xf32>
    %c10_118 = arith.constant 10 : index
    %c0_119 = arith.constant 0 : index
    %232 = vector.load %arg2[%c10_118, %c0_119] : memref<27x512xf32, #tpu.memory_space<vmem>>, vector<1x512xf32>
    %233 = vector.broadcast %232 : vector<1x512xf32> to vector<16x512xf32>
    %234 = arith.mulf %231, %233 : vector<16x512xf32>
    %235 = arith.truncf %234 : vector<16x512xf32> to vector<16x512xbf16>
    %c160_120 = arith.constant 160 : index
    %c0_121 = arith.constant 0 : index
    %236 = vector.load %arg10[%c160_120, %c0_121] : memref<432x512xbf16, #tpu.memory_space<vmem>>, vector<16x512xbf16>
    tpu.vector_store %arg10[%c160_120, %c0_121], %235 {strides = array<i32>} : memref<432x512xbf16, #tpu.memory_space<vmem>>, vector<16x512xbf16>,
    %c7_i32_122 = arith.constant 7 : i32
    %237 = tpu.dynamic_rotate %170 by %c7_i32_122 dim 1 : vector<16x512xf32>, i32 -> vector<16x512xf32>
    %c11_123 = arith.constant 11 : index
    %c0_124 = arith.constant 0 : index
    %238 = vector.load %arg2[%c11_123, %c0_124] : memref<27x512xf32, #tpu.memory_space<vmem>>, vector<1x512xf32>
    %239 = vector.broadcast %238 : vector<1x512xf32> to vector<16x512xf32>
    %240 = arith.mulf %237, %239 : vector<16x512xf32>
    %241 = arith.truncf %240 : vector<16x512xf32> to vector<16x512xbf16>
    %c176_125 = arith.constant 176 : index
    %c0_126 = arith.constant 0 : index
    %242 = vector.load %arg10[%c176_125, %c0_126] : memref<432x512xbf16, #tpu.memory_space<vmem>>, vector<16x512xbf16>
    tpu.vector_store %arg10[%c176_125, %c0_126], %241 {strides = array<i32>} : memref<432x512xbf16, #tpu.memory_space<vmem>>, vector<16x512xbf16>,
    %c1_i32_127 = arith.constant 1 : i32
    %243 = tpu.dynamic_rotate %170 by %c1_i32_127 dim 1 : vector<16x512xf32>, i32 -> vector<16x512xf32>
    %c12_128 = arith.constant 12 : index
    %c0_129 = arith.constant 0 : index
    %244 = vector.load %arg2[%c12_128, %c0_129] : memref<27x512xf32, #tpu.memory_space<vmem>>, vector<1x512xf32>
    %245 = vector.broadcast %244 : vector<1x512xf32> to vector<16x512xf32>
    %246 = arith.mulf %243, %245 : vector<16x512xf32>
    %247 = arith.truncf %246 : vector<16x512xf32> to vector<16x512xbf16>
    %c192_130 = arith.constant 192 : index
    %c0_131 = arith.constant 0 : index
    %248 = vector.load %arg10[%c192_130, %c0_131] : memref<432x512xbf16, #tpu.memory_space<vmem>>, vector<16x512xbf16>
    tpu.vector_store %arg10[%c192_130, %c0_131], %247 {strides = array<i32>} : memref<432x512xbf16, #tpu.memory_space<vmem>>, vector<16x512xbf16>,
    %249 = arith.truncf %170 : vector<16x512xf32> to vector<16x512xbf16>
    %c208_132 = arith.constant 208 : index
    %c0_133 = arith.constant 0 : index
    %250 = vector.load %arg10[%c208_132, %c0_133] : memref<432x512xbf16, #tpu.memory_space<vmem>>, vector<16x512xbf16>
    tpu.vector_store %arg10[%c208_132, %c0_133], %249 {strides = array<i32>} : memref<432x512xbf16, #tpu.memory_space<vmem>>, vector<16x512xbf16>,
    %c511_i32_134 = arith.constant 511 : i32
    %251 = tpu.dynamic_rotate %170 by %c511_i32_134 dim 1 : vector<16x512xf32>, i32 -> vector<16x512xf32>
    %c14_135 = arith.constant 14 : index
    %c0_136 = arith.constant 0 : index
    %252 = vector.load %arg2[%c14_135, %c0_136] : memref<27x512xf32, #tpu.memory_space<vmem>>, vector<1x512xf32>
    %253 = vector.broadcast %252 : vector<1x512xf32> to vector<16x512xf32>
    %254 = arith.mulf %251, %253 : vector<16x512xf32>
    %255 = arith.truncf %254 : vector<16x512xf32> to vector<16x512xbf16>
    %c224_137 = arith.constant 224 : index
    %c0_138 = arith.constant 0 : index
    %256 = vector.load %arg10[%c224_137, %c0_138] : memref<432x512xbf16, #tpu.memory_space<vmem>>, vector<16x512xbf16>
    tpu.vector_store %arg10[%c224_137, %c0_138], %255 {strides = array<i32>} : memref<432x512xbf16, #tpu.memory_space<vmem>>, vector<16x512xbf16>,
    %c505_i32_139 = arith.constant 505 : i32
    %257 = tpu.dynamic_rotate %170 by %c505_i32_139 dim 1 : vector<16x512xf32>, i32 -> vector<16x512xf32>
    %c15_140 = arith.constant 15 : index
    %c0_141 = arith.constant 0 : index
    %258 = vector.load %arg2[%c15_140, %c0_141] : memref<27x512xf32, #tpu.memory_space<vmem>>, vector<1x512xf32>
    %259 = vector.broadcast %258 : vector<1x512xf32> to vector<16x512xf32>
    %260 = arith.mulf %257, %259 : vector<16x512xf32>
    %261 = arith.truncf %260 : vector<16x512xf32> to vector<16x512xbf16>
    %c240_142 = arith.constant 240 : index
    %c0_143 = arith.constant 0 : index
    %262 = vector.load %arg10[%c240_142, %c0_143] : memref<432x512xbf16, #tpu.memory_space<vmem>>, vector<16x512xbf16>
    tpu.vector_store %arg10[%c240_142, %c0_143], %261 {strides = array<i32>} : memref<432x512xbf16, #tpu.memory_space<vmem>>, vector<16x512xbf16>,
    %c504_i32_144 = arith.constant 504 : i32
    %263 = tpu.dynamic_rotate %170 by %c504_i32_144 dim 1 : vector<16x512xf32>, i32 -> vector<16x512xf32>
    %c16_145 = arith.constant 16 : index
    %c0_146 = arith.constant 0 : index
    %264 = vector.load %arg2[%c16_145, %c0_146] : memref<27x512xf32, #tpu.memory_space<vmem>>, vector<1x512xf32>
    %265 = vector.broadcast %264 : vector<1x512xf32> to vector<16x512xf32>
    %266 = arith.mulf %263, %265 : vector<16x512xf32>
    %267 = arith.truncf %266 : vector<16x512xf32> to vector<16x512xbf16>
    %c256_147 = arith.constant 256 : index
    %c0_148 = arith.constant 0 : index
    %268 = vector.load %arg10[%c256_147, %c0_148] : memref<432x512xbf16, #tpu.memory_space<vmem>>, vector<16x512xbf16>
    tpu.vector_store %arg10[%c256_147, %c0_148], %267 {strides = array<i32>} : memref<432x512xbf16, #tpu.memory_space<vmem>>, vector<16x512xbf16>,
    %c503_i32_149 = arith.constant 503 : i32
    %269 = tpu.dynamic_rotate %170 by %c503_i32_149 dim 1 : vector<16x512xf32>, i32 -> vector<16x512xf32>
    %c17_150 = arith.constant 17 : index
    %c0_151 = arith.constant 0 : index
    %270 = vector.load %arg2[%c17_150, %c0_151] : memref<27x512xf32, #tpu.memory_space<vmem>>, vector<1x512xf32>
    %271 = vector.broadcast %270 : vector<1x512xf32> to vector<16x512xf32>
    %272 = arith.mulf %269, %271 : vector<16x512xf32>
    %273 = arith.truncf %272 : vector<16x512xf32> to vector<16x512xbf16>
    %c272_152 = arith.constant 272 : index
    %c0_153 = arith.constant 0 : index
    %274 = vector.load %arg10[%c272_152, %c0_153] : memref<432x512xbf16, #tpu.memory_space<vmem>>, vector<16x512xbf16>
    tpu.vector_store %arg10[%c272_152, %c0_153], %273 {strides = array<i32>} : memref<432x512xbf16, #tpu.memory_space<vmem>>, vector<16x512xbf16>,
    %c457_i32_154 = arith.constant 457 : i32
    %275 = tpu.dynamic_rotate %170 by %c457_i32_154 dim 1 : vector<16x512xf32>, i32 -> vector<16x512xf32>
    %c18_155 = arith.constant 18 : index
    %c0_156 = arith.constant 0 : index
    %276 = vector.load %arg2[%c18_155, %c0_156] : memref<27x512xf32, #tpu.memory_space<vmem>>, vector<1x512xf32>
    %277 = vector.broadcast %276 : vector<1x512xf32> to vector<16x512xf32>
    %278 = arith.mulf %275, %277 : vector<16x512xf32>
    %279 = arith.truncf %278 : vector<16x512xf32> to vector<16x512xbf16>
    %c288_157 = arith.constant 288 : index
    %c0_158 = arith.constant 0 : index
    %280 = vector.load %arg10[%c288_157, %c0_158] : memref<432x512xbf16, #tpu.memory_space<vmem>>, vector<16x512xbf16>
    tpu.vector_store %arg10[%c288_157, %c0_158], %279 {strides = array<i32>} : memref<432x512xbf16, #tpu.memory_space<vmem>>, vector<16x512xbf16>,
    %c456_i32_159 = arith.constant 456 : i32
    %281 = tpu.dynamic_rotate %170 by %c456_i32_159 dim 1 : vector<16x512xf32>, i32 -> vector<16x512xf32>
    %c19_160 = arith.constant 19 : index
    %c0_161 = arith.constant 0 : index
    %282 = vector.load %arg2[%c19_160, %c0_161] : memref<27x512xf32, #tpu.memory_space<vmem>>, vector<1x512xf32>
    %283 = vector.broadcast %282 : vector<1x512xf32> to vector<16x512xf32>
    %284 = arith.mulf %281, %283 : vector<16x512xf32>
    %285 = arith.truncf %284 : vector<16x512xf32> to vector<16x512xbf16>
    %c304_162 = arith.constant 304 : index
    %c0_163 = arith.constant 0 : index
    %286 = vector.load %arg10[%c304_162, %c0_163] : memref<432x512xbf16, #tpu.memory_space<vmem>>, vector<16x512xbf16>
    tpu.vector_store %arg10[%c304_162, %c0_163], %285 {strides = array<i32>} : memref<432x512xbf16, #tpu.memory_space<vmem>>, vector<16x512xbf16>,
    %c455_i32_164 = arith.constant 455 : i32
    %287 = tpu.dynamic_rotate %170 by %c455_i32_164 dim 1 : vector<16x512xf32>, i32 -> vector<16x512xf32>
    %c20_165 = arith.constant 20 : index
    %c0_166 = arith.constant 0 : index
    %288 = vector.load %arg2[%c20_165, %c0_166] : memref<27x512xf32, #tpu.memory_space<vmem>>, vector<1x512xf32>
    %289 = vector.broadcast %288 : vector<1x512xf32> to vector<16x512xf32>
    %290 = arith.mulf %287, %289 : vector<16x512xf32>
    %291 = arith.truncf %290 : vector<16x512xf32> to vector<16x512xbf16>
    %c320_167 = arith.constant 320 : index
    %c0_168 = arith.constant 0 : index
    %292 = vector.load %arg10[%c320_167, %c0_168] : memref<432x512xbf16, #tpu.memory_space<vmem>>, vector<16x512xbf16>
    tpu.vector_store %arg10[%c320_167, %c0_168], %291 {strides = array<i32>} : memref<432x512xbf16, #tpu.memory_space<vmem>>, vector<16x512xbf16>,
    %c449_i32_169 = arith.constant 449 : i32
    %293 = tpu.dynamic_rotate %170 by %c449_i32_169 dim 1 : vector<16x512xf32>, i32 -> vector<16x512xf32>
    %c21_170 = arith.constant 21 : index
    %c0_171 = arith.constant 0 : index
    %294 = vector.load %arg2[%c21_170, %c0_171] : memref<27x512xf32, #tpu.memory_space<vmem>>, vector<1x512xf32>
    %295 = vector.broadcast %294 : vector<1x512xf32> to vector<16x512xf32>
    %296 = arith.mulf %293, %295 : vector<16x512xf32>
    %297 = arith.truncf %296 : vector<16x512xf32> to vector<16x512xbf16>
    %c336_172 = arith.constant 336 : index
    %c0_173 = arith.constant 0 : index
    %298 = vector.load %arg10[%c336_172, %c0_173] : memref<432x512xbf16, #tpu.memory_space<vmem>>, vector<16x512xbf16>
    tpu.vector_store %arg10[%c336_172, %c0_173], %297 {strides = array<i32>} : memref<432x512xbf16, #tpu.memory_space<vmem>>, vector<16x512xbf16>,
    %c448_i32_174 = arith.constant 448 : i32
    %299 = tpu.dynamic_rotate %170 by %c448_i32_174 dim 1 : vector<16x512xf32>, i32 -> vector<16x512xf32>
    %c22_175 = arith.constant 22 : index
    %c0_176 = arith.constant 0 : index
    %300 = vector.load %arg2[%c22_175, %c0_176] : memref<27x512xf32, #tpu.memory_space<vmem>>, vector<1x512xf32>
    %301 = vector.broadcast %300 : vector<1x512xf32> to vector<16x512xf32>
    %302 = arith.mulf %299, %301 : vector<16x512xf32>
    %303 = arith.truncf %302 : vector<16x512xf32> to vector<16x512xbf16>
    %c352_177 = arith.constant 352 : index
    %c0_178 = arith.constant 0 : index
    %304 = vector.load %arg10[%c352_177, %c0_178] : memref<432x512xbf16, #tpu.memory_space<vmem>>, vector<16x512xbf16>
    tpu.vector_store %arg10[%c352_177, %c0_178], %303 {strides = array<i32>} : memref<432x512xbf16, #tpu.memory_space<vmem>>, vector<16x512xbf16>,
    %c447_i32_179 = arith.constant 447 : i32
    %305 = tpu.dynamic_rotate %170 by %c447_i32_179 dim 1 : vector<16x512xf32>, i32 -> vector<16x512xf32>
    %c23_180 = arith.constant 23 : index
    %c0_181 = arith.constant 0 : index
    %306 = vector.load %arg2[%c23_180, %c0_181] : memref<27x512xf32, #tpu.memory_space<vmem>>, vector<1x512xf32>
    %307 = vector.broadcast %306 : vector<1x512xf32> to vector<16x512xf32>
    %308 = arith.mulf %305, %307 : vector<16x512xf32>
    %309 = arith.truncf %308 : vector<16x512xf32> to vector<16x512xbf16>
    %c368_182 = arith.constant 368 : index
    %c0_183 = arith.constant 0 : index
    %310 = vector.load %arg10[%c368_182, %c0_183] : memref<432x512xbf16, #tpu.memory_space<vmem>>, vector<16x512xbf16>
    tpu.vector_store %arg10[%c368_182, %c0_183], %309 {strides = array<i32>} : memref<432x512xbf16, #tpu.memory_space<vmem>>, vector<16x512xbf16>,
    %c441_i32_184 = arith.constant 441 : i32
    %311 = tpu.dynamic_rotate %170 by %c441_i32_184 dim 1 : vector<16x512xf32>, i32 -> vector<16x512xf32>
    %c24_185 = arith.constant 24 : index
    %c0_186 = arith.constant 0 : index
    %312 = vector.load %arg2[%c24_185, %c0_186] : memref<27x512xf32, #tpu.memory_space<vmem>>, vector<1x512xf32>
    %313 = vector.broadcast %312 : vector<1x512xf32> to vector<16x512xf32>
    %314 = arith.mulf %311, %313 : vector<16x512xf32>
    %315 = arith.truncf %314 : vector<16x512xf32> to vector<16x512xbf16>
    %c384_187 = arith.constant 384 : index
    %c0_188 = arith.constant 0 : index
    %316 = vector.load %arg10[%c384_187, %c0_188] : memref<432x512xbf16, #tpu.memory_space<vmem>>, vector<16x512xbf16>
    tpu.vector_store %arg10[%c384_187, %c0_188], %315 {strides = array<i32>} : memref<432x512xbf16, #tpu.memory_space<vmem>>, vector<16x512xbf16>,
    %c440_i32_189 = arith.constant 440 : i32
    %317 = tpu.dynamic_rotate %170 by %c440_i32_189 dim 1 : vector<16x512xf32>, i32 -> vector<16x512xf32>
    %c25_190 = arith.constant 25 : index
    %c0_191 = arith.constant 0 : index
    %318 = vector.load %arg2[%c25_190, %c0_191] : memref<27x512xf32, #tpu.memory_space<vmem>>, vector<1x512xf32>
    %319 = vector.broadcast %318 : vector<1x512xf32> to vector<16x512xf32>
    %320 = arith.mulf %317, %319 : vector<16x512xf32>
    %321 = arith.truncf %320 : vector<16x512xf32> to vector<16x512xbf16>
    %c400_192 = arith.constant 400 : index
    %c0_193 = arith.constant 0 : index
    %322 = vector.load %arg10[%c400_192, %c0_193] : memref<432x512xbf16, #tpu.memory_space<vmem>>, vector<16x512xbf16>
    tpu.vector_store %arg10[%c400_192, %c0_193], %321 {strides = array<i32>} : memref<432x512xbf16, #tpu.memory_space<vmem>>, vector<16x512xbf16>,
    %c439_i32_194 = arith.constant 439 : i32
    %323 = tpu.dynamic_rotate %170 by %c439_i32_194 dim 1 : vector<16x512xf32>, i32 -> vector<16x512xf32>
    %c26_195 = arith.constant 26 : index
    %c0_196 = arith.constant 0 : index
    %324 = vector.load %arg2[%c26_195, %c0_196] : memref<27x512xf32, #tpu.memory_space<vmem>>, vector<1x512xf32>
    %325 = vector.broadcast %324 : vector<1x512xf32> to vector<16x512xf32>
    %326 = arith.mulf %323, %325 : vector<16x512xf32>
    %327 = arith.truncf %326 : vector<16x512xf32> to vector<16x512xbf16>
    %c416_197 = arith.constant 416 : index
    %c0_198 = arith.constant 0 : index
    %328 = vector.load %arg10[%c416_197, %c0_198] : memref<432x512xbf16, #tpu.memory_space<vmem>>, vector<16x512xbf16>
    tpu.vector_store %arg10[%c416_197, %c0_198], %327 {strides = array<i32>} : memref<432x512xbf16, #tpu.memory_space<vmem>>, vector<16x512xbf16>,
    %c0_199 = arith.constant 0 : index
    %c0_200 = arith.constant 0 : index
    %329 = vector.load %arg10[%c0_199, %c0_200] : memref<432x512xbf16, #tpu.memory_space<vmem>>, vector<432x512xbf16>
    %c0_201 = arith.constant 0 : index
    %c0_202 = arith.constant 0 : index
    %330 = vector.load %arg6[%c0_201, %c0_202] : memref<16x432xbf16, #tpu.memory_space<vmem>>, vector<16x432xbf16>
    %cst_203 = arith.constant dense<0.000000e+00> : vector<16x512xf32>
    %331 = tpu.matmul %330, %329, %cst_203 {dimension_numbers = #tpu.dot_dimension_numbers<[1], [0], [0], [1], [0, 0, 1, 1], [], []>} : vector<16x432xbf16>, vector<432x512xbf16>, vector<16x512xf32> -> vector<16x512xf32>
    %c0_204 = arith.constant 0 : index
    %c0_205 = arith.constant 0 : index
    %332 = vector.load %arg7[%c0_204, %c0_205] : memref<16x1xf32, #tpu.memory_space<vmem>>, vector<16x1xf32>
    %333 = vector.broadcast %332 : vector<16x1xf32> to vector<16x512xf32>
    %334 = arith.mulf %331, %333 : vector<16x512xf32>
    %c0_206 = arith.constant 0 : index
    %c0_207 = arith.constant 0 : index
    %335 = vector.load %arg8[%c0_206, %c0_207] : memref<16x1xf32, #tpu.memory_space<vmem>>, vector<16x1xf32>
    %336 = vector.broadcast %335 : vector<16x1xf32> to vector<16x512xf32>
    %337 = arith.addf %334, %336 : vector<16x512xf32>
    %338 = arith.addf %337, %1 : vector<16x512xf32>
    %cst_208 = arith.constant 0.000000e+00 : f32
    %339 = vector.broadcast %cst_208 : f32 to vector<16x512xf32>
    %340 = arith.maximumf %338, %339 : vector<16x512xf32>
    %c0_209 = arith.constant 0 : index
    %c0_210 = arith.constant 0 : index
    %c0_211 = arith.constant 0 : index
    %341 = vector.load %arg9[%c0_209, %c0_210, %c0_211] : memref<1x16x512xf32, #tpu.memory_space<vmem>>, vector<1x16x512xf32>
    %342 = vector.shape_cast %341 : vector<1x16x512xf32> to vector<16x512xf32>
    %343 = vector.shape_cast %340 : vector<16x512xf32> to vector<1x16x512xf32>
    tpu.vector_store %arg9[%c0_209, %c0_210, %c0_211], %343 {strides = array<i32>} : memref<1x16x512xf32, #tpu.memory_space<vmem>>, vector<1x16x512xf32>,
    return
  }
  func.func @transform_0(%arg0: i32) -> (i32, i32, i32) {
    %c0_i32 = arith.constant 0 : i32
    %c0_i32_0 = arith.constant 0 : i32
    %c0_i32_1 = arith.constant 0 : i32
    return %arg0, %c0_i32, %c0_i32_0 : i32, i32, i32
  }
  func.func @transform_1(%arg0: i32) -> (i32, i32) {
    %c0_i32 = arith.constant 0 : i32
    %c0_i32_0 = arith.constant 0 : i32
    %c0_i32_1 = arith.constant 0 : i32
    return %c0_i32, %c0_i32_0 : i32, i32
  }
  func.func @transform_2(%arg0: i32) -> (i32, i32) {
    %c0_i32 = arith.constant 0 : i32
    %c0_i32_0 = arith.constant 0 : i32
    %c0_i32_1 = arith.constant 0 : i32
    return %c0_i32, %c0_i32_0 : i32, i32
  }
  func.func @transform_3(%arg0: i32) -> (i32, i32) {
    %c0_i32 = arith.constant 0 : i32
    %c0_i32_0 = arith.constant 0 : i32
    %c0_i32_1 = arith.constant 0 : i32
    return %c0_i32, %c0_i32_0 : i32, i32
  }
  func.func @transform_4(%arg0: i32) -> (i32, i32) {
    %c0_i32 = arith.constant 0 : i32
    %c0_i32_0 = arith.constant 0 : i32
    %c0_i32_1 = arith.constant 0 : i32
    return %c0_i32, %c0_i32_0 : i32, i32
  }
  func.func @transform_5(%arg0: i32) -> (i32, i32) {
    %c0_i32 = arith.constant 0 : i32
    %c0_i32_0 = arith.constant 0 : i32
    %c0_i32_1 = arith.constant 0 : i32
    return %c0_i32, %c0_i32_0 : i32, i32
  }
  func.func @transform_6(%arg0: i32) -> (i32, i32) {
    %c0_i32 = arith.constant 0 : i32
    %c0_i32_0 = arith.constant 0 : i32
    %c0_i32_1 = arith.constant 0 : i32
    return %c0_i32, %c0_i32_0 : i32, i32
  }
  func.func @transform_7(%arg0: i32) -> (i32, i32) {
    %c0_i32 = arith.constant 0 : i32
    %c0_i32_0 = arith.constant 0 : i32
    %c0_i32_1 = arith.constant 0 : i32
    return %c0_i32, %c0_i32_0 : i32, i32
  }
  func.func @transform_8(%arg0: i32) -> (i32, i32, i32) {
    %c0_i32 = arith.constant 0 : i32
    %c0_i32_0 = arith.constant 0 : i32
    %c0_i32_1 = arith.constant 0 : i32
    return %arg0, %c0_i32, %c0_i32_0 : i32, i32, i32
  }
}

</mosaic_0001>

<llo_original>
// kernel: tpu_custom_call.1
$region0: #{tpu_custom_call.1}
  #allocation0 [shape = 'u32[]', space=smem, size = 0x4, offset = 0x4, fixed_abs, tag = 'smem constant byte address 0x4 - core index']
  #allocation1 [shape = 'u32[72,128]{1,0:T(1,128)}', space=vmem, size = 0x9000, scoped, tag = 'internal scratch']
  #allocation2 [shape = 'bf16[432,512]{1,0:T(8,128)(2,1)}', space=vmem, size = 0x6c000, scoped, tag = 'scratch operand']
  %s0 = inlined_call_operand.hbm [shape: f32[2,16,512], index: 0, kind: input, shape index: {}]
  %s1 = inlined_call_operand.hbm [shape: f32[27,512], index: 1, kind: input, shape index: {}]
  %s2 = inlined_call_operand.vmem [shape: bf16[16,432], index: 2, kind: input, shape index: {}]
  %s3 = inlined_call_operand.vmem [shape: f32[16,1], index: 3, kind: input, shape index: {}]
  %s4 = inlined_call_operand.vmem [shape: f32[16,1], index: 4, kind: input, shape index: {}]
  %s5 = inlined_call_operand.vmem [shape: bf16[16,432], index: 5, kind: input, shape index: {}]
  %s6 = inlined_call_operand.vmem [shape: f32[16,1], index: 6, kind: input, shape index: {}]
  %s7 = inlined_call_operand.vmem [shape: f32[16,1], index: 7, kind: input, shape index: {}]
  %s8 = inlined_call_operand.hbm [shape: f32[2,16,512], index: 8, kind: output, shape index: {}]
  %s9 = sld [smem:[#allocation0]]
  $region73: #{tpu_custom_call.1} parent=0
    _
  %s11 = ssub.s32 1, %s9
  %s12 = scalar_select 0, %s11, %s9
  $region1: #{tpu_custom_call.1} parent=0
    #allocation3 [shape = 'u8[65536]{0}', space=vmem, size = 0x10000, scoped, tag = 'input window, operand 0']
    #allocation4 [shape = 's32[2]{0}', space=sflag, size = 0x8, scoped, tag = 'scoped memory for tpu_custom_call.1']
    #allocation5 [shape = 's32[2]{0}', space=sflag, size = 0x8, scoped, tag = 'scoped memory for tpu_custom_call.1']
    #allocation6 [shape = 'u8[65536]{0}', space=vmem, size = 0x10000, scoped, tag = 'input window, operand 1, single buffered']
    #allocation7 [shape = 's32[1]{0}', space=sflag, size = 0x4, scoped, tag = 'scoped memory for tpu_custom_call.1']
    #allocation8 [shape = 'u8[65536]{0}', space=vmem, size = 0x10000, scoped, tag = 'output window, operand 0']
    %13 = vsyncpa [#allocation4], 0
    %s14 = scalar_lea.sflag [#allocation4], 1
    %15 = vsyncpa %s14, 0
    %16 = vsyncpa [#allocation7], 0
    %17 = vsyncpa [#allocation5], 0
    %s18 = scalar_lea.sflag [#allocation5], 1
    %19 = vsyncpa %s18, 0
    loop: start=0, step=1, limit=4
    $region2: #{tpu_custom_call.1} parent=1 // loop_pre_header
      _
    $region3: #{tpu_custom_call.1} parent=1 // loop_header
      %s21 = sphi 0, %s25
      %p22 = scmp.ge.s32.totalorder %s21, 4
      %s31 = sphi 0, %s33
      %s34 = sphi 0, %s31
      %s35 = sphi 0, %s34
      %s51 = sphi 0, %s35
      %s55 = sphi 0, %s55
      %s57 = sphi 0, %s55
      %s58 = sphi 0, %s57
      %s72 = sphi 0, %s58
      %s76 = sphi 0, %s76
      %s78 = sphi 0, %s76
      %s79 = sphi 0, %s78
      %s93 = sphi 0, %s79
      %s97 = sphi 0, %s97
      %s99 = sphi 0, %s97
      %s100 = sphi 0, %s99
      %s114 = sphi 0, %s100
      %s118 = sphi 0, %s118
      %s120 = sphi 0, %s118
      %s121 = sphi 0, %s120
      %s135 = sphi 0, %s121
      %s139 = sphi 0, %s139
      %s141 = sphi 0, %s139
      %s142 = sphi 0, %s141
      %s156 = sphi 0, %s142
      %s160 = sphi 0, %s160
      %s162 = sphi 0, %s160
      %s163 = sphi 0, %s162
      %s177 = sphi 0, %s163
      %s181 = sphi 0, %s181
      %s183 = sphi 0, %s181
      %s184 = sphi 0, %s183
      %s198 = sphi 0, %s184
      %s204 = sphi 0, %s206
      %s207 = sphi 0, %s204
      %s208 = sphi 0, %s207
      %s224 = sphi 0, %s208
    $region4: #{tpu_custom_call.1} parent=1 // loop_header_branch
      %24 = sbr.rel (%p22) target = $region8
    $region5: #{tpu_custom_call.1} parent=1 // loop_body
      %s26 = ssub.s32 %s21, 1
      %s27 = ssub.s32 %s21, 2
      %s28 = sadd.s32 %s21, 1
      %s29 = ssub.s32 %s21, %s28
      %p30 = scmp.eq.s32.totalorder %s29, 0
      %s32 = sadd.s32 %s31, 1
      %s33 = scalar_select %p30, %s31, %s32
      %p36 = pneg %p30
      %p37 = scmp.eq.s32.totalorder %s21, 1
      %p38 = por %p36, %p37
      %p39 = scmp.ne.s32.totalorder %s31, %s34
      %p40 = scmp.eq.s32.totalorder %s21, 0
      %p41 = por %p39, %p40
      %p42 = scmp.ne.s32.totalorder %s31, %s34
      %p43 = scmp.eq.s32.totalorder %s26, 1
      %p44 = por %p42, %p43
      %p45 = scmp.ne.s32.totalorder %s34, %s35
      %p46 = scmp.eq.s32.totalorder %s26, 0
      %p47 = por %p45, %p46
      %p48 = scmp.ne.s32.totalorder %s34, %s35
      %p49 = scmp.eq.s32.totalorder %s27, 1
      %p50 = por %p48, %p49
      %p52 = scmp.ne.s32.totalorder %s35, %s51
      %p53 = scmp.eq.s32.totalorder %s27, 0
      %p54 = por %p52, %p53
      %s56 = sadd.s32 %s55, 1
      %p59 = scmp.eq.s32.totalorder %s21, 1
      %p60 = scmp.ne.s32.totalorder %s55, %s57
      %p61 = scmp.eq.s32.totalorder %s21, 0
      %p62 = por %p60, %p61
      %p63 = scmp.ne.s32.totalorder %s55, %s57
      %p64 = scmp.eq.s32.totalorder %s26, 1
      %p65 = por %p63, %p64
      %p66 = scmp.ne.s32.totalorder %s57, %s58
      %p67 = scmp.eq.s32.totalorder %s26, 0
      %p68 = por %p66, %p67
      %p69 = scmp.ne.s32.totalorder %s57, %s58
      %p70 = scmp.eq.s32.totalorder %s27, 1
      %p71 = por %p69, %p70
      %p73 = scmp.ne.s32.totalorder %s58, %s72
      %p74 = scmp.eq.s32.totalorder %s27, 0
      %p75 = por %p73, %p74
      %s77 = sadd.s32 %s76, 1
      %p80 = scmp.eq.s32.totalorder %s21, 1
      %p81 = scmp.ne.s32.totalorder %s76, %s78
      %p82 = scmp.eq.s32.totalorder %s21, 0
      %p83 = por %p81, %p82
      %p84 = scmp.ne.s32.totalorder %s76, %s78
      %p85 = scmp.eq.s32.totalorder %s26, 1
      %p86 = por %p84, %p85
      %p87 = scmp.ne.s32.totalorder %s78, %s79
      %p88 = scmp.eq.s32.totalorder %s26, 0
      %p89 = por %p87, %p88
      %p90 = scmp.ne.s32.totalorder %s78, %s79
      %p91 = scmp.eq.s32.totalorder %s27, 1
      %p92 = por %p90, %p91
      %p94 = scmp.ne.s32.totalorder %s79, %s93
      %p95 = scmp.eq.s32.totalorder %s27, 0
      %p96 = por %p94, %p95
      %s98 = sadd.s32 %s97, 1
      %p101 = scmp.eq.s32.totalorder %s21, 1
      %p102 = scmp.ne.s32.totalorder %s97, %s99
      %p103 = scmp.eq.s32.totalorder %s21, 0
      %p104 = por %p102, %p103
      %p105 = scmp.ne.s32.totalorder %s97, %s99
      %p106 = scmp.eq.s32.totalorder %s26, 1
      %p107 = por %p105, %p106
      %p108 = scmp.ne.s32.totalorder %s99, %s100
      %p109 = scmp.eq.s32.totalorder %s26, 0
      %p110 = por %p108, %p109
      %p111 = scmp.ne.s32.totalorder %s99, %s100
      %p112 = scmp.eq.s32.totalorder %s27, 1
      %p113 = por %p111, %p112
      %p115 = scmp.ne.s32.totalorder %s100, %s114
      %p116 = scmp.eq.s32.totalorder %s27, 0
      %p117 = por %p115, %p116
      %s119 = sadd.s32 %s118, 1
      %p122 = scmp.eq.s32.totalorder %s21, 1
      %p123 = scmp.ne.s32.totalorder %s118, %s120
      %p124 = scmp.eq.s32.totalorder %s21, 0
      %p125 = por %p123, %p124
      %p126 = scmp.ne.s32.totalorder %s118, %s120
      %p127 = scmp.eq.s32.totalorder %s26, 1
      %p128 = por %p126, %p127
      %p129 = scmp.ne.s32.totalorder %s120, %s121
      %p130 = scmp.eq.s32.totalorder %s26, 0
      %p131 = por %p129, %p130
      %p132 = scmp.ne.s32.totalorder %s120, %s121
      %p133 = scmp.eq.s32.totalorder %s27, 1
      %p134 = por %p132, %p133
      %p136 = scmp.ne.s32.totalorder %s121, %s135
      %p137 = scmp.eq.s32.totalorder %s27, 0
      %p138 = por %p136, %p137
      %s140 = sadd.s32 %s139, 1
      %p143 = scmp.eq.s32.totalorder %s21, 1
      %p144 = scmp.ne.s32.totalorder %s139, %s141
      %p145 = scmp.eq.s32.totalorder %s21, 0
      %p146 = por %p144, %p145
      %p147 = scmp.ne.s32.totalorder %s139, %s141
      %p148 = scmp.eq.s32.totalorder %s26, 1
      %p149 = por %p147, %p148
      %p150 = scmp.ne.s32.totalorder %s141, %s142
      %p151 = scmp.eq.s32.totalorder %s26, 0
      %p152 = por %p150, %p151
      %p153 = scmp.ne.s32.totalorder %s141, %s142
      %p154 = scmp.eq.s32.totalorder %s27, 1
      %p155 = por %p153, %p154
      %p157 = scmp.ne.s32.totalorder %s142, %s156
      %p158 = scmp.eq.s32.totalorder %s27, 0
      %p159 = por %p157, %p158
      %s161 = sadd.s32 %s160, 1
      %p164 = scmp.eq.s32.totalorder %s21, 1
      %p165 = scmp.ne.s32.totalorder %s160, %s162
      %p166 = scmp.eq.s32.totalorder %s21, 0
      %p167 = por %p165, %p166
      %p168 = scmp.ne.s32.totalorder %s160, %s162
      %p169 = scmp.eq.s32.totalorder %s26, 1
      %p170 = por %p168, %p169
      %p171 = scmp.ne.s32.totalorder %s162, %s163
      %p172 = scmp.eq.s32.totalorder %s26, 0
      %p173 = por %p171, %p172
      %p174 = scmp.ne.s32.totalorder %s162, %s163
      %p175 = scmp.eq.s32.totalorder %s27, 1
      %p176 = por %p174, %p175
      %p178 = scmp.ne.s32.totalorder %s163, %s177
      %p179 = scmp.eq.s32.totalorder %s27, 0
      %p180 = por %p178, %p179
      %s182 = sadd.s32 %s181, 1
      %p185 = scmp.eq.s32.totalorder %s21, 1
      %p186 = scmp.ne.s32.totalorder %s181, %s183
      %p187 = scmp.eq.s32.totalorder %s21, 0
      %p188 = por %p186, %p187
      %p189 = scmp.ne.s32.totalorder %s181, %s183
      %p190 = scmp.eq.s32.totalorder %s26, 1
      %p191 = por %p189, %p190
      %p192 = scmp.ne.s32.totalorder %s183, %s184
      %p193 = scmp.eq.s32.totalorder %s26, 0
      %p194 = por %p192, %p193
      %p195 = scmp.ne.s32.totalorder %s183, %s184
      %p196 = scmp.eq.s32.totalorder %s27, 1
      %p197 = por %p195, %p196
      %p199 = scmp.ne.s32.totalorder %s184, %s198
      %p200 = scmp.eq.s32.totalorder %s27, 0
      %p201 = por %p199, %p200
      %s202 = ssub.s32 %s21, %s28
      %p203 = scmp.eq.s32.totalorder %s202, 0
      %s205 = sadd.s32 %s204, 1
      %s206 = scalar_select %p203, %s204, %s205
      %p209 = pneg %p203
      %p210 = scmp.eq.s32.totalorder %s21, 1
      %p211 = por %p209, %p210
      %p212 = scmp.ne.s32.totalorder %s204, %s207
      %p213 = scmp.eq.s32.totalorder %s21, 0
      %p214 = por %p212, %p213
      %p215 = scmp.ne.s32.totalorder %s204, %s207
      %p216 = scmp.eq.s32.totalorder %s26, 1
      %p217 = por %p215, %p216
      %p218 = scmp.ne.s32.totalorder %s207, %s208
      %p219 = scmp.eq.s32.totalorder %s26, 0
      %p220 = por %p218, %p219
      %p221 = scmp.ne.s32.totalorder %s207, %s208
      %p222 = scmp.eq.s32.totalorder %s27, 1
      %p223 = por %p221, %p222
      %p225 = scmp.ne.s32.totalorder %s208, %s224
      %p226 = scmp.eq.s32.totalorder %s27, 0
      %p227 = por %p225, %p226
      %p228 = scmp.le.s32.totalorder 1, %s21
      %p229 = scmp.lt.s32.totalorder %s21, 3
      %p230 = pnand %p228, %p229
      %p231 = pneg %p230
      // Predicated region
      $region9: #{tpu_custom_call.1} parent=5 // pred_check
        _
      $region10: #{tpu_custom_call.1} parent=5 // pred_check_branch
        %233 = sbr.rel (%p230) target = $region12
      $region11: #{tpu_custom_call.1} parent=5 // pred_region
        %s234 = ssub.s32 %s21, 1
        // Predicated region
        $region13: #{tpu_custom_call.1} parent=11 // pred_check
          %p235 = pneg %p68
        $region14: #{tpu_custom_call.1} parent=11 // pred_check_branch
          %237 = sbr.rel (%p235) target = $region16
        $region15: #{tpu_custom_call.1} parent=11 // pred_region
          %239 = vsyncadd [#allocation7], 0
          %s240 = sshll.u32 %s1, 4
          %s241 = int_to_ptr.hbm [resolvable:$true] %s240
          %s242 = sshll.u32 [#allocation6], 4
          %s243 = int_to_ptr.vmem [resolvable:$true] %s242
          %248 = dma.hbm_to_vmem [thread:$0]  %s241, 2048, %s243, [#allocation7], 512, 512, 32
        $region16: #{tpu_custom_call.1} parent=11 // pred_fallthru
          _
        // Predicated region
        $region17: #{tpu_custom_call.1} parent=11 // pred_check
          %p249 = pneg %p89
        $region18: #{tpu_custom_call.1} parent=11 // pred_check_branch
          %251 = sbr.rel (%p249) target = $region20
        $region19: #{tpu_custom_call.1} parent=11 // pred_region
          _
        $region20: #{tpu_custom_call.1} parent=11 // pred_fallthru
          _
        // Predicated region
        $region21: #{tpu_custom_call.1} parent=11 // pred_check
          %p252 = pneg %p110
        $region22: #{tpu_custom_call.1} parent=11 // pred_check_branch
          %254 = sbr.rel (%p252) target = $region24
        $region23: #{tpu_custom_call.1} parent=11 // pred_region
          _
        $region24: #{tpu_custom_call.1} parent=11 // pred_fallthru
          _
        // Predicated region
        $region25: #{tpu_custom_call.1} parent=11 // pred_check
          %p255 = pneg %p131
        $region26: #{tpu_custom_call.1} parent=11 // pred_check_branch
          %257 = sbr.rel (%p255) target = $region28
        $region27: #{tpu_custom_call.1} parent=11 // pred_region
          _
        $region28: #{tpu_custom_call.1} parent=11 // pred_fallthru
          _
        // Predicated region
        $region29: #{tpu_custom_call.1} parent=11 // pred_check
          %p258 = pneg %p152
        $region30: #{tpu_custom_call.1} parent=11 // pred_check_branch
          %260 = sbr.rel (%p258) target = $region32
        $region31: #{tpu_custom_call.1} parent=11 // pred_region
          _
        $region32: #{tpu_custom_call.1} parent=11 // pred_fallthru
          _
        // Predicated region
        $region33: #{tpu_custom_call.1} parent=11 // pred_check
          %p261 = pneg %p173
        $region34: #{tpu_custom_call.1} parent=11 // pred_check_branch
          %263 = sbr.rel (%p261) target = $region36
        $region35: #{tpu_custom_call.1} parent=11 // pred_region
          _
        $region36: #{tpu_custom_call.1} parent=11 // pred_fallthru
          _
        // Predicated region
        $region37: #{tpu_custom_call.1} parent=11 // pred_check
          %p264 = pneg %p194
        $region38: #{tpu_custom_call.1} parent=11 // pred_check_branch
          %266 = sbr.rel (%p264) target = $region40
        $region39: #{tpu_custom_call.1} parent=11 // pred_region
          _
        $region40: #{tpu_custom_call.1} parent=11 // pred_fallthru
          _
      $region12: #{tpu_custom_call.1} parent=5 // pred_fallthru
        _
      %p267 = scmp.lt.s32.totalorder %s21, 2
      // Predicated region
      $region41: #{tpu_custom_call.1} parent=5 // pred_check
        %p268 = pneg %p267
      $region42: #{tpu_custom_call.1} parent=5 // pred_check_branch
        %270 = sbr.rel (%p268) target = $region44
      $region43: #{tpu_custom_call.1} parent=5 // pred_region
        // Predicated region
        $region45: #{tpu_custom_call.1} parent=43 // pred_check
          %p271 = pneg %p41
        $region46: #{tpu_custom_call.1} parent=43 // pred_check_branch
          %273 = sbr.rel (%p271) target = $region48
        $region47: #{tpu_custom_call.1} parent=43 // pred_region
          %s274 = sand.u32 %s31, 1
          %s275 = scalar_lea.sflag [#allocation4], %s274
          %s276 = sand.u32 %s31, 1
          %s277 = smul.addr %s276, 64
          %s278 = scalar_lea.vmem [#allocation3], %s277
          %280 = vsyncadd %s275, 0
          %s281 = smul.addr %s21, 8
          %s282 = smul.addr %s281, 8
          %s283 = scalar_lea.hbm %s0, %s282
          %s284 = sshll.u32 %s283, 4
          %s285 = int_to_ptr.hbm [resolvable:$true] %s284
          %s286 = sshll.u32 %s278, 4
          %s287 = int_to_ptr.vmem [resolvable:$true] %s286
          %292 = dma.hbm_to_vmem [thread:$0]  %s285, 1024, %s287, %s275, 512, 512, 32
        $region48: #{tpu_custom_call.1} parent=43 // pred_fallthru
          _
      $region44: #{tpu_custom_call.1} parent=5 // pred_fallthru
        _
      %p293 = scmp.le.s32.totalorder 1, %s21
      %p294 = scmp.lt.s32.totalorder %s21, 3
      %p295 = pnand %p293, %p294
      %p296 = pneg %p295
      // Predicated region
      $region49: #{tpu_custom_call.1} parent=5 // pred_check
        _
      $region50: #{tpu_custom_call.1} parent=5 // pred_check_branch
        %298 = sbr.rel (%p295) target = $region52
      $region51: #{tpu_custom_call.1} parent=5 // pred_region
        %s299 = ssub.s32 %s21, 1
        %s300 = sand.u32 %s34, 1
        %s301 = scalar_lea.sflag [#allocation4], %s300
        %s302 = sand.u32 %s34, 1
        %s303 = smul.addr %s302, 64
        %s304 = scalar_lea.vmem [#allocation3], %s303
        // Predicated region
        $region53: #{tpu_custom_call.1} parent=51 // pred_check
          %p305 = pneg %p47
        $region54: #{tpu_custom_call.1} parent=51 // pred_check_branch
          %307 = sbr.rel (%p305) target = $region56
        $region55: #{tpu_custom_call.1} parent=51 // pred_region
          %309 = dma.done %s301, 1024
        $region56: #{tpu_custom_call.1} parent=51 // pred_fallthru
          _
        // Predicated region
        $region57: #{tpu_custom_call.1} parent=51 // pred_check
          %p310 = pneg %p68
        $region58: #{tpu_custom_call.1} parent=51 // pred_check_branch
          %312 = sbr.rel (%p310) target = $region60
        $region59: #{tpu_custom_call.1} parent=51 // pred_region
          %314 = dma.done [#allocation7], 2048
        $region60: #{tpu_custom_call.1} parent=51 // pred_fallthru
          _
        %s315 = sand.u32 %s34, 1
        %s316 = scalar_lea.sflag [#allocation4], %s315
        %s317 = sand.u32 %s34, 1
        %s318 = smul.addr %s317, 64
        %s319 = scalar_lea.vmem [#allocation3], %s318
        %p320 = pneg %p47
        %p321 = pneg %p44
        %p322 = pneg %p68
        %p323 = pneg %p65
        %p324 = pneg %p89
        %p325 = pneg %p86
        %p326 = pneg %p110
        %p327 = pneg %p107
        %p328 = pneg %p131
        %p329 = pneg %p128
        %p330 = pneg %p152
        %p331 = pneg %p149
        %p332 = pneg %p173
        %p333 = pneg %p170
        %p334 = pneg %p194
        %p335 = pneg %p191
        %p336 = pneg %p220
        %p337 = pneg %p217
        %s338 = sand.u32 %s207, 1
        %s339 = scalar_lea.sflag [#allocation5], %s338
        %s340 = sand.u32 %s207, 1
        %s341 = smul.addr %s340, 64
        %s342 = scalar_lea.vmem [#allocation8], %s341
        %v344 = vld [vmem:[%s304] sm:$0xff]
        %v345 = vld [vmem:[%s304 + $0x8] sm:$0xff]
        %v346 = vld [vmem:[%s304 + $0x10] sm:$0xff]
        %v347 = vld [vmem:[%s304 + $0x18] sm:$0xff]
        %v348 = vld [vmem:[%s304 + $0x20] sm:$0xff]
        %v349 = vld [vmem:[%s304 + $0x28] sm:$0xff]
        %v350 = vld [vmem:[%s304 + $0x30] sm:$0xff]
        %v351 = vld [vmem:[%s304 + $0x38] sm:$0xff]
        %352 = vrot.lane.b32.xlu0 %v344, 73
        %v353 = vpop.permute.xlu0 %352
        %354 = vrot.lane.b32.xlu0 %v348, 73
        %v355 = vpop.permute.xlu0 %354
        %356 = vrot.lane.b32.xlu0 %v345, 73
        %v357 = vpop.permute.xlu0 %356
        %358 = vrot.lane.b32.xlu0 %v349, 73
        %v359 = vpop.permute.xlu0 %358
        %360 = vrot.lane.b32.xlu0 %v346, 73
        %v361 = vpop.permute.xlu0 %360
        %362 = vrot.lane.b32.xlu0 %v350, 73
        %v363 = vpop.permute.xlu0 %362
        %364 = vrot.lane.b32.xlu0 %v347, 73
        %v365 = vpop.permute.xlu0 %364
        %366 = vrot.lane.b32.xlu0 %v351, 73
        %v367 = vpop.permute.xlu0 %366
        %v368 = vlaneseq
        %v369 = vand.u32 %v368, 127
        %vm370 = vcmp.lt.s32.totalorder %v369, 73
        %v371 = vsel %vm370, %v361, %v365
        %v372 = vsel %vm370, %v363, %v367
        %v373 = vsel %vm370, %v357, %v361
        %v374 = vsel %vm370, %v359, %v363
        %v375 = vsel %vm370, %v353, %v357
        %v376 = vsel %vm370, %v355, %v359
        %v377 = vsel %vm370, %v365, %v353
        %v378 = vsel %vm370, %v367, %v355
        %v379 = vld [vmem:[#allocation6] ss:$8 sm:$0xf]
        %v381 = vperm.slane %v379, 0
        %v382 = vperm.slane %v379, 1
        %v383 = vperm.slane %v379, 2
        %v384 = vperm.slane %v379, 3
        %v389 = vmul.f32 %v377, %v381
        %v390 = vmul.f32 %v375, %v382
        %v391 = vmul.f32 %v373, %v383
        %v392 = vmul.f32 %v371, %v384
        %v393 = vmul.f32 %v378, %v381
        %v394 = vmul.f32 %v376, %v382
        %v395 = vmul.f32 %v374, %v383
        %v396 = vmul.f32 %v372, %v384
        %v397 = vpack.c.bf16 %v390, %v389
        %v398 = vpack.c.bf16 %v392, %v391
        %v399 = vpack.c.bf16 %v394, %v393
        %v400 = vpack.c.bf16 %v396, %v395
        %401 = vst [vmem:[#allocation2] sm:$0xff] %v397
        %402 = vst [vmem:[#allocation2 + $0x8] sm:$0xff] %v398
        %403 = vst [vmem:[#allocation2 + $0x10] sm:$0xff] %v399
        %404 = vst [vmem:[#allocation2 + $0x18] sm:$0xff] %v400
        %405 = vrot.lane.b32.xlu0 %v344, 72
        %v406 = vpop.permute.xlu0 %405
        %407 = vrot.lane.b32.xlu0 %v348, 72
        %v408 = vpop.permute.xlu0 %407
        %409 = vrot.lane.b32.xlu0 %v345, 72
        %v410 = vpop.permute.xlu0 %409
        %411 = vrot.lane.b32.xlu0 %v349, 72
        %v412 = vpop.permute.xlu0 %411
        %413 = vrot.lane.b32.xlu0 %v346, 72
        %v414 = vpop.permute.xlu0 %413
        %415 = vrot.lane.b32.xlu0 %v350, 72
        %v416 = vpop.permute.xlu0 %415
        %417 = vrot.lane.b32.xlu0 %v347, 72
        %v418 = vpop.permute.xlu0 %417
        %419 = vrot.lane.b32.xlu0 %v351, 72
        %v420 = vpop.permute.xlu0 %419
        %vm421 = vcmp.lt.s32.totalorder %v369, 72
        %v422 = vsel %vm421, %v414, %v418
        %v423 = vsel %vm421, %v416, %v420
        %v424 = vsel %vm421, %v410, %v414
        %v425 = vsel %vm421, %v412, %v416
        %v426 = vsel %vm421, %v406, %v410
        %v427 = vsel %vm421, %v408, %v412
        %v428 = vsel %vm421, %v418, %v406
        %v429 = vsel %vm421, %v420, %v408
        %s430 = scalar_lea.vmem [#allocation6], 1
        %v431 = vld [vmem:[%s430] ss:$8 sm:$0xf]
        %v433 = vperm.slane %v431, 0
        %v434 = vperm.slane %v431, 1
        %v435 = vperm.slane %v431, 2
        %v436 = vperm.slane %v431, 3
        %v441 = vmul.f32 %v428, %v433
        %v442 = vmul.f32 %v426, %v434
        %v443 = vmul.f32 %v424, %v435
        %v444 = vmul.f32 %v422, %v436
        %v445 = vmul.f32 %v429, %v433
        %v446 = vmul.f32 %v427, %v434
        %v447 = vmul.f32 %v425, %v435
        %v448 = vmul.f32 %v423, %v436
        %v449 = vpack.c.bf16 %v442, %v441
        %v450 = vpack.c.bf16 %v444, %v443
        %v451 = vpack.c.bf16 %v446, %v445
        %v452 = vpack.c.bf16 %v448, %v447
        %453 = vst [vmem:[#allocation2 + $0x20] sm:$0xff] %v449
        %454 = vst [vmem:[#allocation2 + $0x28] sm:$0xff] %v450
        %455 = vst [vmem:[#allocation2 + $0x30] sm:$0xff] %v451
        %456 = vst [vmem:[#allocation2 + $0x38] sm:$0xff] %v452
        %457 = vrot.lane.b32.xlu0 %v344, 71
        %v458 = vpop.permute.xlu0 %457
        %459 = vrot.lane.b32.xlu0 %v348, 71
        %v460 = vpop.permute.xlu0 %459
        %461 = vrot.lane.b32.xlu0 %v345, 71
        %v462 = vpop.permute.xlu0 %461
        %463 = vrot.lane.b32.xlu0 %v349, 71
        %v464 = vpop.permute.xlu0 %463
        %465 = vrot.lane.b32.xlu0 %v346, 71
        %v466 = vpop.permute.xlu0 %465
        %467 = vrot.lane.b32.xlu0 %v350, 71
        %v468 = vpop.permute.xlu0 %467
        %469 = vrot.lane.b32.xlu0 %v347, 71
        %v470 = vpop.permute.xlu0 %469
        %471 = vrot.lane.b32.xlu0 %v351, 71
        %v472 = vpop.permute.xlu0 %471
        %vm473 = vcmp.lt.s32.totalorder %v369, 71
        %v474 = vsel %vm473, %v466, %v470
        %v475 = vsel %vm473, %v468, %v472
        %v476 = vsel %vm473, %v462, %v466
        %v477 = vsel %vm473, %v464, %v468
        %v478 = vsel %vm473, %v458, %v462
        %v479 = vsel %vm473, %v460, %v464
        %v480 = vsel %vm473, %v470, %v458
        %v481 = vsel %vm473, %v472, %v460
        %s482 = scalar_lea.vmem [#allocation6], 2
        %v483 = vld [vmem:[%s482] ss:$8 sm:$0xf]
        %v485 = vperm.slane %v483, 0
        %v486 = vperm.slane %v483, 1
        %v487 = vperm.slane %v483, 2
        %v488 = vperm.slane %v483, 3
        %v493 = vmul.f32 %v480, %v485
        %v494 = vmul.f32 %v478, %v486
        %v495 = vmul.f32 %v476, %v487
        %v496 = vmul.f32 %v474, %v488
        %v497 = vmul.f32 %v481, %v485
        %v498 = vmul.f32 %v479, %v486
        %v499 = vmul.f32 %v477, %v487
        %v500 = vmul.f32 %v475, %v488
        %v501 = vpack.c.bf16 %v494, %v493
        %v502 = vpack.c.bf16 %v496, %v495
        %v503 = vpack.c.bf16 %v498, %v497
        %v504 = vpack.c.bf16 %v500, %v499
        %505 = vst [vmem:[#allocation2 + $0x40] sm:$0xff] %v501
        %506 = vst [vmem:[#allocation2 + $0x48] sm:$0xff] %v502
        %507 = vst [vmem:[#allocation2 + $0x50] sm:$0xff] %v503
        %508 = vst [vmem:[#allocation2 + $0x58] sm:$0xff] %v504
        %509 = vrot.lane.b32.xlu0 %v344, 65
        %v510 = vpop.permute.xlu0 %509
        %511 = vrot.lane.b32.xlu0 %v348, 65
        %v512 = vpop.permute.xlu0 %511
        %513 = vrot.lane.b32.xlu0 %v345, 65
        %v514 = vpop.permute.xlu0 %513
        %515 = vrot.lane.b32.xlu0 %v349, 65
        %v516 = vpop.permute.xlu0 %515
        %517 = vrot.lane.b32.xlu0 %v346, 65
        %v518 = vpop.permute.xlu0 %517
        %519 = vrot.lane.b32.xlu0 %v350, 65
        %v520 = vpop.permute.xlu0 %519
        %521 = vrot.lane.b32.xlu0 %v347, 65
        %v522 = vpop.permute.xlu0 %521
        %523 = vrot.lane.b32.xlu0 %v351, 65
        %v524 = vpop.permute.xlu0 %523
        %vm525 = vcmp.lt.s32.totalorder %v369, 65
        %v526 = vsel %vm525, %v518, %v522
        %v527 = vsel %vm525, %v520, %v524
        %v528 = vsel %vm525, %v514, %v518
        %v529 = vsel %vm525, %v516, %v520
        %v530 = vsel %vm525, %v510, %v514
        %v531 = vsel %vm525, %v512, %v516
        %v532 = vsel %vm525, %v522, %v510
        %v533 = vsel %vm525, %v524, %v512
        %s534 = scalar_lea.vmem [#allocation6], 3
        %v535 = vld [vmem:[%s534] ss:$8 sm:$0xf]
        %v537 = vperm.slane %v535, 0
        %v538 = vperm.slane %v535, 1
        %v539 = vperm.slane %v535, 2
        %v540 = vperm.slane %v535, 3
        %v545 = vmul.f32 %v532, %v537
        %v546 = vmul.f32 %v530, %v538
        %v547 = vmul.f32 %v528, %v539
        %v548 = vmul.f32 %v526, %v540
        %v549 = vmul.f32 %v533, %v537
        %v550 = vmul.f32 %v531, %v538
        %v551 = vmul.f32 %v529, %v539
        %v552 = vmul.f32 %v527, %v540
        %v553 = vpack.c.bf16 %v546, %v545
        %v554 = vpack.c.bf16 %v548, %v547
        %v555 = vpack.c.bf16 %v550, %v549
        %v556 = vpack.c.bf16 %v552, %v551
        %557 = vst [vmem:[#allocation2 + $0x60] sm:$0xff] %v553
        %558 = vst [vmem:[#allocation2 + $0x68] sm:$0xff] %v554
        %559 = vst [vmem:[#allocation2 + $0x70] sm:$0xff] %v555
        %560 = vst [vmem:[#allocation2 + $0x78] sm:$0xff] %v556
        %561 = vrot.lane.b32.xlu0 %v344, 64
        %v562 = vpop.permute.xlu0 %561
        %563 = vrot.lane.b32.xlu0 %v348, 64
        %v564 = vpop.permute.xlu0 %563
        %565 = vrot.lane.b32.xlu0 %v345, 64
        %v566 = vpop.permute.xlu0 %565
        %567 = vrot.lane.b32.xlu0 %v349, 64
        %v568 = vpop.permute.xlu0 %567
        %569 = vrot.lane.b32.xlu0 %v346, 64
        %v570 = vpop.permute.xlu0 %569
        %571 = vrot.lane.b32.xlu0 %v350, 64
        %v572 = vpop.permute.xlu0 %571
        %573 = vrot.lane.b32.xlu0 %v347, 64
        %v574 = vpop.permute.xlu0 %573
        %575 = vrot.lane.b32.xlu0 %v351, 64
        %v576 = vpop.permute.xlu0 %575
        %vm577 = vcmp.lt.s32.totalorder %v369, 64
        %v578 = vsel %vm577, %v570, %v574
        %v579 = vsel %vm577, %v572, %v576
        %v580 = vsel %vm577, %v566, %v570
        %v581 = vsel %vm577, %v568, %v572
        %v582 = vsel %vm577, %v562, %v566
        %v583 = vsel %vm577, %v564, %v568
        %v584 = vsel %vm577, %v574, %v562
        %v585 = vsel %vm577, %v576, %v564
        %s586 = scalar_lea.vmem [#allocation6], 4
        %v587 = vld [vmem:[%s586] ss:$8 sm:$0xf]
        %v589 = vperm.slane %v587, 0
        %v590 = vperm.slane %v587, 1
        %v591 = vperm.slane %v587, 2
        %v592 = vperm.slane %v587, 3
        %v597 = vmul.f32 %v584, %v589
        %v598 = vmul.f32 %v582, %v590
        %v599 = vmul.f32 %v580, %v591
        %v600 = vmul.f32 %v578, %v592
        %v601 = vmul.f32 %v585, %v589
        %v602 = vmul.f32 %v583, %v590
        %v603 = vmul.f32 %v581, %v591
        %v604 = vmul.f32 %v579, %v592
        %v605 = vpack.c.bf16 %v598, %v597
        %v606 = vpack.c.bf16 %v600, %v599
        %v607 = vpack.c.bf16 %v602, %v601
        %v608 = vpack.c.bf16 %v604, %v603
        %609 = vst [vmem:[#allocation2 + $0x80] sm:$0xff] %v605
        %610 = vst [vmem:[#allocation2 + $0x88] sm:$0xff] %v606
        %611 = vst [vmem:[#allocation2 + $0x90] sm:$0xff] %v607
        %612 = vst [vmem:[#allocation2 + $0x98] sm:$0xff] %v608
        %613 = vrot.lane.b32.xlu0 %v344, 63
        %v614 = vpop.permute.xlu0 %613
        %615 = vrot.lane.b32.xlu0 %v348, 63
        %v616 = vpop.permute.xlu0 %615
        %617 = vrot.lane.b32.xlu0 %v345, 63
        %v618 = vpop.permute.xlu0 %617
        %619 = vrot.lane.b32.xlu0 %v349, 63
        %v620 = vpop.permute.xlu0 %619
        %621 = vrot.lane.b32.xlu0 %v346, 63
        %v622 = vpop.permute.xlu0 %621
        %623 = vrot.lane.b32.xlu0 %v350, 63
        %v624 = vpop.permute.xlu0 %623
        %625 = vrot.lane.b32.xlu0 %v347, 63
        %v626 = vpop.permute.xlu0 %625
        %627 = vrot.lane.b32.xlu0 %v351, 63
        %v628 = vpop.permute.xlu0 %627
        %vm629 = vcmp.lt.s32.totalorder %v369, 63
        %v630 = vsel %vm629, %v622, %v626
        %v631 = vsel %vm629, %v624, %v628
        %v632 = vsel %vm629, %v618, %v622
        %v633 = vsel %vm629, %v620, %v624
        %v634 = vsel %vm629, %v614, %v618
        %v635 = vsel %vm629, %v616, %v620
        %v636 = vsel %vm629, %v626, %v614
        %v637 = vsel %vm629, %v628, %v616
        %s638 = scalar_lea.vmem [#allocation6], 5
        %v639 = vld [vmem:[%s638] ss:$8 sm:$0xf]
        %v641 = vperm.slane %v639, 0
        %v642 = vperm.slane %v639, 1
        %v643 = vperm.slane %v639, 2
        %v644 = vperm.slane %v639, 3
        %v649 = vmul.f32 %v636, %v641
        %v650 = vmul.f32 %v634, %v642
        %v651 = vmul.f32 %v632, %v643
        %v652 = vmul.f32 %v630, %v644
        %v653 = vmul.f32 %v637, %v641
        %v654 = vmul.f32 %v635, %v642
        %v655 = vmul.f32 %v633, %v643
        %v656 = vmul.f32 %v631, %v644
        %v657 = vpack.c.bf16 %v650, %v649
        %v658 = vpack.c.bf16 %v652, %v651
        %v659 = vpack.c.bf16 %v654, %v653
        %v660 = vpack.c.bf16 %v656, %v655
        %661 = vst [vmem:[#allocation2 + $0xa0] sm:$0xff] %v657
        %662 = vst [vmem:[#allocation2 + $0xa8] sm:$0xff] %v658
        %663 = vst [vmem:[#allocation2 + $0xb0] sm:$0xff] %v659
        %664 = vst [vmem:[#allocation2 + $0xb8] sm:$0xff] %v660
        %665 = vrot.lane.b32.xlu0 %v344, 57
        %v666 = vpop.permute.xlu0 %665
        %667 = vrot.lane.b32.xlu0 %v348, 57
        %v668 = vpop.permute.xlu0 %667
        %669 = vrot.lane.b32.xlu0 %v345, 57
        %v670 = vpop.permute.xlu0 %669
        %671 = vrot.lane.b32.xlu0 %v349, 57
        %v672 = vpop.permute.xlu0 %671
        %673 = vrot.lane.b32.xlu0 %v346, 57
        %v674 = vpop.permute.xlu0 %673
        %675 = vrot.lane.b32.xlu0 %v350, 57
        %v676 = vpop.permute.xlu0 %675
        %677 = vrot.lane.b32.xlu0 %v347, 57
        %v678 = vpop.permute.xlu0 %677
        %679 = vrot.lane.b32.xlu0 %v351, 57
        %v680 = vpop.permute.xlu0 %679
        %vm681 = vcmp.lt.s32.totalorder %v369, 57
        %v682 = vsel %vm681, %v674, %v678
        %v683 = vsel %vm681, %v676, %v680
        %v684 = vsel %vm681, %v670, %v674
        %v685 = vsel %vm681, %v672, %v676
        %v686 = vsel %vm681, %v666, %v670
        %v687 = vsel %vm681, %v668, %v672
        %v688 = vsel %vm681, %v678, %v666
        %v689 = vsel %vm681, %v680, %v668
        %s690 = scalar_lea.vmem [#allocation6], 6
        %v691 = vld [vmem:[%s690] ss:$8 sm:$0xf]
        %v693 = vperm.slane %v691, 0
        %v694 = vperm.slane %v691, 1
        %v695 = vperm.slane %v691, 2
        %v696 = vperm.slane %v691, 3
        %v701 = vmul.f32 %v688, %v693
        %v702 = vmul.f32 %v686, %v694
        %v703 = vmul.f32 %v684, %v695
        %v704 = vmul.f32 %v682, %v696
        %v705 = vmul.f32 %v689, %v693
        %v706 = vmul.f32 %v687, %v694
        %v707 = vmul.f32 %v685, %v695
        %v708 = vmul.f32 %v683, %v696
        %v709 = vpack.c.bf16 %v702, %v701
        %v710 = vpack.c.bf16 %v704, %v703
        %v711 = vpack.c.bf16 %v706, %v705
        %v712 = vpack.c.bf16 %v708, %v707
        %713 = vst [vmem:[#allocation2 + $0xc0] sm:$0xff] %v709
        %714 = vst [vmem:[#allocation2 + $0xc8] sm:$0xff] %v710
        %715 = vst [vmem:[#allocation2 + $0xd0] sm:$0xff] %v711
        %716 = vst [vmem:[#allocation2 + $0xd8] sm:$0xff] %v712
        %717 = vrot.lane.b32.xlu0 %v344, 56
        %v718 = vpop.permute.xlu0 %717
        %719 = vrot.lane.b32.xlu0 %v348, 56
        %v720 = vpop.permute.xlu0 %719
        %721 = vrot.lane.b32.xlu0 %v345, 56
        %v722 = vpop.permute.xlu0 %721
        %723 = vrot.lane.b32.xlu0 %v349, 56
        %v724 = vpop.permute.xlu0 %723
        %725 = vrot.lane.b32.xlu0 %v346, 56
        %v726 = vpop.permute.xlu0 %725
        %727 = vrot.lane.b32.xlu0 %v350, 56
        %v728 = vpop.permute.xlu0 %727
        %729 = vrot.lane.b32.xlu0 %v347, 56
        %v730 = vpop.permute.xlu0 %729
        %731 = vrot.lane.b32.xlu0 %v351, 56
        %v732 = vpop.permute.xlu0 %731
        %vm733 = vcmp.lt.s32.totalorder %v369, 56
        %v734 = vsel %vm733, %v726, %v730
        %v735 = vsel %vm733, %v728, %v732
        %v736 = vsel %vm733, %v722, %v726
        %v737 = vsel %vm733, %v724, %v728
        %v738 = vsel %vm733, %v718, %v722
        %v739 = vsel %vm733, %v720, %v724
        %v740 = vsel %vm733, %v730, %v718
        %v741 = vsel %vm733, %v732, %v720
        %s742 = scalar_lea.vmem [#allocation6], 7
        %v743 = vld [vmem:[%s742] ss:$8 sm:$0xf]
        %v745 = vperm.slane %v743, 0
        %v746 = vperm.slane %v743, 1
        %v747 = vperm.slane %v743, 2
        %v748 = vperm.slane %v743, 3
        %v753 = vmul.f32 %v740, %v745
        %v754 = vmul.f32 %v738, %v746
        %v755 = vmul.f32 %v736, %v747
        %v756 = vmul.f32 %v734, %v748
        %v757 = vmul.f32 %v741, %v745
        %v758 = vmul.f32 %v739, %v746
        %v759 = vmul.f32 %v737, %v747
        %v760 = vmul.f32 %v735, %v748
        %v761 = vpack.c.bf16 %v754, %v753
        %v762 = vpack.c.bf16 %v756, %v755
        %v763 = vpack.c.bf16 %v758, %v757
        %v764 = vpack.c.bf16 %v760, %v759
        %765 = vst [vmem:[#allocation2 + $0xe0] sm:$0xff] %v761
        %766 = vst [vmem:[#allocation2 + $0xe8] sm:$0xff] %v762
        %767 = vst [vmem:[#allocation2 + $0xf0] sm:$0xff] %v763
        %768 = vst [vmem:[#allocation2 + $0xf8] sm:$0xff] %v764
        %769 = vrot.lane.b32.xlu0 %v344, 55
        %v770 = vpop.permute.xlu0 %769
        %771 = vrot.lane.b32.xlu0 %v348, 55
        %v772 = vpop.permute.xlu0 %771
        %773 = vrot.lane.b32.xlu0 %v345, 55
        %v774 = vpop.permute.xlu0 %773
        %775 = vrot.lane.b32.xlu0 %v349, 55
        %v776 = vpop.permute.xlu0 %775
        %777 = vrot.lane.b32.xlu0 %v346, 55
        %v778 = vpop.permute.xlu0 %777
        %779 = vrot.lane.b32.xlu0 %v350, 55
        %v780 = vpop.permute.xlu0 %779
        %781 = vrot.lane.b32.xlu0 %v347, 55
        %v782 = vpop.permute.xlu0 %781
        %783 = vrot.lane.b32.xlu0 %v351, 55
        %v784 = vpop.permute.xlu0 %783
        %vm785 = vcmp.lt.s32.totalorder %v369, 55
        %v786 = vsel %vm785, %v778, %v782
        %v787 = vsel %vm785, %v780, %v784
        %v788 = vsel %vm785, %v774, %v778
        %v789 = vsel %vm785, %v776, %v780
        %v790 = vsel %vm785, %v770, %v774
        %v791 = vsel %vm785, %v772, %v776
        %v792 = vsel %vm785, %v782, %v770
        %v793 = vsel %vm785, %v784, %v772
        %s794 = scalar_lea.vmem [#allocation6], 32
        %v795 = vld [vmem:[%s794] ss:$8 sm:$0xf]
        %v797 = vperm.slane %v795, 0
        %v798 = vperm.slane %v795, 1
        %v799 = vperm.slane %v795, 2
        %v800 = vperm.slane %v795, 3
        %v805 = vmul.f32 %v792, %v797
        %v806 = vmul.f32 %v790, %v798
        %v807 = vmul.f32 %v788, %v799
        %v808 = vmul.f32 %v786, %v800
        %v809 = vmul.f32 %v793, %v797
        %v810 = vmul.f32 %v791, %v798
        %v811 = vmul.f32 %v789, %v799
        %v812 = vmul.f32 %v787, %v800
        %v813 = vpack.c.bf16 %v806, %v805
        %v814 = vpack.c.bf16 %v808, %v807
        %v815 = vpack.c.bf16 %v810, %v809
        %v816 = vpack.c.bf16 %v812, %v811
        %817 = vst [vmem:[#allocation2 + $0x100] sm:$0xff] %v813
        %818 = vst [vmem:[#allocation2 + $0x108] sm:$0xff] %v814
        %819 = vst [vmem:[#allocation2 + $0x110] sm:$0xff] %v815
        %820 = vst [vmem:[#allocation2 + $0x118] sm:$0xff] %v816
        %821 = vrot.lane.b32.xlu0 %v344, 9
        %v822 = vpop.permute.xlu0 %821
        %823 = vrot.lane.b32.xlu0 %v348, 9
        %v824 = vpop.permute.xlu0 %823
        %825 = vrot.lane.b32.xlu0 %v345, 9
        %v826 = vpop.permute.xlu0 %825
        %827 = vrot.lane.b32.xlu0 %v349, 9
        %v828 = vpop.permute.xlu0 %827
        %829 = vrot.lane.b32.xlu0 %v346, 9
        %v830 = vpop.permute.xlu0 %829
        %831 = vrot.lane.b32.xlu0 %v350, 9
        %v832 = vpop.permute.xlu0 %831
        %833 = vrot.lane.b32.xlu0 %v347, 9
        %v834 = vpop.permute.xlu0 %833
        %835 = vrot.lane.b32.xlu0 %v351, 9
        %v836 = vpop.permute.xlu0 %835
        %vm837 = vcmp.lt.s32.totalorder %v369, 9
        %v838 = vsel %vm837, %v830, %v834
        %v839 = vsel %vm837, %v832, %v836
        %v840 = vsel %vm837, %v826, %v830
        %v841 = vsel %vm837, %v828, %v832
        %v842 = vsel %vm837, %v822, %v826
        %v843 = vsel %vm837, %v824, %v828
        %v844 = vsel %vm837, %v834, %v822
        %v845 = vsel %vm837, %v836, %v824
        %s846 = scalar_lea.vmem [#allocation6], 33
        %v847 = vld [vmem:[%s846] ss:$8 sm:$0xf]
        %v849 = vperm.slane %v847, 0
        %v850 = vperm.slane %v847, 1
        %v851 = vperm.slane %v847, 2
        %v852 = vperm.slane %v847, 3
        %v857 = vmul.f32 %v844, %v849
        %v858 = vmul.f32 %v842, %v850
        %v859 = vmul.f32 %v840, %v851
        %v860 = vmul.f32 %v838, %v852
        %v861 = vmul.f32 %v845, %v849
        %v862 = vmul.f32 %v843, %v850
        %v863 = vmul.f32 %v841, %v851
        %v864 = vmul.f32 %v839, %v852
        %v865 = vpack.c.bf16 %v858, %v857
        %v866 = vpack.c.bf16 %v860, %v859
        %v867 = vpack.c.bf16 %v862, %v861
        %v868 = vpack.c.bf16 %v864, %v863
        %869 = vst [vmem:[#allocation2 + $0x120] sm:$0xff] %v865
        %870 = vst [vmem:[#allocation2 + $0x128] sm:$0xff] %v866
        %871 = vst [vmem:[#allocation2 + $0x130] sm:$0xff] %v867
        %872 = vst [vmem:[#allocation2 + $0x138] sm:$0xff] %v868
        %873 = vrot.lane.b32.xlu0 %v344, 8
        %v874 = vpop.permute.xlu0 %873
        %875 = vrot.lane.b32.xlu0 %v348, 8
        %v876 = vpop.permute.xlu0 %875
        %877 = vrot.lane.b32.xlu0 %v345, 8
        %v878 = vpop.permute.xlu0 %877
        %879 = vrot.lane.b32.xlu0 %v349, 8
        %v880 = vpop.permute.xlu0 %879
        %881 = vrot.lane.b32.xlu0 %v346, 8
        %v882 = vpop.permute.xlu0 %881
        %883 = vrot.lane.b32.xlu0 %v350, 8
        %v884 = vpop.permute.xlu0 %883
        %885 = vrot.lane.b32.xlu0 %v347, 8
        %v886 = vpop.permute.xlu0 %885
        %887 = vrot.lane.b32.xlu0 %v351, 8
        %v888 = vpop.permute.xlu0 %887
        %vm889 = vcmp.lt.s32.totalorder %v369, 8
        %v890 = vsel %vm889, %v882, %v886
        %v891 = vsel %vm889, %v884, %v888
        %v892 = vsel %vm889, %v878, %v882
        %v893 = vsel %vm889, %v880, %v884
        %v894 = vsel %vm889, %v874, %v878
        %v895 = vsel %vm889, %v876, %v880
        %v896 = vsel %vm889, %v886, %v874
        %v897 = vsel %vm889, %v888, %v876
        %s898 = scalar_lea.vmem [#allocation6], 34
        %v899 = vld [vmem:[%s898] ss:$8 sm:$0xf]
        %v901 = vperm.slane %v899, 0
        %v902 = vperm.slane %v899, 1
        %v903 = vperm.slane %v899, 2
        %v904 = vperm.slane %v899, 3
        %v909 = vmul.f32 %v896, %v901
        %v910 = vmul.f32 %v894, %v902
        %v911 = vmul.f32 %v892, %v903
        %v912 = vmul.f32 %v890, %v904
        %v913 = vmul.f32 %v897, %v901
        %v914 = vmul.f32 %v895, %v902
        %v915 = vmul.f32 %v893, %v903
        %v916 = vmul.f32 %v891, %v904
        %v917 = vpack.c.bf16 %v910, %v909
        %v918 = vpack.c.bf16 %v912, %v911
        %v919 = vpack.c.bf16 %v914, %v913
        %v920 = vpack.c.bf16 %v916, %v915
        %921 = vst [vmem:[#allocation2 + $0x140] sm:$0xff] %v917
        %922 = vst [vmem:[#allocation2 + $0x148] sm:$0xff] %v918
        %923 = vst [vmem:[#allocation2 + $0x150] sm:$0xff] %v919
        %924 = vst [vmem:[#allocation2 + $0x158] sm:$0xff] %v920
        %925 = vrot.lane.b32.xlu0 %v344, 7
        %v926 = vpop.permute.xlu0 %925
        %927 = vrot.lane.b32.xlu0 %v348, 7
        %v928 = vpop.permute.xlu0 %927
        %929 = vrot.lane.b32.xlu0 %v345, 7
        %v930 = vpop.permute.xlu0 %929
        %931 = vrot.lane.b32.xlu0 %v349, 7
        %v932 = vpop.permute.xlu0 %931
        %933 = vrot.lane.b32.xlu0 %v346, 7
        %v934 = vpop.permute.xlu0 %933
        %935 = vrot.lane.b32.xlu0 %v350, 7
        %v936 = vpop.permute.xlu0 %935
        %937 = vrot.lane.b32.xlu0 %v347, 7
        %v938 = vpop.permute.xlu0 %937
        %939 = vrot.lane.b32.xlu0 %v351, 7
        %v940 = vpop.permute.xlu0 %939
        %vm941 = vcmp.lt.s32.totalorder %v369, 7
        %v942 = vsel %vm941, %v934, %v938
        %v943 = vsel %vm941, %v936, %v940
        %v944 = vsel %vm941, %v930, %v934
        %v945 = vsel %vm941, %v932, %v936
        %v946 = vsel %vm941, %v926, %v930
        %v947 = vsel %vm941, %v928, %v932
        %v948 = vsel %vm941, %v938, %v926
        %v949 = vsel %vm941, %v940, %v928
        %s950 = scalar_lea.vmem [#allocation6], 35
        %v951 = vld [vmem:[%s950] ss:$8 sm:$0xf]
        %v953 = vperm.slane %v951, 0
        %v954 = vperm.slane %v951, 1
        %v955 = vperm.slane %v951, 2
        %v956 = vperm.slane %v951, 3
        %v961 = vmul.f32 %v948, %v953
        %v962 = vmul.f32 %v946, %v954
        %v963 = vmul.f32 %v944, %v955
        %v964 = vmul.f32 %v942, %v956
        %v965 = vmul.f32 %v949, %v953
        %v966 = vmul.f32 %v947, %v954
        %v967 = vmul.f32 %v945, %v955
        %v968 = vmul.f32 %v943, %v956
        %v969 = vpack.c.bf16 %v962, %v961
        %v970 = vpack.c.bf16 %v964, %v963
        %v971 = vpack.c.bf16 %v966, %v965
        %v972 = vpack.c.bf16 %v968, %v967
        %973 = vst [vmem:[#allocation2 + $0x160] sm:$0xff] %v969
        %974 = vst [vmem:[#allocation2 + $0x168] sm:$0xff] %v970
        %975 = vst [vmem:[#allocation2 + $0x170] sm:$0xff] %v971
        %976 = vst [vmem:[#allocation2 + $0x178] sm:$0xff] %v972
        %977 = vrot.lane.b32.xlu0 %v344, 1
        %v978 = vpop.permute.xlu0 %977
        %979 = vrot.lane.b32.xlu0 %v348, 1
        %v980 = vpop.permute.xlu0 %979
        %981 = vrot.lane.b32.xlu0 %v345, 1
        %v982 = vpop.permute.xlu0 %981
        %983 = vrot.lane.b32.xlu0 %v349, 1
        %v984 = vpop.permute.xlu0 %983
        %985 = vrot.lane.b32.xlu0 %v346, 1
        %v986 = vpop.permute.xlu0 %985
        %987 = vrot.lane.b32.xlu0 %v350, 1
        %v988 = vpop.permute.xlu0 %987
        %989 = vrot.lane.b32.xlu0 %v347, 1
        %v990 = vpop.permute.xlu0 %989
        %991 = vrot.lane.b32.xlu0 %v351, 1
        %v992 = vpop.permute.xlu0 %991
        %vm993 = vcmp.lt.s32.totalorder %v369, 1
        %v994 = vsel %vm993, %v986, %v990
        %v995 = vsel %vm993, %v988, %v992
        %v996 = vsel %vm993, %v982, %v986
        %v997 = vsel %vm993, %v984, %v988
        %v998 = vsel %vm993, %v978, %v982
        %v999 = vsel %vm993, %v980, %v984
        %v1000 = vsel %vm993, %v990, %v978
        %v1001 = vsel %vm993, %v992, %v980
        %s1002 = scalar_lea.vmem [#allocation6], 36
        %v1003 = vld [vmem:[%s1002] ss:$8 sm:$0xf]
        %v1005 = vperm.slane %v1003, 0
        %v1006 = vperm.slane %v1003, 1
        %v1007 = vperm.slane %v1003, 2
        %v1008 = vperm.slane %v1003, 3
        %v1013 = vmul.f32 %v1000, %v1005
        %v1014 = vmul.f32 %v998, %v1006
        %v1015 = vmul.f32 %v996, %v1007
        %v1016 = vmul.f32 %v994, %v1008
        %v1017 = vmul.f32 %v1001, %v1005
        %v1018 = vmul.f32 %v999, %v1006
        %v1019 = vmul.f32 %v997, %v1007
        %v1020 = vmul.f32 %v995, %v1008
        %v1021 = vpack.c.bf16 %v1014, %v1013
        %v1022 = vpack.c.bf16 %v1016, %v1015
        %v1023 = vpack.c.bf16 %v1018, %v1017
        %v1024 = vpack.c.bf16 %v1020, %v1019
        %1025 = vst [vmem:[#allocation2 + $0x180] sm:$0xff] %v1021
        %1026 = vst [vmem:[#allocation2 + $0x188] sm:$0xff] %v1022
        %1027 = vst [vmem:[#allocation2 + $0x190] sm:$0xff] %v1023
        %1028 = vst [vmem:[#allocation2 + $0x198] sm:$0xff] %v1024
        %v1029 = vpack.c.bf16 %v345, %v344
        %v1030 = vpack.c.bf16 %v347, %v346
        %v1031 = vpack.c.bf16 %v349, %v348
        %v1032 = vpack.c.bf16 %v351, %v350
        %1033 = vst [vmem:[#allocation2 + $0x1a0] sm:$0xff] %v1029
        %1034 = vst [vmem:[#allocation2 + $0x1a8] sm:$0xff] %v1030
        %1035 = vst [vmem:[#allocation2 + $0x1b0] sm:$0xff] %v1031
        %1036 = vst [vmem:[#allocation2 + $0x1b8] sm:$0xff] %v1032
        %1037 = vrot.lane.b32.xlu0 %v344, 127
        %v1038 = vpop.permute.xlu0 %1037
        %1039 = vrot.lane.b32.xlu0 %v348, 127
        %v1040 = vpop.permute.xlu0 %1039
        %1041 = vrot.lane.b32.xlu0 %v345, 127
        %v1042 = vpop.permute.xlu0 %1041
        %1043 = vrot.lane.b32.xlu0 %v349, 127
        %v1044 = vpop.permute.xlu0 %1043
        %1045 = vrot.lane.b32.xlu0 %v346, 127
        %v1046 = vpop.permute.xlu0 %1045
        %1047 = vrot.lane.b32.xlu0 %v350, 127
        %v1048 = vpop.permute.xlu0 %1047
        %1049 = vrot.lane.b32.xlu0 %v347, 127
        %v1050 = vpop.permute.xlu0 %1049
        %1051 = vrot.lane.b32.xlu0 %v351, 127
        %v1052 = vpop.permute.xlu0 %1051
        %vm1053 = vcmp.lt.s32.totalorder %v369, 127
        %v1054 = vsel %vm1053, %v1046, %v1050
        %v1055 = vsel %vm1053, %v1048, %v1052
        %v1056 = vsel %vm1053, %v1042, %v1046
        %v1057 = vsel %vm1053, %v1044, %v1048
        %v1058 = vsel %vm1053, %v1038, %v1042
        %v1059 = vsel %vm1053, %v1040, %v1044
        %v1060 = vsel %vm1053, %v1050, %v1038
        %v1061 = vsel %vm1053, %v1052, %v1040
        %s1062 = scalar_lea.vmem [#allocation6], 38
        %v1063 = vld [vmem:[%s1062] ss:$8 sm:$0xf]
        %v1065 = vperm.slane %v1063, 0
        %v1066 = vperm.slane %v1063, 1
        %v1067 = vperm.slane %v1063, 2
        %v1068 = vperm.slane %v1063, 3
        %v1073 = vmul.f32 %v1058, %v1065
        %v1074 = vmul.f32 %v1056, %v1066
        %v1075 = vmul.f32 %v1054, %v1067
        %v1076 = vmul.f32 %v1060, %v1068
        %v1077 = vmul.f32 %v1059, %v1065
        %v1078 = vmul.f32 %v1057, %v1066
        %v1079 = vmul.f32 %v1055, %v1067
        %v1080 = vmul.f32 %v1061, %v1068
        %v1081 = vpack.c.bf16 %v1074, %v1073
        %v1082 = vpack.c.bf16 %v1076, %v1075
        %v1083 = vpack.c.bf16 %v1078, %v1077
        %v1084 = vpack.c.bf16 %v1080, %v1079
        %1085 = vst [vmem:[#allocation2 + $0x1c0] sm:$0xff] %v1081
        %1086 = vst [vmem:[#allocation2 + $0x1c8] sm:$0xff] %v1082
        %1087 = vst [vmem:[#allocation2 + $0x1d0] sm:$0xff] %v1083
        %1088 = vst [vmem:[#allocation2 + $0x1d8] sm:$0xff] %v1084
        %1089 = vrot.lane.b32.xlu0 %v344, 121
        %v1090 = vpop.permute.xlu0 %1089
        %1091 = vrot.lane.b32.xlu0 %v348, 121
        %v1092 = vpop.permute.xlu0 %1091
        %1093 = vrot.lane.b32.xlu0 %v345, 121
        %v1094 = vpop.permute.xlu0 %1093
        %1095 = vrot.lane.b32.xlu0 %v349, 121
        %v1096 = vpop.permute.xlu0 %1095
        %1097 = vrot.lane.b32.xlu0 %v346, 121
        %v1098 = vpop.permute.xlu0 %1097
        %1099 = vrot.lane.b32.xlu0 %v350, 121
        %v1100 = vpop.permute.xlu0 %1099
        %1101 = vrot.lane.b32.xlu0 %v347, 121
        %v1102 = vpop.permute.xlu0 %1101
        %1103 = vrot.lane.b32.xlu0 %v351, 121
        %v1104 = vpop.permute.xlu0 %1103
        %vm1105 = vcmp.lt.s32.totalorder %v369, 121
        %v1106 = vsel %vm1105, %v1098, %v1102
        %v1107 = vsel %vm1105, %v1100, %v1104
        %v1108 = vsel %vm1105, %v1094, %v1098
        %v1109 = vsel %vm1105, %v1096, %v1100
        %v1110 = vsel %vm1105, %v1090, %v1094
        %v1111 = vsel %vm1105, %v1092, %v1096
        %v1112 = vsel %vm1105, %v1102, %v1090
        %v1113 = vsel %vm1105, %v1104, %v1092
        %s1114 = scalar_lea.vmem [#allocation6], 39
        %v1115 = vld [vmem:[%s1114] ss:$8 sm:$0xf]
        %v1117 = vperm.slane %v1115, 0
        %v1118 = vperm.slane %v1115, 1
        %v1119 = vperm.slane %v1115, 2
        %v1120 = vperm.slane %v1115, 3
        %v1125 = vmul.f32 %v1110, %v1117
        %v1126 = vmul.f32 %v1108, %v1118
        %v1127 = vmul.f32 %v1106, %v1119
        %v1128 = vmul.f32 %v1112, %v1120
        %v1129 = vmul.f32 %v1111, %v1117
        %v1130 = vmul.f32 %v1109, %v1118
        %v1131 = vmul.f32 %v1107, %v1119
        %v1132 = vmul.f32 %v1113, %v1120
        %v1133 = vpack.c.bf16 %v1126, %v1125
        %v1134 = vpack.c.bf16 %v1128, %v1127
        %v1135 = vpack.c.bf16 %v1130, %v1129
        %v1136 = vpack.c.bf16 %v1132, %v1131
        %1137 = vst [vmem:[#allocation2 + $0x1e0] sm:$0xff] %v1133
        %1138 = vst [vmem:[#allocation2 + $0x1e8] sm:$0xff] %v1134
        %1139 = vst [vmem:[#allocation2 + $0x1f0] sm:$0xff] %v1135
        %1140 = vst [vmem:[#allocation2 + $0x1f8] sm:$0xff] %v1136
        %1141 = vrot.lane.b32.xlu0 %v344, 120
        %v1142 = vpop.permute.xlu0 %1141
        %1143 = vrot.lane.b32.xlu0 %v348, 120
        %v1144 = vpop.permute.xlu0 %1143
        %1145 = vrot.lane.b32.xlu0 %v345, 120
        %v1146 = vpop.permute.xlu0 %1145
        %1147 = vrot.lane.b32.xlu0 %v349, 120
        %v1148 = vpop.permute.xlu0 %1147
        %1149 = vrot.lane.b32.xlu0 %v346, 120
        %v1150 = vpop.permute.xlu0 %1149
        %1151 = vrot.lane.b32.xlu0 %v350, 120
        %v1152 = vpop.permute.xlu0 %1151
        %1153 = vrot.lane.b32.xlu0 %v347, 120
        %v1154 = vpop.permute.xlu0 %1153
        %1155 = vrot.lane.b32.xlu0 %v351, 120
        %v1156 = vpop.permute.xlu0 %1155
        %vm1157 = vcmp.lt.s32.totalorder %v369, 120
        %v1158 = vsel %vm1157, %v1150, %v1154
        %v1159 = vsel %vm1157, %v1152, %v1156
        %v1160 = vsel %vm1157, %v1146, %v1150
        %v1161 = vsel %vm1157, %v1148, %v1152
        %v1162 = vsel %vm1157, %v1142, %v1146
        %v1163 = vsel %vm1157, %v1144, %v1148
        %v1164 = vsel %vm1157, %v1154, %v1142
        %v1165 = vsel %vm1157, %v1156, %v1144
        %s1166 = scalar_lea.vmem [#allocation6], 64
        %v1167 = vld [vmem:[%s1166] ss:$8 sm:$0xf]
        %v1169 = vperm.slane %v1167, 0
        %v1170 = vperm.slane %v1167, 1
        %v1171 = vperm.slane %v1167, 2
        %v1172 = vperm.slane %v1167, 3
        %v1177 = vmul.f32 %v1162, %v1169
        %v1178 = vmul.f32 %v1160, %v1170
        %v1179 = vmul.f32 %v1158, %v1171
        %v1180 = vmul.f32 %v1164, %v1172
        %v1181 = vmul.f32 %v1163, %v1169
        %v1182 = vmul.f32 %v1161, %v1170
        %v1183 = vmul.f32 %v1159, %v1171
        %v1184 = vmul.f32 %v1165, %v1172
        %v1185 = vpack.c.bf16 %v1178, %v1177
        %v1186 = vpack.c.bf16 %v1180, %v1179
        %v1187 = vpack.c.bf16 %v1182, %v1181
        %v1188 = vpack.c.bf16 %v1184, %v1183
        %1189 = vst [vmem:[#allocation2 + $0x200] sm:$0xff] %v1185
        %1190 = vst [vmem:[#allocation2 + $0x208] sm:$0xff] %v1186
        %1191 = vst [vmem:[#allocation2 + $0x210] sm:$0xff] %v1187
        %1192 = vst [vmem:[#allocation2 + $0x218] sm:$0xff] %v1188
        %1193 = vrot.lane.b32.xlu0 %v344, 119
        %v1194 = vpop.permute.xlu0 %1193
        %1195 = vrot.lane.b32.xlu0 %v348, 119
        %v1196 = vpop.permute.xlu0 %1195
        %1197 = vrot.lane.b32.xlu0 %v345, 119
        %v1198 = vpop.permute.xlu0 %1197
        %1199 = vrot.lane.b32.xlu0 %v349, 119
        %v1200 = vpop.permute.xlu0 %1199
        %1201 = vrot.lane.b32.xlu0 %v346, 119
        %v1202 = vpop.permute.xlu0 %1201
        %1203 = vrot.lane.b32.xlu0 %v350, 119
        %v1204 = vpop.permute.xlu0 %1203
        %1205 = vrot.lane.b32.xlu0 %v347, 119
        %v1206 = vpop.permute.xlu0 %1205
        %1207 = vrot.lane.b32.xlu0 %v351, 119
        %v1208 = vpop.permute.xlu0 %1207
        %vm1209 = vcmp.lt.s32.totalorder %v369, 119
        %v1210 = vsel %vm1209, %v1202, %v1206
        %v1211 = vsel %vm1209, %v1204, %v1208
        %v1212 = vsel %vm1209, %v1198, %v1202
        %v1213 = vsel %vm1209, %v1200, %v1204
        %v1214 = vsel %vm1209, %v1194, %v1198
        %v1215 = vsel %vm1209, %v1196, %v1200
        %v1216 = vsel %vm1209, %v1206, %v1194
        %v1217 = vsel %vm1209, %v1208, %v1196
        %s1218 = scalar_lea.vmem [#allocation6], 65
        %v1219 = vld [vmem:[%s1218] ss:$8 sm:$0xf]
        %v1221 = vperm.slane %v1219, 0
        %v1222 = vperm.slane %v1219, 1
        %v1223 = vperm.slane %v1219, 2
        %v1224 = vperm.slane %v1219, 3
        %v1229 = vmul.f32 %v1214, %v1221
        %v1230 = vmul.f32 %v1212, %v1222
        %v1231 = vmul.f32 %v1210, %v1223
        %v1232 = vmul.f32 %v1216, %v1224
        %v1233 = vmul.f32 %v1215, %v1221
        %v1234 = vmul.f32 %v1213, %v1222
        %v1235 = vmul.f32 %v1211, %v1223
        %v1236 = vmul.f32 %v1217, %v1224
        %v1237 = vpack.c.bf16 %v1230, %v1229
        %v1238 = vpack.c.bf16 %v1232, %v1231
        %v1239 = vpack.c.bf16 %v1234, %v1233
        %v1240 = vpack.c.bf16 %v1236, %v1235
        %1241 = vst [vmem:[#allocation2 + $0x220] sm:$0xff] %v1237
        %1242 = vst [vmem:[#allocation2 + $0x228] sm:$0xff] %v1238
        %1243 = vst [vmem:[#allocation2 + $0x230] sm:$0xff] %v1239
        %1244 = vst [vmem:[#allocation2 + $0x238] sm:$0xff] %v1240
        %s1245 = scalar_lea.vmem [#allocation6], 66
        %v1246 = vld [vmem:[%s1245] ss:$8 sm:$0xf]
        %v1248 = vperm.slane %v1246, 0
        %v1249 = vperm.slane %v1246, 1
        %v1250 = vperm.slane %v1246, 2
        %v1251 = vperm.slane %v1246, 3
        %v1256 = vmul.f32 %v375, %v1248
        %v1257 = vmul.f32 %v373, %v1249
        %v1258 = vmul.f32 %v371, %v1250
        %v1259 = vmul.f32 %v377, %v1251
        %v1260 = vmul.f32 %v376, %v1248
        %v1261 = vmul.f32 %v374, %v1249
        %v1262 = vmul.f32 %v372, %v1250
        %v1263 = vmul.f32 %v378, %v1251
        %v1264 = vpack.c.bf16 %v1257, %v1256
        %v1265 = vpack.c.bf16 %v1259, %v1258
        %v1266 = vpack.c.bf16 %v1261, %v1260
        %v1267 = vpack.c.bf16 %v1263, %v1262
        %1268 = vst [vmem:[#allocation2 + $0x240] sm:$0xff] %v1264
        %1269 = vst [vmem:[#allocation2 + $0x248] sm:$0xff] %v1265
        %1270 = vst [vmem:[#allocation2 + $0x250] sm:$0xff] %v1266
        %1271 = vst [vmem:[#allocation2 + $0x258] sm:$0xff] %v1267
        %s1272 = scalar_lea.vmem [#allocation6], 67
        %v1273 = vld [vmem:[%s1272] ss:$8 sm:$0xf]
        %v1275 = vperm.slane %v1273, 0
        %v1276 = vperm.slane %v1273, 1
        %v1277 = vperm.slane %v1273, 2
        %v1278 = vperm.slane %v1273, 3
        %v1283 = vmul.f32 %v426, %v1275
        %v1284 = vmul.f32 %v424, %v1276
        %v1285 = vmul.f32 %v422, %v1277
        %v1286 = vmul.f32 %v428, %v1278
        %v1287 = vmul.f32 %v427, %v1275
        %v1288 = vmul.f32 %v425, %v1276
        %v1289 = vmul.f32 %v423, %v1277
        %v1290 = vmul.f32 %v429, %v1278
        %v1291 = vpack.c.bf16 %v1284, %v1283
        %v1292 = vpack.c.bf16 %v1286, %v1285
        %v1293 = vpack.c.bf16 %v1288, %v1287
        %v1294 = vpack.c.bf16 %v1290, %v1289
        %1295 = vst [vmem:[#allocation2 + $0x260] sm:$0xff] %v1291
        %1296 = vst [vmem:[#allocation2 + $0x268] sm:$0xff] %v1292
        %1297 = vst [vmem:[#allocation2 + $0x270] sm:$0xff] %v1293
        %1298 = vst [vmem:[#allocation2 + $0x278] sm:$0xff] %v1294
        %s1299 = scalar_lea.vmem [#allocation6], 68
        %v1300 = vld [vmem:[%s1299] ss:$8 sm:$0xf]
        %v1302 = vperm.slane %v1300, 0
        %v1303 = vperm.slane %v1300, 1
        %v1304 = vperm.slane %v1300, 2
        %v1305 = vperm.slane %v1300, 3
        %v1310 = vmul.f32 %v478, %v1302
        %v1311 = vmul.f32 %v476, %v1303
        %v1312 = vmul.f32 %v474, %v1304
        %v1313 = vmul.f32 %v480, %v1305
        %v1314 = vmul.f32 %v479, %v1302
        %v1315 = vmul.f32 %v477, %v1303
        %v1316 = vmul.f32 %v475, %v1304
        %v1317 = vmul.f32 %v481, %v1305
        %v1318 = vpack.c.bf16 %v1311, %v1310
        %v1319 = vpack.c.bf16 %v1313, %v1312
        %v1320 = vpack.c.bf16 %v1315, %v1314
        %v1321 = vpack.c.bf16 %v1317, %v1316
        %1322 = vst [vmem:[#allocation2 + $0x280] sm:$0xff] %v1318
        %1323 = vst [vmem:[#allocation2 + $0x288] sm:$0xff] %v1319
        %1324 = vst [vmem:[#allocation2 + $0x290] sm:$0xff] %v1320
        %1325 = vst [vmem:[#allocation2 + $0x298] sm:$0xff] %v1321
        %s1326 = scalar_lea.vmem [#allocation6], 69
        %v1327 = vld [vmem:[%s1326] ss:$8 sm:$0xf]
        %v1329 = vperm.slane %v1327, 0
        %v1330 = vperm.slane %v1327, 1
        %v1331 = vperm.slane %v1327, 2
        %v1332 = vperm.slane %v1327, 3
        %v1337 = vmul.f32 %v530, %v1329
        %v1338 = vmul.f32 %v528, %v1330
        %v1339 = vmul.f32 %v526, %v1331
        %v1340 = vmul.f32 %v532, %v1332
        %v1341 = vmul.f32 %v531, %v1329
        %v1342 = vmul.f32 %v529, %v1330
        %v1343 = vmul.f32 %v527, %v1331
        %v1344 = vmul.f32 %v533, %v1332
        %v1345 = vpack.c.bf16 %v1338, %v1337
        %v1346 = vpack.c.bf16 %v1340, %v1339
        %v1347 = vpack.c.bf16 %v1342, %v1341
        %v1348 = vpack.c.bf16 %v1344, %v1343
        %1349 = vst [vmem:[#allocation2 + $0x2a0] sm:$0xff] %v1345
        %1350 = vst [vmem:[#allocation2 + $0x2a8] sm:$0xff] %v1346
        %1351 = vst [vmem:[#allocation2 + $0x2b0] sm:$0xff] %v1347
        %1352 = vst [vmem:[#allocation2 + $0x2b8] sm:$0xff] %v1348
        %s1353 = scalar_lea.vmem [#allocation6], 70
        %v1354 = vld [vmem:[%s1353] ss:$8 sm:$0xf]
        %v1356 = vperm.slane %v1354, 0
        %v1357 = vperm.slane %v1354, 1
        %v1358 = vperm.slane %v1354, 2
        %v1359 = vperm.slane %v1354, 3
        %v1364 = vmul.f32 %v582, %v1356
        %v1365 = vmul.f32 %v580, %v1357
        %v1366 = vmul.f32 %v578, %v1358
        %v1367 = vmul.f32 %v584, %v1359
        %v1368 = vmul.f32 %v583, %v1356
        %v1369 = vmul.f32 %v581, %v1357
        %v1370 = vmul.f32 %v579, %v1358
        %v1371 = vmul.f32 %v585, %v1359
        %v1372 = vpack.c.bf16 %v1365, %v1364
        %v1373 = vpack.c.bf16 %v1367, %v1366
        %v1374 = vpack.c.bf16 %v1369, %v1368
        %v1375 = vpack.c.bf16 %v1371, %v1370
        %1376 = vst [vmem:[#allocation2 + $0x2c0] sm:$0xff] %v1372
        %1377 = vst [vmem:[#allocation2 + $0x2c8] sm:$0xff] %v1373
        %1378 = vst [vmem:[#allocation2 + $0x2d0] sm:$0xff] %v1374
        %1379 = vst [vmem:[#allocation2 + $0x2d8] sm:$0xff] %v1375
        %s1380 = scalar_lea.vmem [#allocation6], 71
        %v1381 = vld [vmem:[%s1380] ss:$8 sm:$0xf]
        %v1383 = vperm.slane %v1381, 0
        %v1384 = vperm.slane %v1381, 1
        %v1385 = vperm.slane %v1381, 2
        %v1386 = vperm.slane %v1381, 3
        %v1391 = vmul.f32 %v634, %v1383
        %v1392 = vmul.f32 %v632, %v1384
        %v1393 = vmul.f32 %v630, %v1385
        %v1394 = vmul.f32 %v636, %v1386
        %v1395 = vmul.f32 %v635, %v1383
        %v1396 = vmul.f32 %v633, %v1384
        %v1397 = vmul.f32 %v631, %v1385
        %v1398 = vmul.f32 %v637, %v1386
        %v1399 = vpack.c.bf16 %v1392, %v1391
        %v1400 = vpack.c.bf16 %v1394, %v1393
        %v1401 = vpack.c.bf16 %v1396, %v1395
        %v1402 = vpack.c.bf16 %v1398, %v1397
        %1403 = vst [vmem:[#allocation2 + $0x2e0] sm:$0xff] %v1399
        %1404 = vst [vmem:[#allocation2 + $0x2e8] sm:$0xff] %v1400
        %1405 = vst [vmem:[#allocation2 + $0x2f0] sm:$0xff] %v1401
        %1406 = vst [vmem:[#allocation2 + $0x2f8] sm:$0xff] %v1402
        %s1407 = scalar_lea.vmem [#allocation6], 96
        %v1408 = vld [vmem:[%s1407] ss:$8 sm:$0xf]
        %v1410 = vperm.slane %v1408, 0
        %v1411 = vperm.slane %v1408, 1
        %v1412 = vperm.slane %v1408, 2
        %v1413 = vperm.slane %v1408, 3
        %v1418 = vmul.f32 %v686, %v1410
        %v1419 = vmul.f32 %v684, %v1411
        %v1420 = vmul.f32 %v682, %v1412
        %v1421 = vmul.f32 %v688, %v1413
        %v1422 = vmul.f32 %v687, %v1410
        %v1423 = vmul.f32 %v685, %v1411
        %v1424 = vmul.f32 %v683, %v1412
        %v1425 = vmul.f32 %v689, %v1413
        %v1426 = vpack.c.bf16 %v1419, %v1418
        %v1427 = vpack.c.bf16 %v1421, %v1420
        %v1428 = vpack.c.bf16 %v1423, %v1422
        %v1429 = vpack.c.bf16 %v1425, %v1424
        %1430 = vst [vmem:[#allocation2 + $0x300] sm:$0xff] %v1426
        %1431 = vst [vmem:[#allocation2 + $0x308] sm:$0xff] %v1427
        %1432 = vst [vmem:[#allocation2 + $0x310] sm:$0xff] %v1428
        %1433 = vst [vmem:[#allocation2 + $0x318] sm:$0xff] %v1429
        %s1434 = scalar_lea.vmem [#allocation6], 97
        %v1435 = vld [vmem:[%s1434] ss:$8 sm:$0xf]
        %v1437 = vperm.slane %v1435, 0
        %v1438 = vperm.slane %v1435, 1
        %v1439 = vperm.slane %v1435, 2
        %v1440 = vperm.slane %v1435, 3
        %v1445 = vmul.f32 %v738, %v1437
        %v1446 = vmul.f32 %v736, %v1438
        %v1447 = vmul.f32 %v734, %v1439
        %v1448 = vmul.f32 %v740, %v1440
        %v1449 = vmul.f32 %v739, %v1437
        %v1450 = vmul.f32 %v737, %v1438
        %v1451 = vmul.f32 %v735, %v1439
        %v1452 = vmul.f32 %v741, %v1440
        %v1453 = vpack.c.bf16 %v1446, %v1445
        %v1454 = vpack.c.bf16 %v1448, %v1447
        %v1455 = vpack.c.bf16 %v1450, %v1449
        %v1456 = vpack.c.bf16 %v1452, %v1451
        %1457 = vst [vmem:[#allocation2 + $0x320] sm:$0xff] %v1453
        %1458 = vst [vmem:[#allocation2 + $0x328] sm:$0xff] %v1454
        %1459 = vst [vmem:[#allocation2 + $0x330] sm:$0xff] %v1455
        %1460 = vst [vmem:[#allocation2 + $0x338] sm:$0xff] %v1456
        %s1461 = scalar_lea.vmem [#allocation6], 98
        %v1462 = vld [vmem:[%s1461] ss:$8 sm:$0xf]
        %v1464 = vperm.slane %v1462, 0
        %v1465 = vperm.slane %v1462, 1
        %v1466 = vperm.slane %v1462, 2
        %v1467 = vperm.slane %v1462, 3
        %v1472 = vmul.f32 %v790, %v1464
        %v1473 = vmul.f32 %v788, %v1465
        %v1474 = vmul.f32 %v786, %v1466
        %v1475 = vmul.f32 %v792, %v1467
        %v1476 = vmul.f32 %v791, %v1464
        %v1477 = vmul.f32 %v789, %v1465
        %v1478 = vmul.f32 %v787, %v1466
        %v1479 = vmul.f32 %v793, %v1467
        %v1480 = vpack.c.bf16 %v1473, %v1472
        %v1481 = vpack.c.bf16 %v1475, %v1474
        %v1482 = vpack.c.bf16 %v1477, %v1476
        %v1483 = vpack.c.bf16 %v1479, %v1478
        %1484 = vst [vmem:[#allocation2 + $0x340] sm:$0xff] %v1480
        %1485 = vst [vmem:[#allocation2 + $0x348] sm:$0xff] %v1481
        %1486 = vst [vmem:[#allocation2 + $0x350] sm:$0xff] %v1482
        %1487 = vst [vmem:[#allocation2 + $0x358] sm:$0xff] %v1483
        %v1488 = vld [vmem:[#allocation2] sm:$0xff]
        %v1489 = vld [vmem:[#allocation2 + $0x8] sm:$0xff]
        %v1490 = vld [vmem:[#allocation2 + $0x10] sm:$0xff]
        %v1491 = vld [vmem:[#allocation2 + $0x18] sm:$0xff]
        %v1492 = vld [vmem:[#allocation2 + $0x20] sm:$0xff]
        %v1493 = vld [vmem:[#allocation2 + $0x28] sm:$0xff]
        %v1494 = vld [vmem:[#allocation2 + $0x30] sm:$0xff]
        %v1495 = vld [vmem:[#allocation2 + $0x38] sm:$0xff]
        %v1496 = vld [vmem:[#allocation2 + $0x40] sm:$0xff]
        %v1497 = vld [vmem:[#allocation2 + $0x48] sm:$0xff]
        %v1498 = vld [vmem:[#allocation2 + $0x50] sm:$0xff]
        %v1499 = vld [vmem:[#allocation2 + $0x58] sm:$0xff]
        %v1500 = vld [vmem:[#allocation2 + $0x60] sm:$0xff]
        %v1501 = vld [vmem:[#allocation2 + $0x68] sm:$0xff]
        %v1502 = vld [vmem:[#allocation2 + $0x70] sm:$0xff]
        %v1503 = vld [vmem:[#allocation2 + $0x78] sm:$0xff]
        %v1504 = vld [vmem:[#allocation2 + $0x80] sm:$0xff]
        %v1505 = vld [vmem:[#allocation2 + $0x88] sm:$0xff]
        %v1506 = vld [vmem:[#allocation2 + $0x90] sm:$0xff]
        %v1507 = vld [vmem:[#allocation2 + $0x98] sm:$0xff]
        %v1508 = vld [vmem:[#allocation2 + $0xa0] sm:$0xff]
        %v1509 = vld [vmem:[#allocation2 + $0xa8] sm:$0xff]
        %v1510 = vld [vmem:[#allocation2 + $0xb0] sm:$0xff]
        %v1511 = vld [vmem:[#allocation2 + $0xb8] sm:$0xff]
        %v1512 = vld [vmem:[#allocation2 + $0xc0] sm:$0xff]
        %v1513 = vld [vmem:[#allocation2 + $0xc8] sm:$0xff]
        %v1514 = vld [vmem:[#allocation2 + $0xd0] sm:$0xff]
        %v1515 = vld [vmem:[#allocation2 + $0xd8] sm:$0xff]
        %v1516 = vld [vmem:[#allocation2 + $0xe0] sm:$0xff]
        %v1517 = vld [vmem:[#allocation2 + $0xe8] sm:$0xff]
        %v1518 = vld [vmem:[#allocation2 + $0xf0] sm:$0xff]
        %v1519 = vld [vmem:[#allocation2 + $0xf8] sm:$0xff]
        %v1520 = vld [vmem:[#allocation2 + $0x100] sm:$0xff]
        %v1521 = vld [vmem:[#allocation2 + $0x108] sm:$0xff]
        %v1522 = vld [vmem:[#allocation2 + $0x110] sm:$0xff]
        %v1523 = vld [vmem:[#allocation2 + $0x118] sm:$0xff]
        %v1524 = vld [vmem:[#allocation2 + $0x120] sm:$0xff]
        %v1525 = vld [vmem:[#allocation2 + $0x128] sm:$0xff]
        %v1526 = vld [vmem:[#allocation2 + $0x130] sm:$0xff]
        %v1527 = vld [vmem:[#allocation2 + $0x138] sm:$0xff]
        %v1528 = vld [vmem:[#allocation2 + $0x140] sm:$0xff]
        %v1529 = vld [vmem:[#allocation2 + $0x148] sm:$0xff]
        %v1530 = vld [vmem:[#allocation2 + $0x150] sm:$0xff]
        %v1531 = vld [vmem:[#allocation2 + $0x158] sm:$0xff]
        %v1532 = vld [vmem:[#allocation2 + $0x160] sm:$0xff]
        %v1533 = vld [vmem:[#allocation2 + $0x168] sm:$0xff]
        %v1534 = vld [vmem:[#allocation2 + $0x170] sm:$0xff]
        %v1535 = vld [vmem:[#allocation2 + $0x178] sm:$0xff]
        %v1536 = vld [vmem:[#allocation2 + $0x180] sm:$0xff]
        %v1537 = vld [vmem:[#allocation2 + $0x188] sm:$0xff]
        %v1538 = vld [vmem:[#allocation2 + $0x190] sm:$0xff]
        %v1539 = vld [vmem:[#allocation2 + $0x198] sm:$0xff]
        %v1540 = vld [vmem:[#allocation2 + $0x1a0] sm:$0xff]
        %v1541 = vld [vmem:[#allocation2 + $0x1a8] sm:$0xff]
        %v1542 = vld [vmem:[#allocation2 + $0x1b0] sm:$0xff]
        %v1543 = vld [vmem:[#allocation2 + $0x1b8] sm:$0xff]
        %v1544 = vld [vmem:[#allocation2 + $0x1c0] sm:$0xff]
        %v1545 = vld [vmem:[#allocation2 + $0x1c8] sm:$0xff]
        %v1546 = vld [vmem:[#allocation2 + $0x1d0] sm:$0xff]
        %v1547 = vld [vmem:[#allocation2 + $0x1d8] sm:$0xff]
        %v1548 = vld [vmem:[#allocation2 + $0x1e0] sm:$0xff]
        %v1549 = vld [vmem:[#allocation2 + $0x1e8] sm:$0xff]
        %v1550 = vld [vmem:[#allocation2 + $0x1f0] sm:$0xff]
        %v1551 = vld [vmem:[#allocation2 + $0x1f8] sm:$0xff]
        %v1552 = vld [vmem:[#allocation2 + $0x200] sm:$0xff]
        %v1553 = vld [vmem:[#allocation2 + $0x208] sm:$0xff]
        %v1554 = vld [vmem:[#allocation2 + $0x210] sm:$0xff]
        %v1555 = vld [vmem:[#allocation2 + $0x218] sm:$0xff]
        %v1556 = vld [vmem:[#allocation2 + $0x220] sm:$0xff]
        %v1557 = vld [vmem:[#allocation2 + $0x228] sm:$0xff]
        %v1558 = vld [vmem:[#allocation2 + $0x230] sm:$0xff]
        %v1559 = vld [vmem:[#allocation2 + $0x238] sm:$0xff]
        %v1560 = vld [vmem:[#allocation2 + $0x240] sm:$0xff]
        %v1561 = vld [vmem:[#allocation2 + $0x248] sm:$0xff]
        %v1562 = vld [vmem:[#allocation2 + $0x250] sm:$0xff]
        %v1563 = vld [vmem:[#allocation2 + $0x258] sm:$0xff]
        %v1564 = vld [vmem:[#allocation2 + $0x260] sm:$0xff]
        %v1565 = vld [vmem:[#allocation2 + $0x268] sm:$0xff]
        %v1566 = vld [vmem:[#allocation2 + $0x270] sm:$0xff]
        %v1567 = vld [vmem:[#allocation2 + $0x278] sm:$0xff]
        %v1568 = vld [vmem:[#allocation2 + $0x280] sm:$0xff]
        %v1569 = vld [vmem:[#allocation2 + $0x288] sm:$0xff]
        %v1570 = vld [vmem:[#allocation2 + $0x290] sm:$0xff]
        %v1571 = vld [vmem:[#allocation2 + $0x298] sm:$0xff]
        %v1572 = vld [vmem:[#allocation2 + $0x2a0] sm:$0xff]
        %v1573 = vld [vmem:[#allocation2 + $0x2a8] sm:$0xff]
        %v1574 = vld [vmem:[#allocation2 + $0x2b0] sm:$0xff]
        %v1575 = vld [vmem:[#allocation2 + $0x2b8] sm:$0xff]
        %v1576 = vld [vmem:[#allocation2 + $0x2c0] sm:$0xff]
        %v1577 = vld [vmem:[#allocation2 + $0x2c8] sm:$0xff]
        %v1578 = vld [vmem:[#allocation2 + $0x2d0] sm:$0xff]
        %v1579 = vld [vmem:[#allocation2 + $0x2d8] sm:$0xff]
        %v1580 = vld [vmem:[#allocation2 + $0x2e0] sm:$0xff]
        %v1581 = vld [vmem:[#allocation2 + $0x2e8] sm:$0xff]
        %v1582 = vld [vmem:[#allocation2 + $0x2f0] sm:$0xff]
        %v1583 = vld [vmem:[#allocation2 + $0x2f8] sm:$0xff]
        %v1584 = vld [vmem:[#allocation2 + $0x300] sm:$0xff]
        %v1585 = vld [vmem:[#allocation2 + $0x308] sm:$0xff]
        %v1586 = vld [vmem:[#allocation2 + $0x310] sm:$0xff]
        %v1587 = vld [vmem:[#allocation2 + $0x318] sm:$0xff]
        %v1588 = vld [vmem:[#allocation2 + $0x320] sm:$0xff]
        %v1589 = vld [vmem:[#allocation2 + $0x328] sm:$0xff]
        %v1590 = vld [vmem:[#allocation2 + $0x330] sm:$0xff]
        %v1591 = vld [vmem:[#allocation2 + $0x338] sm:$0xff]
        %v1592 = vld [vmem:[#allocation2 + $0x340] sm:$0xff]
        %v1593 = vld [vmem:[#allocation2 + $0x348] sm:$0xff]
        %v1594 = vld [vmem:[#allocation2 + $0x350] sm:$0xff]
        %v1595 = vld [vmem:[#allocation2 + $0x358] sm:$0xff]
        %v1596 = vld [vmem:[%s2] sm:$0xff]
        %v1597 = vld [vmem:[%s2 + $0x8] sm:$0xff]
        %v1598 = vld [vmem:[%s2 + $0x10] sm:$0xff]
        %v1599 = vld [vmem:[%s2 + $0x18] sm:$0xff]
        %v1604 = vunpack.c.l.b16 %v1596
        %v1605 = vunpack.c.h.b16 %v1596
        %v1606 = vunpack.c.l.b16 %v1597
        %v1607 = vunpack.c.h.b16 %v1597
        %v1608 = vunpack.c.l.b16 %v1598
        %v1609 = vunpack.c.h.b16 %v1598
        %v1610 = vunpack.c.l.b16 %v1599
        %v1611 = vunpack.c.h.b16 %v1599
        %v1612 = vpack.c.b16 %v1608, %v1604
        %v1613 = vpack.c.b16 %v1609, %v1605
        %v1614 = vpack.c.b16 %v1610, %v1606
        %v1615 = vpack.c.b16 %v1611, %v1607
        %v1727 = vunpack.c.l.b16 %v1488
        %v1728 = vunpack.c.h.b16 %v1488
        %v1729 = vunpack.c.l.b16 %v1489
        %v1730 = vunpack.c.h.b16 %v1489
        %v1731 = vunpack.c.l.b16 %v1490
        %v1732 = vunpack.c.h.b16 %v1490
        %v1733 = vunpack.c.l.b16 %v1491
        %v1734 = vunpack.c.h.b16 %v1491
        %v1735 = vunpack.c.l.b16 %v1492
        %v1736 = vunpack.c.h.b16 %v1492
        %v1737 = vunpack.c.l.b16 %v1493
        %v1738 = vunpack.c.h.b16 %v1493
        %v1739 = vunpack.c.l.b16 %v1494
        %v1740 = vunpack.c.h.b16 %v1494
        %v1741 = vunpack.c.l.b16 %v1495
        %v1742 = vunpack.c.h.b16 %v1495
        %v1743 = vunpack.c.l.b16 %v1496
        %v1744 = vunpack.c.h.b16 %v1496
        %v1745 = vunpack.c.l.b16 %v1497
        %v1746 = vunpack.c.h.b16 %v1497
        %v1747 = vunpack.c.l.b16 %v1498
        %v1748 = vunpack.c.h.b16 %v1498
        %v1749 = vunpack.c.l.b16 %v1499
        %v1750 = vunpack.c.h.b16 %v1499
        %v1751 = vunpack.c.l.b16 %v1500
        %v1752 = vunpack.c.h.b16 %v1500
        %v1753 = vunpack.c.l.b16 %v1501
        %v1754 = vunpack.c.h.b16 %v1501
        %v1755 = vunpack.c.l.b16 %v1502
        %v1756 = vunpack.c.h.b16 %v1502
        %v1757 = vunpack.c.l.b16 %v1503
        %v1758 = vunpack.c.h.b16 %v1503
        %v1759 = vunpack.c.l.b16 %v1504
        %v1760 = vunpack.c.h.b16 %v1504
        %v1761 = vunpack.c.l.b16 %v1505
        %v1762 = vunpack.c.h.b16 %v1505
        %v1763 = vunpack.c.l.b16 %v1506
        %v1764 = vunpack.c.h.b16 %v1506
        %v1765 = vunpack.c.l.b16 %v1507
        %v1766 = vunpack.c.h.b16 %v1507
        %v1767 = vunpack.c.l.b16 %v1508
        %v1768 = vunpack.c.h.b16 %v1508
        %v1769 = vunpack.c.l.b16 %v1509
        %v1770 = vunpack.c.h.b16 %v1509
        %v1771 = vunpack.c.l.b16 %v1510
        %v1772 = vunpack.c.h.b16 %v1510
        %v1773 = vunpack.c.l.b16 %v1511
        %v1774 = vunpack.c.h.b16 %v1511
        %v1775 = vunpack.c.l.b16 %v1512
        %v1776 = vunpack.c.h.b16 %v1512
        %v1777 = vunpack.c.l.b16 %v1513
        %v1778 = vunpack.c.h.b16 %v1513
        %v1779 = vunpack.c.l.b16 %v1514
        %v1780 = vunpack.c.h.b16 %v1514
        %v1781 = vunpack.c.l.b16 %v1515
        %v1782 = vunpack.c.h.b16 %v1515
        %v1783 = vunpack.c.l.b16 %v1516
        %v1784 = vunpack.c.h.b16 %v1516
        %v1785 = vunpack.c.l.b16 %v1517
        %v1786 = vunpack.c.h.b16 %v1517
        %v1787 = vunpack.c.l.b16 %v1518
        %v1788 = vunpack.c.h.b16 %v1518
        %v1789 = vunpack.c.l.b16 %v1519
        %v1790 = vunpack.c.h.b16 %v1519
        %v1791 = vunpack.c.l.b16 %v1520
        %v1792 = vunpack.c.h.b16 %v1520
        %v1793 = vunpack.c.l.b16 %v1521
        %v1794 = vunpack.c.h.b16 %v1521
        %v1795 = vunpack.c.l.b16 %v1522
        %v1796 = vunpack.c.h.b16 %v1522
        %v1797 = vunpack.c.l.b16 %v1523
        %v1798 = vunpack.c.h.b16 %v1523
        %v1799 = vunpack.c.l.b16 %v1524
        %v1800 = vunpack.c.h.b16 %v1524
        %v1801 = vunpack.c.l.b16 %v1525
        %v1802 = vunpack.c.h.b16 %v1525
        %v1803 = vunpack.c.l.b16 %v1526
        %v1804 = vunpack.c.h.b16 %v1526
        %v1805 = vunpack.c.l.b16 %v1527
        %v1806 = vunpack.c.h.b16 %v1527
        %v1807 = vunpack.c.l.b16 %v1528
        %v1808 = vunpack.c.h.b16 %v1528
        %v1809 = vunpack.c.l.b16 %v1529
        %v1810 = vunpack.c.h.b16 %v1529
        %v1811 = vunpack.c.l.b16 %v1530
        %v1812 = vunpack.c.h.b16 %v1530
        %v1813 = vunpack.c.l.b16 %v1531
        %v1814 = vunpack.c.h.b16 %v1531
        %v1815 = vunpack.c.l.b16 %v1532
        %v1816 = vunpack.c.h.b16 %v1532
        %v1817 = vunpack.c.l.b16 %v1533
        %v1818 = vunpack.c.h.b16 %v1533
        %v1819 = vunpack.c.l.b16 %v1534
        %v1820 = vunpack.c.h.b16 %v1534
        %v1821 = vunpack.c.l.b16 %v1535
        %v1822 = vunpack.c.h.b16 %v1535
        %v1823 = vunpack.c.l.b16 %v1536
        %v1824 = vunpack.c.h.b16 %v1536
        %v1825 = vunpack.c.l.b16 %v1537
        %v1826 = vunpack.c.h.b16 %v1537
        %v1827 = vunpack.c.l.b16 %v1538
        %v1828 = vunpack.c.h.b16 %v1538
        %v1829 = vunpack.c.l.b16 %v1539
        %v1830 = vunpack.c.h.b16 %v1539
        %v1831 = vunpack.c.l.b16 %v1540
        %v1832 = vunpack.c.h.b16 %v1540
        %v1833 = vunpack.c.l.b16 %v1541
        %v1834 = vunpack.c.h.b16 %v1541
        %v1835 = vunpack.c.l.b16 %v1542
        %v1836 = vunpack.c.h.b16 %v1542
        %v1837 = vunpack.c.l.b16 %v1543
        %v1838 = vunpack.c.h.b16 %v1543
        %v1839 = vunpack.c.l.b16 %v1544
        %v1840 = vunpack.c.h.b16 %v1544
        %v1841 = vunpack.c.l.b16 %v1545
        %v1842 = vunpack.c.h.b16 %v1545
        %v1843 = vunpack.c.l.b16 %v1546
        %v1844 = vunpack.c.h.b16 %v1546
        %v1845 = vunpack.c.l.b16 %v1547
        %v1846 = vunpack.c.h.b16 %v1547
        %v1847 = vunpack.c.l.b16 %v1548
        %v1848 = vunpack.c.h.b16 %v1548
        %v1849 = vunpack.c.l.b16 %v1549
        %v1850 = vunpack.c.h.b16 %v1549
        %v1851 = vunpack.c.l.b16 %v1550
        %v1852 = vunpack.c.h.b16 %v1550
        %v1853 = vunpack.c.l.b16 %v1551
        %v1854 = vunpack.c.h.b16 %v1551
        %v1855 = vunpack.c.l.b16 %v1552
        %v1856 = vunpack.c.h.b16 %v1552
        %v1857 = vunpack.c.l.b16 %v1553
        %v1858 = vunpack.c.h.b16 %v1553
        %v1859 = vunpack.c.l.b16 %v1554
        %v1860 = vunpack.c.h.b16 %v1554
        %v1861 = vunpack.c.l.b16 %v1555
        %v1862 = vunpack.c.h.b16 %v1555
        %v1863 = vunpack.c.l.b16 %v1556
        %v1864 = vunpack.c.h.b16 %v1556
        %v1865 = vunpack.c.l.b16 %v1557
        %v1866 = vunpack.c.h.b16 %v1557
        %v1867 = vunpack.c.l.b16 %v1558
        %v1868 = vunpack.c.h.b16 %v1558
        %v1869 = vunpack.c.l.b16 %v1559
        %v1870 = vunpack.c.h.b16 %v1559
        %v1871 = vunpack.c.l.b16 %v1560
        %v1872 = vunpack.c.h.b16 %v1560
        %v1873 = vunpack.c.l.b16 %v1561
        %v1874 = vunpack.c.h.b16 %v1561
        %v1875 = vunpack.c.l.b16 %v1562
        %v1876 = vunpack.c.h.b16 %v1562
        %v1877 = vunpack.c.l.b16 %v1563
        %v1878 = vunpack.c.h.b16 %v1563
        %v1879 = vunpack.c.l.b16 %v1564
        %v1880 = vunpack.c.h.b16 %v1564
        %v1881 = vunpack.c.l.b16 %v1565
        %v1882 = vunpack.c.h.b16 %v1565
        %v1883 = vunpack.c.l.b16 %v1566
        %v1884 = vunpack.c.h.b16 %v1566
        %v1885 = vunpack.c.l.b16 %v1567
        %v1886 = vunpack.c.h.b16 %v1567
        %v1887 = vunpack.c.l.b16 %v1568
        %v1888 = vunpack.c.h.b16 %v1568
        %v1889 = vunpack.c.l.b16 %v1569
        %v1890 = vunpack.c.h.b16 %v1569
        %v1891 = vunpack.c.l.b16 %v1570
        %v1892 = vunpack.c.h.b16 %v1570
        %v1893 = vunpack.c.l.b16 %v1571
        %v1894 = vunpack.c.h.b16 %v1571
        %v1895 = vunpack.c.l.b16 %v1572
        %v1896 = vunpack.c.h.b16 %v1572
        %v1897 = vunpack.c.l.b16 %v1573
        %v1898 = vunpack.c.h.b16 %v1573
        %v1899 = vunpack.c.l.b16 %v1574
        %v1900 = vunpack.c.h.b16 %v1574
        %v1901 = vunpack.c.l.b16 %v1575
        %v1902 = vunpack.c.h.b16 %v1575
        %v1903 = vunpack.c.l.b16 %v1576
        %v1904 = vunpack.c.h.b16 %v1576
        %v1905 = vunpack.c.l.b16 %v1577
        %v1906 = vunpack.c.h.b16 %v1577
        %v1907 = vunpack.c.l.b16 %v1578
        %v1908 = vunpack.c.h.b16 %v1578
        %v1909 = vunpack.c.l.b16 %v1579
        %v1910 = vunpack.c.h.b16 %v1579
        %v1911 = vunpack.c.l.b16 %v1580
        %v1912 = vunpack.c.h.b16 %v1580
        %v1913 = vunpack.c.l.b16 %v1581
        %v1914 = vunpack.c.h.b16 %v1581
        %v1915 = vunpack.c.l.b16 %v1582
        %v1916 = vunpack.c.h.b16 %v1582
        %v1917 = vunpack.c.l.b16 %v1583
        %v1918 = vunpack.c.h.b16 %v1583
        %v1919 = vunpack.c.l.b16 %v1584
        %v1920 = vunpack.c.h.b16 %v1584
        %v1921 = vunpack.c.l.b16 %v1585
        %v1922 = vunpack.c.h.b16 %v1585
        %v1923 = vunpack.c.l.b16 %v1586
        %v1924 = vunpack.c.h.b16 %v1586
        %v1925 = vunpack.c.l.b16 %v1587
        %v1926 = vunpack.c.h.b16 %v1587
        %v1927 = vunpack.c.l.b16 %v1588
        %v1928 = vunpack.c.h.b16 %v1588
        %v1929 = vunpack.c.l.b16 %v1589
        %v1930 = vunpack.c.h.b16 %v1589
        %v1931 = vunpack.c.l.b16 %v1590
        %v1932 = vunpack.c.h.b16 %v1590
        %v1933 = vunpack.c.l.b16 %v1591
        %v1934 = vunpack.c.h.b16 %v1591
        %v1935 = vunpack.c.l.b16 %v1592
        %v1936 = vunpack.c.h.b16 %v1592
        %v1937 = vunpack.c.l.b16 %v1593
        %v1938 = vunpack.c.h.b16 %v1593
        %v1939 = vunpack.c.l.b16 %v1594
        %v1940 = vunpack.c.h.b16 %v1594
        %v1941 = vunpack.c.l.b16 %v1595
        %v1942 = vunpack.c.h.b16 %v1595
        %v1943 = vpack.c.b16 %v1731, %v1727
        %v1944 = vpack.c.b16 %v1732, %v1728
        %v1945 = vpack.c.b16 %v1733, %v1729
        %v1946 = vpack.c.b16 %v1734, %v1730
        %v1947 = vpack.c.b16 %v1739, %v1735
        %v1948 = vpack.c.b16 %v1740, %v1736
        %v1949 = vpack.c.b16 %v1741, %v1737
        %v1950 = vpack.c.b16 %v1742, %v1738
        %v1951 = vpack.c.b16 %v1747, %v1743
        %v1952 = vpack.c.b16 %v1748, %v1744
        %v1953 = vpack.c.b16 %v1749, %v1745
        %v1954 = vpack.c.b16 %v1750, %v1746
        %v1955 = vpack.c.b16 %v1755, %v1751
        %v1956 = vpack.c.b16 %v1756, %v1752
        %v1957 = vpack.c.b16 %v1757, %v1753
        %v1958 = vpack.c.b16 %v1758, %v1754
        %v1959 = vpack.c.b16 %v1763, %v1759
        %v1960 = vpack.c.b16 %v1764, %v1760
        %v1961 = vpack.c.b16 %v1765, %v1761
        %v1962 = vpack.c.b16 %v1766, %v1762
        %v1963 = vpack.c.b16 %v1771, %v1767
        %v1964 = vpack.c.b16 %v1772, %v1768
        %v1965 = vpack.c.b16 %v1773, %v1769
        %v1966 = vpack.c.b16 %v1774, %v1770
        %v1967 = vpack.c.b16 %v1779, %v1775
        %v1968 = vpack.c.b16 %v1780, %v1776
        %v1969 = vpack.c.b16 %v1781, %v1777
        %v1970 = vpack.c.b16 %v1782, %v1778
        %v1971 = vpack.c.b16 %v1787, %v1783
        %v1972 = vpack.c.b16 %v1788, %v1784
        %v1973 = vpack.c.b16 %v1789, %v1785
        %v1974 = vpack.c.b16 %v1790, %v1786
        %v1975 = vpack.c.b16 %v1795, %v1791
        %v1976 = vpack.c.b16 %v1796, %v1792
        %v1977 = vpack.c.b16 %v1797, %v1793
        %v1978 = vpack.c.b16 %v1798, %v1794
        %v1979 = vpack.c.b16 %v1803, %v1799
        %v1980 = vpack.c.b16 %v1804, %v1800
        %v1981 = vpack.c.b16 %v1805, %v1801
        %v1982 = vpack.c.b16 %v1806, %v1802
        %v1983 = vpack.c.b16 %v1811, %v1807
        %v1984 = vpack.c.b16 %v1812, %v1808
        %v1985 = vpack.c.b16 %v1813, %v1809
        %v1986 = vpack.c.b16 %v1814, %v1810
        %v1987 = vpack.c.b16 %v1819, %v1815
        %v1988 = vpack.c.b16 %v1820, %v1816
        %v1989 = vpack.c.b16 %v1821, %v1817
        %v1990 = vpack.c.b16 %v1822, %v1818
        %v1991 = vpack.c.b16 %v1827, %v1823
        %v1992 = vpack.c.b16 %v1828, %v1824
        %v1993 = vpack.c.b16 %v1829, %v1825
        %v1994 = vpack.c.b16 %v1830, %v1826
        %v1995 = vpack.c.b16 %v1835, %v1831
        %v1996 = vpack.c.b16 %v1836, %v1832
        %v1997 = vpack.c.b16 %v1837, %v1833
        %v1998 = vpack.c.b16 %v1838, %v1834
        %v1999 = vpack.c.b16 %v1843, %v1839
        %v2000 = vpack.c.b16 %v1844, %v1840
        %v2001 = vpack.c.b16 %v1845, %v1841
        %v2002 = vpack.c.b16 %v1846, %v1842
        %v2003 = vpack.c.b16 %v1851, %v1847
        %v2004 = vpack.c.b16 %v1852, %v1848
        %v2005 = vpack.c.b16 %v1853, %v1849
        %v2006 = vpack.c.b16 %v1854, %v1850
        %v2007 = vpack.c.b16 %v1859, %v1855
        %v2008 = vpack.c.b16 %v1860, %v1856
        %v2009 = vpack.c.b16 %v1861, %v1857
        %v2010 = vpack.c.b16 %v1862, %v1858
        %v2011 = vpack.c.b16 %v1867, %v1863
        %v2012 = vpack.c.b16 %v1868, %v1864
        %v2013 = vpack.c.b16 %v1869, %v1865
        %v2014 = vpack.c.b16 %v1870, %v1866
        %v2015 = vpack.c.b16 %v1875, %v1871
        %v2016 = vpack.c.b16 %v1876, %v1872
        %v2017 = vpack.c.b16 %v1877, %v1873
        %v2018 = vpack.c.b16 %v1878, %v1874
        %v2019 = vpack.c.b16 %v1883, %v1879
        %v2020 = vpack.c.b16 %v1884, %v1880
        %v2021 = vpack.c.b16 %v1885, %v1881
        %v2022 = vpack.c.b16 %v1886, %v1882
        %v2023 = vpack.c.b16 %v1891, %v1887
        %v2024 = vpack.c.b16 %v1892, %v1888
        %v2025 = vpack.c.b16 %v1893, %v1889
        %v2026 = vpack.c.b16 %v1894, %v1890
        %v2027 = vpack.c.b16 %v1899, %v1895
        %v2028 = vpack.c.b16 %v1900, %v1896
        %v2029 = vpack.c.b16 %v1901, %v1897
        %v2030 = vpack.c.b16 %v1902, %v1898
        %v2031 = vpack.c.b16 %v1907, %v1903
        %v2032 = vpack.c.b16 %v1908, %v1904
        %v2033 = vpack.c.b16 %v1909, %v1905
        %v2034 = vpack.c.b16 %v1910, %v1906
        %v2035 = vpack.c.b16 %v1915, %v1911
        %v2036 = vpack.c.b16 %v1916, %v1912
        %v2037 = vpack.c.b16 %v1917, %v1913
        %v2038 = vpack.c.b16 %v1918, %v1914
        %v2039 = vpack.c.b16 %v1923, %v1919
        %v2040 = vpack.c.b16 %v1924, %v1920
        %v2041 = vpack.c.b16 %v1925, %v1921
        %v2042 = vpack.c.b16 %v1926, %v1922
        %v2043 = vpack.c.b16 %v1931, %v1927
        %v2044 = vpack.c.b16 %v1932, %v1928
        %v2045 = vpack.c.b16 %v1933, %v1929
        %v2046 = vpack.c.b16 %v1934, %v1930
        %v2047 = vpack.c.b16 %v1939, %v1935
        %v2048 = vpack.c.b16 %v1940, %v1936
        %v2049 = vpack.c.b16 %v1941, %v1937
        %v2050 = vpack.c.b16 %v1942, %v1938
        %vm2159 = vcmask 392192
        %v2161 = vsel %vm2159, %v1615, 0
        %2163 = vmatpush.bf16.msra.mxu0 %v1971
        %2164 = vmatpush.bf16.msra.mxu0 %v1967
        %2165 = vmatpush.bf16.msra.mxu0 %v1963
        %2166 = vmatpush.bf16.msra.mxu0 %v1959
        %2167 = vmatpush.bf16.msra.mxu0 %v1955
        %2168 = vmatpush.bf16.msra.mxu0 %v1951
        %2169 = vmatpush.bf16.msra.mxu0 %v1947
        %2170 = vmatpush.bf16.msra.mxu0 %v1943
        %2171 = vmatmul.bf16.gmra.mxu0 %v1612
        %v2172 = vpop.f32.mrf.mxu0
        %v2173 = vadd.f32 0.0, %v2172
        %v2174 = vpop.f32.mrf.mxu0
        %v2175 = vadd.f32 0.0, %v2174
        %2176 = vdwg.mxu0
        %2177 = vmatpush.bf16.msra.mxu0 %v2003
        %2178 = vmatpush.bf16.msra.mxu0 %v1999
        %2179 = vmatpush.bf16.msra.mxu0 %v1995
        %2180 = vmatpush.bf16.msra.mxu0 %v1991
        %2181 = vmatpush.bf16.msra.mxu0 %v1987
        %2182 = vmatpush.bf16.msra.mxu0 %v1983
        %2183 = vmatpush.bf16.msra.mxu0 %v1979
        %2184 = vmatpush.bf16.msra.mxu0 %v1975
        %2185 = vmatmul.bf16.gmra.mxu0 %v1613
        %v2186 = vpop.f32.mrf.mxu0
        %v2187 = vadd.f32 %v2173, %v2186
        %v2188 = vpop.f32.mrf.mxu0
        %v2189 = vadd.f32 %v2175, %v2188
        %2190 = vdwg.mxu0
        %2191 = vmatpush.bf16.msra.mxu0 %v2035
        %2192 = vmatpush.bf16.msra.mxu0 %v2031
        %2193 = vmatpush.bf16.msra.mxu0 %v2027
        %2194 = vmatpush.bf16.msra.mxu0 %v2023
        %2195 = vmatpush.bf16.msra.mxu0 %v2019
        %2196 = vmatpush.bf16.msra.mxu0 %v2015
        %2197 = vmatpush.bf16.msra.mxu0 %v2011
        %2198 = vmatpush.bf16.msra.mxu0 %v2007
        %2199 = vmatmul.bf16.gmra.mxu0 %v1614
        %v2200 = vpop.f32.mrf.mxu0
        %v2201 = vadd.f32 %v2187, %v2200
        %v2202 = vpop.f32.mrf.mxu0
        %v2203 = vadd.f32 %v2189, %v2202
        %2204 = vdwg.mxu0
        %2205 = vmatpush.bf16.msra.mxu0 0
        %2206 = vmatpush.bf16.msra.mxu0 0
        %2207 = vmatpush.bf16.msra.mxu0 0
        %2208 = vmatpush.bf16.msra.mxu0 0
        %2209 = vmatpush.bf16.msra.mxu0 0
        %2210 = vmatpush.bf16.msra.mxu0 %v2047
        %2211 = vmatpush.bf16.msra.mxu0 %v2043
        %2212 = vmatpush.bf16.msra.mxu0 %v2039
        %2213 = vmatmul.bf16.gmra.mxu0 %v2161
        %v2214 = vpop.f32.mrf.mxu0
        %v2215 = vadd.f32 %v2201, %v2214
        %v2216 = vpop.f32.mrf.mxu0
        %v2217 = vadd.f32 %v2203, %v2216
        %2218 = vdwg.mxu0
        %2219 = vmatpush.bf16.msra.mxu0 %v1972
        %2220 = vmatpush.bf16.msra.mxu0 %v1968
        %2221 = vmatpush.bf16.msra.mxu0 %v1964
        %2222 = vmatpush.bf16.msra.mxu0 %v1960
        %2223 = vmatpush.bf16.msra.mxu0 %v1956
        %2224 = vmatpush.bf16.msra.mxu0 %v1952
        %2225 = vmatpush.bf16.msra.mxu0 %v1948
        %2226 = vmatpush.bf16.msra.mxu0 %v1944
        %2227 = vmatmul.bf16.gmra.mxu0 %v1612
        %v2228 = vpop.f32.mrf.mxu0
        %v2229 = vadd.f32 0.0, %v2228
        %v2230 = vpop.f32.mrf.mxu0
        %v2231 = vadd.f32 0.0, %v2230
        %2232 = vdwg.mxu0
        %2233 = vmatpush.bf16.msra.mxu0 %v2004
        %2234 = vmatpush.bf16.msra.mxu0 %v2000
        %2235 = vmatpush.bf16.msra.mxu0 %v1996
        %2236 = vmatpush.bf16.msra.mxu0 %v1992
        %2237 = vmatpush.bf16.msra.mxu0 %v1988
        %2238 = vmatpush.bf16.msra.mxu0 %v1984
        %2239 = vmatpush.bf16.msra.mxu0 %v1980
        %2240 = vmatpush.bf16.msra.mxu0 %v1976
        %2241 = vmatmul.bf16.gmra.mxu0 %v1613
        %v2242 = vpop.f32.mrf.mxu0
        %v2243 = vadd.f32 %v2229, %v2242
        %v2244 = vpop.f32.mrf.mxu0
        %v2245 = vadd.f32 %v2231, %v2244
        %2246 = vdwg.mxu0
        %2247 = vmatpush.bf16.msra.mxu0 %v2036
        %2248 = vmatpush.bf16.msra.mxu0 %v2032
        %2249 = vmatpush.bf16.msra.mxu0 %v2028
        %2250 = vmatpush.bf16.msra.mxu0 %v2024
        %2251 = vmatpush.bf16.msra.mxu0 %v2020
        %2252 = vmatpush.bf16.msra.mxu0 %v2016
        %2253 = vmatpush.bf16.msra.mxu0 %v2012
        %2254 = vmatpush.bf16.msra.mxu0 %v2008
        %2255 = vmatmul.bf16.gmra.mxu0 %v1614
        %v2256 = vpop.f32.mrf.mxu0
        %v2257 = vadd.f32 %v2243, %v2256
        %v2258 = vpop.f32.mrf.mxu0
        %v2259 = vadd.f32 %v2245, %v2258
        %2260 = vdwg.mxu0
        %2261 = vmatpush.bf16.msra.mxu0 0
        %2262 = vmatpush.bf16.msra.mxu0 0
        %2263 = vmatpush.bf16.msra.mxu0 0
        %2264 = vmatpush.bf16.msra.mxu0 0
        %2265 = vmatpush.bf16.msra.mxu0 0
        %2266 = vmatpush.bf16.msra.mxu0 %v2048
        %2267 = vmatpush.bf16.msra.mxu0 %v2044
        %2268 = vmatpush.bf16.msra.mxu0 %v2040
        %2269 = vmatmul.bf16.gmra.mxu0 %v2161
        %v2270 = vpop.f32.mrf.mxu0
        %v2271 = vadd.f32 %v2257, %v2270
        %v2272 = vpop.f32.mrf.mxu0
        %v2273 = vadd.f32 %v2259, %v2272
        %2274 = vdwg.mxu0
        %2275 = vmatpush.bf16.msra.mxu0 %v1973
        %2276 = vmatpush.bf16.msra.mxu0 %v1969
        %2277 = vmatpush.bf16.msra.mxu0 %v1965
        %2278 = vmatpush.bf16.msra.mxu0 %v1961
        %2279 = vmatpush.bf16.msra.mxu0 %v1957
        %2280 = vmatpush.bf16.msra.mxu0 %v1953
        %2281 = vmatpush.bf16.msra.mxu0 %v1949
        %2282 = vmatpush.bf16.msra.mxu0 %v1945
        %2283 = vmatmul.bf16.gmra.mxu0 %v1612
        %v2284 = vpop.f32.mrf.mxu0
        %v2285 = vadd.f32 0.0, %v2284
        %v2286 = vpop.f32.mrf.mxu0
        %v2287 = vadd.f32 0.0, %v2286
        %2288 = vdwg.mxu0
        %2289 = vmatpush.bf16.msra.mxu0 %v2005
        %2290 = vmatpush.bf16.msra.mxu0 %v2001
        %2291 = vmatpush.bf16.msra.mxu0 %v1997
        %2292 = vmatpush.bf16.msra.mxu0 %v1993
        %2293 = vmatpush.bf16.msra.mxu0 %v1989
        %2294 = vmatpush.bf16.msra.mxu0 %v1985
        %2295 = vmatpush.bf16.msra.mxu0 %v1981
        %2296 = vmatpush.bf16.msra.mxu0 %v1977
        %2297 = vmatmul.bf16.gmra.mxu0 %v1613
        %v2298 = vpop.f32.mrf.mxu0
        %v2299 = vadd.f32 %v2285, %v2298
        %v2300 = vpop.f32.mrf.mxu0
        %v2301 = vadd.f32 %v2287, %v2300
        %2302 = vdwg.mxu0
        %2303 = vmatpush.bf16.msra.mxu0 %v2037
        %2304 = vmatpush.bf16.msra.mxu0 %v2033
        %2305 = vmatpush.bf16.msra.mxu0 %v2029
        %2306 = vmatpush.bf16.msra.mxu0 %v2025
        %2307 = vmatpush.bf16.msra.mxu0 %v2021
        %2308 = vmatpush.bf16.msra.mxu0 %v2017
        %2309 = vmatpush.bf16.msra.mxu0 %v2013
        %2310 = vmatpush.bf16.msra.mxu0 %v2009
        %2311 = vmatmul.bf16.gmra.mxu0 %v1614
        %v2312 = vpop.f32.mrf.mxu0
        %v2313 = vadd.f32 %v2299, %v2312
        %v2314 = vpop.f32.mrf.mxu0
        %v2315 = vadd.f32 %v2301, %v2314
        %2316 = vdwg.mxu0
        %2317 = vmatpush.bf16.msra.mxu0 0
        %2318 = vmatpush.bf16.msra.mxu0 0
        %2319 = vmatpush.bf16.msra.mxu0 0
        %2320 = vmatpush.bf16.msra.mxu0 0
        %2321 = vmatpush.bf16.msra.mxu0 0
        %2322 = vmatpush.bf16.msra.mxu0 %v2049
        %2323 = vmatpush.bf16.msra.mxu0 %v2045
        %2324 = vmatpush.bf16.msra.mxu0 %v2041
        %2325 = vmatmul.bf16.gmra.mxu0 %v2161
        %v2326 = vpop.f32.mrf.mxu0
        %v2327 = vadd.f32 %v2313, %v2326
        %v2328 = vpop.f32.mrf.mxu0
        %v2329 = vadd.f32 %v2315, %v2328
        %2330 = vdwg.mxu0
        %2331 = vmatpush.bf16.msra.mxu0 %v1974
        %2332 = vmatpush.bf16.msra.mxu0 %v1970
        %2333 = vmatpush.bf16.msra.mxu0 %v1966
        %2334 = vmatpush.bf16.msra.mxu0 %v1962
        %2335 = vmatpush.bf16.msra.mxu0 %v1958
        %2336 = vmatpush.bf16.msra.mxu0 %v1954
        %2337 = vmatpush.bf16.msra.mxu0 %v1950
        %2338 = vmatpush.bf16.msra.mxu0 %v1946
        %2339 = vmatmul.bf16.gmra.mxu0 %v1612
        %v2340 = vpop.f32.mrf.mxu0
        %v2341 = vadd.f32 0.0, %v2340
        %v2342 = vpop.f32.mrf.mxu0
        %v2343 = vadd.f32 0.0, %v2342
        %2344 = vdwg.mxu0
        %2345 = vmatpush.bf16.msra.mxu0 %v2006
        %2346 = vmatpush.bf16.msra.mxu0 %v2002
        %2347 = vmatpush.bf16.msra.mxu0 %v1998
        %2348 = vmatpush.bf16.msra.mxu0 %v1994
        %2349 = vmatpush.bf16.msra.mxu0 %v1990
        %2350 = vmatpush.bf16.msra.mxu0 %v1986
        %2351 = vmatpush.bf16.msra.mxu0 %v1982
        %2352 = vmatpush.bf16.msra.mxu0 %v1978
        %2353 = vmatmul.bf16.gmra.mxu0 %v1613
        %v2354 = vpop.f32.mrf.mxu0
        %v2355 = vadd.f32 %v2341, %v2354
        %v2356 = vpop.f32.mrf.mxu0
        %v2357 = vadd.f32 %v2343, %v2356
        %2358 = vdwg.mxu0
        %2359 = vmatpush.bf16.msra.mxu0 %v2038
        %2360 = vmatpush.bf16.msra.mxu0 %v2034
        %2361 = vmatpush.bf16.msra.mxu0 %v2030
        %2362 = vmatpush.bf16.msra.mxu0 %v2026
        %2363 = vmatpush.bf16.msra.mxu0 %v2022
        %2364 = vmatpush.bf16.msra.mxu0 %v2018
        %2365 = vmatpush.bf16.msra.mxu0 %v2014
        %2366 = vmatpush.bf16.msra.mxu0 %v2010
        %2367 = vmatmul.bf16.gmra.mxu0 %v1614
        %v2368 = vpop.f32.mrf.mxu0
        %v2369 = vadd.f32 %v2355, %v2368
        %v2370 = vpop.f32.mrf.mxu0
        %v2371 = vadd.f32 %v2357, %v2370
        %2372 = vdwg.mxu0
        %2373 = vmatpush.bf16.msra.mxu0 0
        %2374 = vmatpush.bf16.msra.mxu0 0
        %2375 = vmatpush.bf16.msra.mxu0 0
        %2376 = vmatpush.bf16.msra.mxu0 0
        %2377 = vmatpush.bf16.msra.mxu0 0
        %2378 = vmatpush.bf16.msra.mxu0 %v2050
        %2379 = vmatpush.bf16.msra.mxu0 %v2046
        %2380 = vmatpush.bf16.msra.mxu0 %v2042
        %2381 = vmatmul.bf16.gmra.mxu0 %v2161
        %v2382 = vpop.f32.mrf.mxu0
        %v2383 = vadd.f32 %v2369, %v2382
        %v2384 = vpop.f32.mrf.mxu0
        %v2385 = vadd.f32 %v2371, %v2384
        %2386 = vdwg.mxu0
        %v2387 = vld [vmem:[%s3] sm:$0xff]
        %v2388 = vld [vmem:[%s3 + $0x8] sm:$0xff]
        %2390 = vset.pattern.permute.xlu0 0
        %2391 = vperm.xlu0 %2390, %v2387
        %v2392 = vpop.permute.xlu0 %2391
        %2395 = vset.pattern.permute.xlu0 0
        %2396 = vperm.xlu0 %2395, %v2388
        %v2397 = vpop.permute.xlu0 %2396
        %v2399 = vmul.f32 %v2215, %v2392
        %v2400 = vmul.f32 %v2271, %v2392
        %v2401 = vmul.f32 %v2327, %v2392
        %v2402 = vmul.f32 %v2383, %v2392
        %v2403 = vmul.f32 %v2217, %v2397
        %v2404 = vmul.f32 %v2273, %v2397
        %v2405 = vmul.f32 %v2329, %v2397
        %v2406 = vmul.f32 %v2385, %v2397
        %v2407 = vld [vmem:[%s4] sm:$0xff]
        %v2408 = vld [vmem:[%s4 + $0x8] sm:$0xff]
        %2410 = vset.pattern.permute.xlu0 0
        %2411 = vperm.xlu0 %2410, %v2407
        %v2412 = vpop.permute.xlu0 %2411
        %2415 = vset.pattern.permute.xlu0 0
        %2416 = vperm.xlu0 %2415, %v2408
        %v2417 = vpop.permute.xlu0 %2416
        %v2419 = vadd.f32 %v2399, %v2412
        %v2420 = vadd.f32 %v2400, %v2412
        %v2421 = vadd.f32 %v2401, %v2412
        %v2422 = vadd.f32 %v2402, %v2412
        %v2423 = vadd.f32 %v2403, %v2417
        %v2424 = vadd.f32 %v2404, %v2417
        %v2425 = vadd.f32 %v2405, %v2417
        %v2426 = vadd.f32 %v2406, %v2417
        %v2427 = vmax.f32 %v2419, 0.0
        %v2428 = vmax.f32 %v2420, 0.0
        %v2429 = vmax.f32 %v2421, 0.0
        %v2430 = vmax.f32 %v2422, 0.0
        %v2431 = vmax.f32 %v2423, 0.0
        %v2432 = vmax.f32 %v2424, 0.0
        %v2433 = vmax.f32 %v2425, 0.0
        %v2434 = vmax.f32 %v2426, 0.0
        %2435 = vrot.lane.b32.xlu0 %v2427, 73
        %v2436 = vpop.permute.xlu0 %2435
        %2437 = vrot.lane.b32.xlu0 %v2431, 73
        %v2438 = vpop.permute.xlu0 %2437
        %2439 = vrot.lane.b32.xlu0 %v2428, 73
        %v2440 = vpop.permute.xlu0 %2439
        %2441 = vrot.lane.b32.xlu0 %v2432, 73
        %v2442 = vpop.permute.xlu0 %2441
        %2443 = vrot.lane.b32.xlu0 %v2429, 73
        %v2444 = vpop.permute.xlu0 %2443
        %2445 = vrot.lane.b32.xlu0 %v2433, 73
        %v2446 = vpop.permute.xlu0 %2445
        %2447 = vrot.lane.b32.xlu0 %v2430, 73
        %v2448 = vpop.permute.xlu0 %2447
        %2449 = vrot.lane.b32.xlu0 %v2434, 73
        %v2450 = vpop.permute.xlu0 %2449
        %v2451 = vsel %vm370, %v2444, %v2448
        %v2452 = vsel %vm370, %v2446, %v2450
        %v2453 = vsel %vm370, %v2440, %v2444
        %v2454 = vsel %vm370, %v2442, %v2446
        %v2455 = vsel %vm370, %v2436, %v2440
        %v2456 = vsel %vm370, %v2438, %v2442
        %v2457 = vsel %vm370, %v2448, %v2436
        %v2458 = vsel %vm370, %v2450, %v2438
        %v2459 = vld [vmem:[#allocation6] ss:$8 sm:$0xf]
        %v2461 = vperm.slane %v2459, 0
        %v2462 = vperm.slane %v2459, 1
        %v2463 = vperm.slane %v2459, 2
        %v2464 = vperm.slane %v2459, 3
        %v2469 = vmul.f32 %v2457, %v2461
        %v2470 = vmul.f32 %v2455, %v2462
        %v2471 = vmul.f32 %v2453, %v2463
        %v2472 = vmul.f32 %v2451, %v2464
        %v2473 = vmul.f32 %v2458, %v2461
        %v2474 = vmul.f32 %v2456, %v2462
        %v2475 = vmul.f32 %v2454, %v2463
        %v2476 = vmul.f32 %v2452, %v2464
        %v2477 = vpack.c.bf16 %v2470, %v2469
        %v2478 = vpack.c.bf16 %v2472, %v2471
        %v2479 = vpack.c.bf16 %v2474, %v2473
        %v2480 = vpack.c.bf16 %v2476, %v2475
        %2481 = vst [vmem:[#allocation2] sm:$0xff] %v2477
        %2482 = vst [vmem:[#allocation2 + $0x8] sm:$0xff] %v2478
        %2483 = vst [vmem:[#allocation2 + $0x10] sm:$0xff] %v2479
        %2484 = vst [vmem:[#allocation2 + $0x18] sm:$0xff] %v2480
        %2485 = vrot.lane.b32.xlu0 %v2427, 72
        %v2486 = vpop.permute.xlu0 %2485
        %2487 = vrot.lane.b32.xlu0 %v2431, 72
        %v2488 = vpop.permute.xlu0 %2487
        %2489 = vrot.lane.b32.xlu0 %v2428, 72
        %v2490 = vpop.permute.xlu0 %2489
        %2491 = vrot.lane.b32.xlu0 %v2432, 72
        %v2492 = vpop.permute.xlu0 %2491
        %2493 = vrot.lane.b32.xlu0 %v2429, 72
        %v2494 = vpop.permute.xlu0 %2493
        %2495 = vrot.lane.b32.xlu0 %v2433, 72
        %v2496 = vpop.permute.xlu0 %2495
        %2497 = vrot.lane.b32.xlu0 %v2430, 72
        %v2498 = vpop.permute.xlu0 %2497
        %2499 = vrot.lane.b32.xlu0 %v2434, 72
        %v2500 = vpop.permute.xlu0 %2499
        %v2501 = vsel %vm421, %v2494, %v2498
        %v2502 = vsel %vm421, %v2496, %v2500
        %v2503 = vsel %vm421, %v2490, %v2494
        %v2504 = vsel %vm421, %v2492, %v2496
        %v2505 = vsel %vm421, %v2486, %v2490
        %v2506 = vsel %vm421, %v2488, %v2492
        %v2507 = vsel %vm421, %v2498, %v2486
        %v2508 = vsel %vm421, %v2500, %v2488
        %v2509 = vld [vmem:[%s430] ss:$8 sm:$0xf]
        %v2511 = vperm.slane %v2509, 0
        %v2512 = vperm.slane %v2509, 1
        %v2513 = vperm.slane %v2509, 2
        %v2514 = vperm.slane %v2509, 3
        %v2519 = vmul.f32 %v2507, %v2511
        %v2520 = vmul.f32 %v2505, %v2512
        %v2521 = vmul.f32 %v2503, %v2513
        %v2522 = vmul.f32 %v2501, %v2514
        %v2523 = vmul.f32 %v2508, %v2511
        %v2524 = vmul.f32 %v2506, %v2512
        %v2525 = vmul.f32 %v2504, %v2513
        %v2526 = vmul.f32 %v2502, %v2514
        %v2527 = vpack.c.bf16 %v2520, %v2519
        %v2528 = vpack.c.bf16 %v2522, %v2521
        %v2529 = vpack.c.bf16 %v2524, %v2523
        %v2530 = vpack.c.bf16 %v2526, %v2525
        %2531 = vst [vmem:[#allocation2 + $0x20] sm:$0xff] %v2527
        %2532 = vst [vmem:[#allocation2 + $0x28] sm:$0xff] %v2528
        %2533 = vst [vmem:[#allocation2 + $0x30] sm:$0xff] %v2529
        %2534 = vst [vmem:[#allocation2 + $0x38] sm:$0xff] %v2530
        %2535 = vrot.lane.b32.xlu0 %v2427, 71
        %v2536 = vpop.permute.xlu0 %2535
        %2537 = vrot.lane.b32.xlu0 %v2431, 71
        %v2538 = vpop.permute.xlu0 %2537
        %2539 = vrot.lane.b32.xlu0 %v2428, 71
        %v2540 = vpop.permute.xlu0 %2539
        %2541 = vrot.lane.b32.xlu0 %v2432, 71
        %v2542 = vpop.permute.xlu0 %2541
        %2543 = vrot.lane.b32.xlu0 %v2429, 71
        %v2544 = vpop.permute.xlu0 %2543
        %2545 = vrot.lane.b32.xlu0 %v2433, 71
        %v2546 = vpop.permute.xlu0 %2545
        %2547 = vrot.lane.b32.xlu0 %v2430, 71
        %v2548 = vpop.permute.xlu0 %2547
        %2549 = vrot.lane.b32.xlu0 %v2434, 71
        %v2550 = vpop.permute.xlu0 %2549
        %v2551 = vsel %vm473, %v2544, %v2548
        %v2552 = vsel %vm473, %v2546, %v2550
        %v2553 = vsel %vm473, %v2540, %v2544
        %v2554 = vsel %vm473, %v2542, %v2546
        %v2555 = vsel %vm473, %v2536, %v2540
        %v2556 = vsel %vm473, %v2538, %v2542
        %v2557 = vsel %vm473, %v2548, %v2536
        %v2558 = vsel %vm473, %v2550, %v2538
        %v2559 = vld [vmem:[%s482] ss:$8 sm:$0xf]
        %v2561 = vperm.slane %v2559, 0
        %v2562 = vperm.slane %v2559, 1
        %v2563 = vperm.slane %v2559, 2
        %v2564 = vperm.slane %v2559, 3
        %v2569 = vmul.f32 %v2557, %v2561
        %v2570 = vmul.f32 %v2555, %v2562
        %v2571 = vmul.f32 %v2553, %v2563
        %v2572 = vmul.f32 %v2551, %v2564
        %v2573 = vmul.f32 %v2558, %v2561
        %v2574 = vmul.f32 %v2556, %v2562
        %v2575 = vmul.f32 %v2554, %v2563
        %v2576 = vmul.f32 %v2552, %v2564
        %v2577 = vpack.c.bf16 %v2570, %v2569
        %v2578 = vpack.c.bf16 %v2572, %v2571
        %v2579 = vpack.c.bf16 %v2574, %v2573
        %v2580 = vpack.c.bf16 %v2576, %v2575
        %2581 = vst [vmem:[#allocation2 + $0x40] sm:$0xff] %v2577
        %2582 = vst [vmem:[#allocation2 + $0x48] sm:$0xff] %v2578
        %2583 = vst [vmem:[#allocation2 + $0x50] sm:$0xff] %v2579
        %2584 = vst [vmem:[#allocation2 + $0x58] sm:$0xff] %v2580
        %2585 = vrot.lane.b32.xlu0 %v2427, 65
        %v2586 = vpop.permute.xlu0 %2585
        %2587 = vrot.lane.b32.xlu0 %v2431, 65
        %v2588 = vpop.permute.xlu0 %2587
        %2589 = vrot.lane.b32.xlu0 %v2428, 65
        %v2590 = vpop.permute.xlu0 %2589
        %2591 = vrot.lane.b32.xlu0 %v2432, 65
        %v2592 = vpop.permute.xlu0 %2591
        %2593 = vrot.lane.b32.xlu0 %v2429, 65
        %v2594 = vpop.permute.xlu0 %2593
        %2595 = vrot.lane.b32.xlu0 %v2433, 65
        %v2596 = vpop.permute.xlu0 %2595
        %2597 = vrot.lane.b32.xlu0 %v2430, 65
        %v2598 = vpop.permute.xlu0 %2597
        %2599 = vrot.lane.b32.xlu0 %v2434, 65
        %v2600 = vpop.permute.xlu0 %2599
        %v2601 = vsel %vm525, %v2594, %v2598
        %v2602 = vsel %vm525, %v2596, %v2600
        %v2603 = vsel %vm525, %v2590, %v2594
        %v2604 = vsel %vm525, %v2592, %v2596
        %v2605 = vsel %vm525, %v2586, %v2590
        %v2606 = vsel %vm525, %v2588, %v2592
        %v2607 = vsel %vm525, %v2598, %v2586
        %v2608 = vsel %vm525, %v2600, %v2588
        %v2609 = vld [vmem:[%s534] ss:$8 sm:$0xf]
        %v2611 = vperm.slane %v2609, 0
        %v2612 = vperm.slane %v2609, 1
        %v2613 = vperm.slane %v2609, 2
        %v2614 = vperm.slane %v2609, 3
        %v2619 = vmul.f32 %v2607, %v2611
        %v2620 = vmul.f32 %v2605, %v2612
        %v2621 = vmul.f32 %v2603, %v2613
        %v2622 = vmul.f32 %v2601, %v2614
        %v2623 = vmul.f32 %v2608, %v2611
        %v2624 = vmul.f32 %v2606, %v2612
        %v2625 = vmul.f32 %v2604, %v2613
        %v2626 = vmul.f32 %v2602, %v2614
        %v2627 = vpack.c.bf16 %v2620, %v2619
        %v2628 = vpack.c.bf16 %v2622, %v2621
        %v2629 = vpack.c.bf16 %v2624, %v2623
        %v2630 = vpack.c.bf16 %v2626, %v2625
        %2631 = vst [vmem:[#allocation2 + $0x60] sm:$0xff] %v2627
        %2632 = vst [vmem:[#allocation2 + $0x68] sm:$0xff] %v2628
        %2633 = vst [vmem:[#allocation2 + $0x70] sm:$0xff] %v2629
        %2634 = vst [vmem:[#allocation2 + $0x78] sm:$0xff] %v2630
        %2635 = vrot.lane.b32.xlu0 %v2427, 64
        %v2636 = vpop.permute.xlu0 %2635
        %2637 = vrot.lane.b32.xlu0 %v2431, 64
        %v2638 = vpop.permute.xlu0 %2637
        %2639 = vrot.lane.b32.xlu0 %v2428, 64
        %v2640 = vpop.permute.xlu0 %2639
        %2641 = vrot.lane.b32.xlu0 %v2432, 64
        %v2642 = vpop.permute.xlu0 %2641
        %2643 = vrot.lane.b32.xlu0 %v2429, 64
        %v2644 = vpop.permute.xlu0 %2643
        %2645 = vrot.lane.b32.xlu0 %v2433, 64
        %v2646 = vpop.permute.xlu0 %2645
        %2647 = vrot.lane.b32.xlu0 %v2430, 64
        %v2648 = vpop.permute.xlu0 %2647
        %2649 = vrot.lane.b32.xlu0 %v2434, 64
        %v2650 = vpop.permute.xlu0 %2649
        %v2651 = vsel %vm577, %v2644, %v2648
        %v2652 = vsel %vm577, %v2646, %v2650
        %v2653 = vsel %vm577, %v2640, %v2644
        %v2654 = vsel %vm577, %v2642, %v2646
        %v2655 = vsel %vm577, %v2636, %v2640
        %v2656 = vsel %vm577, %v2638, %v2642
        %v2657 = vsel %vm577, %v2648, %v2636
        %v2658 = vsel %vm577, %v2650, %v2638
        %v2659 = vld [vmem:[%s586] ss:$8 sm:$0xf]
        %v2661 = vperm.slane %v2659, 0
        %v2662 = vperm.slane %v2659, 1
        %v2663 = vperm.slane %v2659, 2
        %v2664 = vperm.slane %v2659, 3
        %v2669 = vmul.f32 %v2657, %v2661
        %v2670 = vmul.f32 %v2655, %v2662
        %v2671 = vmul.f32 %v2653, %v2663
        %v2672 = vmul.f32 %v2651, %v2664
        %v2673 = vmul.f32 %v2658, %v2661
        %v2674 = vmul.f32 %v2656, %v2662
        %v2675 = vmul.f32 %v2654, %v2663
        %v2676 = vmul.f32 %v2652, %v2664
        %v2677 = vpack.c.bf16 %v2670, %v2669
        %v2678 = vpack.c.bf16 %v2672, %v2671
        %v2679 = vpack.c.bf16 %v2674, %v2673
        %v2680 = vpack.c.bf16 %v2676, %v2675
        %2681 = vst [vmem:[#allocation2 + $0x80] sm:$0xff] %v2677
        %2682 = vst [vmem:[#allocation2 + $0x88] sm:$0xff] %v2678
        %2683 = vst [vmem:[#allocation2 + $0x90] sm:$0xff] %v2679
        %2684 = vst [vmem:[#allocation2 + $0x98] sm:$0xff] %v2680
        %2685 = vrot.lane.b32.xlu0 %v2427, 63
        %v2686 = vpop.permute.xlu0 %2685
        %2687 = vrot.lane.b32.xlu0 %v2431, 63
        %v2688 = vpop.permute.xlu0 %2687
        %2689 = vrot.lane.b32.xlu0 %v2428, 63
        %v2690 = vpop.permute.xlu0 %2689
        %2691 = vrot.lane.b32.xlu0 %v2432, 63
        %v2692 = vpop.permute.xlu0 %2691
        %2693 = vrot.lane.b32.xlu0 %v2429, 63
        %v2694 = vpop.permute.xlu0 %2693
        %2695 = vrot.lane.b32.xlu0 %v2433, 63
        %v2696 = vpop.permute.xlu0 %2695
        %2697 = vrot.lane.b32.xlu0 %v2430, 63
        %v2698 = vpop.permute.xlu0 %2697
        %2699 = vrot.lane.b32.xlu0 %v2434, 63
        %v2700 = vpop.permute.xlu0 %2699
        %v2701 = vsel %vm629, %v2694, %v2698
        %v2702 = vsel %vm629, %v2696, %v2700
        %v2703 = vsel %vm629, %v2690, %v2694
        %v2704 = vsel %vm629, %v2692, %v2696
        %v2705 = vsel %vm629, %v2686, %v2690
        %v2706 = vsel %vm629, %v2688, %v2692
        %v2707 = vsel %vm629, %v2698, %v2686
        %v2708 = vsel %vm629, %v2700, %v2688
        %v2709 = vld [vmem:[%s638] ss:$8 sm:$0xf]
        %v2711 = vperm.slane %v2709, 0
        %v2712 = vperm.slane %v2709, 1
        %v2713 = vperm.slane %v2709, 2
        %v2714 = vperm.slane %v2709, 3
        %v2719 = vmul.f32 %v2707, %v2711
        %v2720 = vmul.f32 %v2705, %v2712
        %v2721 = vmul.f32 %v2703, %v2713
        %v2722 = vmul.f32 %v2701, %v2714
        %v2723 = vmul.f32 %v2708, %v2711
        %v2724 = vmul.f32 %v2706, %v2712
        %v2725 = vmul.f32 %v2704, %v2713
        %v2726 = vmul.f32 %v2702, %v2714
        %v2727 = vpack.c.bf16 %v2720, %v2719
        %v2728 = vpack.c.bf16 %v2722, %v2721
        %v2729 = vpack.c.bf16 %v2724, %v2723
        %v2730 = vpack.c.bf16 %v2726, %v2725
        %2731 = vst [vmem:[#allocation2 + $0xa0] sm:$0xff] %v2727
        %2732 = vst [vmem:[#allocation2 + $0xa8] sm:$0xff] %v2728
        %2733 = vst [vmem:[#allocation2 + $0xb0] sm:$0xff] %v2729
        %2734 = vst [vmem:[#allocation2 + $0xb8] sm:$0xff] %v2730
        %2735 = vrot.lane.b32.xlu0 %v2427, 57
        %v2736 = vpop.permute.xlu0 %2735
        %2737 = vrot.lane.b32.xlu0 %v2431, 57
        %v2738 = vpop.permute.xlu0 %2737
        %2739 = vrot.lane.b32.xlu0 %v2428, 57
        %v2740 = vpop.permute.xlu0 %2739
        %2741 = vrot.lane.b32.xlu0 %v2432, 57
        %v2742 = vpop.permute.xlu0 %2741
        %2743 = vrot.lane.b32.xlu0 %v2429, 57
        %v2744 = vpop.permute.xlu0 %2743
        %2745 = vrot.lane.b32.xlu0 %v2433, 57
        %v2746 = vpop.permute.xlu0 %2745
        %2747 = vrot.lane.b32.xlu0 %v2430, 57
        %v2748 = vpop.permute.xlu0 %2747
        %2749 = vrot.lane.b32.xlu0 %v2434, 57
        %v2750 = vpop.permute.xlu0 %2749
        %v2751 = vsel %vm681, %v2744, %v2748
        %v2752 = vsel %vm681, %v2746, %v2750
        %v2753 = vsel %vm681, %v2740, %v2744
        %v2754 = vsel %vm681, %v2742, %v2746
        %v2755 = vsel %vm681, %v2736, %v2740
        %v2756 = vsel %vm681, %v2738, %v2742
        %v2757 = vsel %vm681, %v2748, %v2736
        %v2758 = vsel %vm681, %v2750, %v2738
        %v2759 = vld [vmem:[%s690] ss:$8 sm:$0xf]
        %v2761 = vperm.slane %v2759, 0
        %v2762 = vperm.slane %v2759, 1
        %v2763 = vperm.slane %v2759, 2
        %v2764 = vperm.slane %v2759, 3
        %v2769 = vmul.f32 %v2757, %v2761
        %v2770 = vmul.f32 %v2755, %v2762
        %v2771 = vmul.f32 %v2753, %v2763
        %v2772 = vmul.f32 %v2751, %v2764
        %v2773 = vmul.f32 %v2758, %v2761
        %v2774 = vmul.f32 %v2756, %v2762
        %v2775 = vmul.f32 %v2754, %v2763
        %v2776 = vmul.f32 %v2752, %v2764
        %v2777 = vpack.c.bf16 %v2770, %v2769
        %v2778 = vpack.c.bf16 %v2772, %v2771
        %v2779 = vpack.c.bf16 %v2774, %v2773
        %v2780 = vpack.c.bf16 %v2776, %v2775
        %2781 = vst [vmem:[#allocation2 + $0xc0] sm:$0xff] %v2777
        %2782 = vst [vmem:[#allocation2 + $0xc8] sm:$0xff] %v2778
        %2783 = vst [vmem:[#allocation2 + $0xd0] sm:$0xff] %v2779
        %2784 = vst [vmem:[#allocation2 + $0xd8] sm:$0xff] %v2780
        %2785 = vrot.lane.b32.xlu0 %v2427, 56
        %v2786 = vpop.permute.xlu0 %2785
        %2787 = vrot.lane.b32.xlu0 %v2431, 56
        %v2788 = vpop.permute.xlu0 %2787
        %2789 = vrot.lane.b32.xlu0 %v2428, 56
        %v2790 = vpop.permute.xlu0 %2789
        %2791 = vrot.lane.b32.xlu0 %v2432, 56
        %v2792 = vpop.permute.xlu0 %2791
        %2793 = vrot.lane.b32.xlu0 %v2429, 56
        %v2794 = vpop.permute.xlu0 %2793
        %2795 = vrot.lane.b32.xlu0 %v2433, 56
        %v2796 = vpop.permute.xlu0 %2795
        %2797 = vrot.lane.b32.xlu0 %v2430, 56
        %v2798 = vpop.permute.xlu0 %2797
        %2799 = vrot.lane.b32.xlu0 %v2434, 56
        %v2800 = vpop.permute.xlu0 %2799
        %v2801 = vsel %vm733, %v2794, %v2798
        %v2802 = vsel %vm733, %v2796, %v2800
        %v2803 = vsel %vm733, %v2790, %v2794
        %v2804 = vsel %vm733, %v2792, %v2796
        %v2805 = vsel %vm733, %v2786, %v2790
        %v2806 = vsel %vm733, %v2788, %v2792
        %v2807 = vsel %vm733, %v2798, %v2786
        %v2808 = vsel %vm733, %v2800, %v2788
        %v2809 = vld [vmem:[%s742] ss:$8 sm:$0xf]
        %v2811 = vperm.slane %v2809, 0
        %v2812 = vperm.slane %v2809, 1
        %v2813 = vperm.slane %v2809, 2
        %v2814 = vperm.slane %v2809, 3
        %v2819 = vmul.f32 %v2807, %v2811
        %v2820 = vmul.f32 %v2805, %v2812
        %v2821 = vmul.f32 %v2803, %v2813
        %v2822 = vmul.f32 %v2801, %v2814
        %v2823 = vmul.f32 %v2808, %v2811
        %v2824 = vmul.f32 %v2806, %v2812
        %v2825 = vmul.f32 %v2804, %v2813
        %v2826 = vmul.f32 %v2802, %v2814
        %v2827 = vpack.c.bf16 %v2820, %v2819
        %v2828 = vpack.c.bf16 %v2822, %v2821
        %v2829 = vpack.c.bf16 %v2824, %v2823
        %v2830 = vpack.c.bf16 %v2826, %v2825
        %2831 = vst [vmem:[#allocation2 + $0xe0] sm:$0xff] %v2827
        %2832 = vst [vmem:[#allocation2 + $0xe8] sm:$0xff] %v2828
        %2833 = vst [vmem:[#allocation2 + $0xf0] sm:$0xff] %v2829
        %2834 = vst [vmem:[#allocation2 + $0xf8] sm:$0xff] %v2830
        %2835 = vrot.lane.b32.xlu0 %v2427, 55
        %v2836 = vpop.permute.xlu0 %2835
        %2837 = vrot.lane.b32.xlu0 %v2431, 55
        %v2838 = vpop.permute.xlu0 %2837
        %2839 = vrot.lane.b32.xlu0 %v2428, 55
        %v2840 = vpop.permute.xlu0 %2839
        %2841 = vrot.lane.b32.xlu0 %v2432, 55
        %v2842 = vpop.permute.xlu0 %2841
        %2843 = vrot.lane.b32.xlu0 %v2429, 55
        %v2844 = vpop.permute.xlu0 %2843
        %2845 = vrot.lane.b32.xlu0 %v2433, 55
        %v2846 = vpop.permute.xlu0 %2845
        %2847 = vrot.lane.b32.xlu0 %v2430, 55
        %v2848 = vpop.permute.xlu0 %2847
        %2849 = vrot.lane.b32.xlu0 %v2434, 55
        %v2850 = vpop.permute.xlu0 %2849
        %v2851 = vsel %vm785, %v2844, %v2848
        %v2852 = vsel %vm785, %v2846, %v2850
        %v2853 = vsel %vm785, %v2840, %v2844
        %v2854 = vsel %vm785, %v2842, %v2846
        %v2855 = vsel %vm785, %v2836, %v2840
        %v2856 = vsel %vm785, %v2838, %v2842
        %v2857 = vsel %vm785, %v2848, %v2836
        %v2858 = vsel %vm785, %v2850, %v2838
        %v2859 = vld [vmem:[%s794] ss:$8 sm:$0xf]
        %v2861 = vperm.slane %v2859, 0
        %v2862 = vperm.slane %v2859, 1
        %v2863 = vperm.slane %v2859, 2
        %v2864 = vperm.slane %v2859, 3
        %v2869 = vmul.f32 %v2857, %v2861
        %v2870 = vmul.f32 %v2855, %v2862
        %v2871 = vmul.f32 %v2853, %v2863
        %v2872 = vmul.f32 %v2851, %v2864
        %v2873 = vmul.f32 %v2858, %v2861
        %v2874 = vmul.f32 %v2856, %v2862
        %v2875 = vmul.f32 %v2854, %v2863
        %v2876 = vmul.f32 %v2852, %v2864
        %v2877 = vpack.c.bf16 %v2870, %v2869
        %v2878 = vpack.c.bf16 %v2872, %v2871
        %v2879 = vpack.c.bf16 %v2874, %v2873
        %v2880 = vpack.c.bf16 %v2876, %v2875
        %2881 = vst [vmem:[#allocation2 + $0x100] sm:$0xff] %v2877
        %2882 = vst [vmem:[#allocation2 + $0x108] sm:$0xff] %v2878
        %2883 = vst [vmem:[#allocation2 + $0x110] sm:$0xff] %v2879
        %2884 = vst [vmem:[#allocation2 + $0x118] sm:$0xff] %v2880
        %2885 = vrot.lane.b32.xlu0 %v2427, 9
        %v2886 = vpop.permute.xlu0 %2885
        %2887 = vrot.lane.b32.xlu0 %v2431, 9
        %v2888 = vpop.permute.xlu0 %2887
        %2889 = vrot.lane.b32.xlu0 %v2428, 9
        %v2890 = vpop.permute.xlu0 %2889
        %2891 = vrot.lane.b32.xlu0 %v2432, 9
        %v2892 = vpop.permute.xlu0 %2891
        %2893 = vrot.lane.b32.xlu0 %v2429, 9
        %v2894 = vpop.permute.xlu0 %2893
        %2895 = vrot.lane.b32.xlu0 %v2433, 9
        %v2896 = vpop.permute.xlu0 %2895
        %2897 = vrot.lane.b32.xlu0 %v2430, 9
        %v2898 = vpop.permute.xlu0 %2897
        %2899 = vrot.lane.b32.xlu0 %v2434, 9
        %v2900 = vpop.permute.xlu0 %2899
        %v2901 = vsel %vm837, %v2894, %v2898
        %v2902 = vsel %vm837, %v2896, %v2900
        %v2903 = vsel %vm837, %v2890, %v2894
        %v2904 = vsel %vm837, %v2892, %v2896
        %v2905 = vsel %vm837, %v2886, %v2890
        %v2906 = vsel %vm837, %v2888, %v2892
        %v2907 = vsel %vm837, %v2898, %v2886
        %v2908 = vsel %vm837, %v2900, %v2888
        %v2909 = vld [vmem:[%s846] ss:$8 sm:$0xf]
        %v2911 = vperm.slane %v2909, 0
        %v2912 = vperm.slane %v2909, 1
        %v2913 = vperm.slane %v2909, 2
        %v2914 = vperm.slane %v2909, 3
        %v2919 = vmul.f32 %v2907, %v2911
        %v2920 = vmul.f32 %v2905, %v2912
        %v2921 = vmul.f32 %v2903, %v2913
        %v2922 = vmul.f32 %v2901, %v2914
        %v2923 = vmul.f32 %v2908, %v2911
        %v2924 = vmul.f32 %v2906, %v2912
        %v2925 = vmul.f32 %v2904, %v2913
        %v2926 = vmul.f32 %v2902, %v2914
        %v2927 = vpack.c.bf16 %v2920, %v2919
        %v2928 = vpack.c.bf16 %v2922, %v2921
        %v2929 = vpack.c.bf16 %v2924, %v2923
        %v2930 = vpack.c.bf16 %v2926, %v2925
        %2931 = vst [vmem:[#allocation2 + $0x120] sm:$0xff] %v2927
        %2932 = vst [vmem:[#allocation2 + $0x128] sm:$0xff] %v2928
        %2933 = vst [vmem:[#allocation2 + $0x130] sm:$0xff] %v2929
        %2934 = vst [vmem:[#allocation2 + $0x138] sm:$0xff] %v2930
        %2935 = vrot.lane.b32.xlu0 %v2427, 8
        %v2936 = vpop.permute.xlu0 %2935
        %2937 = vrot.lane.b32.xlu0 %v2431, 8
        %v2938 = vpop.permute.xlu0 %2937
        %2939 = vrot.lane.b32.xlu0 %v2428, 8
        %v2940 = vpop.permute.xlu0 %2939
        %2941 = vrot.lane.b32.xlu0 %v2432, 8
        %v2942 = vpop.permute.xlu0 %2941
        %2943 = vrot.lane.b32.xlu0 %v2429, 8
        %v2944 = vpop.permute.xlu0 %2943
        %2945 = vrot.lane.b32.xlu0 %v2433, 8
        %v2946 = vpop.permute.xlu0 %2945
        %2947 = vrot.lane.b32.xlu0 %v2430, 8
        %v2948 = vpop.permute.xlu0 %2947
        %2949 = vrot.lane.b32.xlu0 %v2434, 8
        %v2950 = vpop.permute.xlu0 %2949
        %v2951 = vsel %vm889, %v2944, %v2948
        %v2952 = vsel %vm889, %v2946, %v2950
        %v2953 = vsel %vm889, %v2940, %v2944
        %v2954 = vsel %vm889, %v2942, %v2946
        %v2955 = vsel %vm889, %v2936, %v2940
        %v2956 = vsel %vm889, %v2938, %v2942
        %v2957 = vsel %vm889, %v2948, %v2936
        %v2958 = vsel %vm889, %v2950, %v2938
        %v2959 = vld [vmem:[%s898] ss:$8 sm:$0xf]
        %v2961 = vperm.slane %v2959, 0
        %v2962 = vperm.slane %v2959, 1
        %v2963 = vperm.slane %v2959, 2
        %v2964 = vperm.slane %v2959, 3
        %v2969 = vmul.f32 %v2957, %v2961
        %v2970 = vmul.f32 %v2955, %v2962
        %v2971 = vmul.f32 %v2953, %v2963
        %v2972 = vmul.f32 %v2951, %v2964
        %v2973 = vmul.f32 %v2958, %v2961
        %v2974 = vmul.f32 %v2956, %v2962
        %v2975 = vmul.f32 %v2954, %v2963
        %v2976 = vmul.f32 %v2952, %v2964
        %v2977 = vpack.c.bf16 %v2970, %v2969
        %v2978 = vpack.c.bf16 %v2972, %v2971
        %v2979 = vpack.c.bf16 %v2974, %v2973
        %v2980 = vpack.c.bf16 %v2976, %v2975
        %2981 = vst [vmem:[#allocation2 + $0x140] sm:$0xff] %v2977
        %2982 = vst [vmem:[#allocation2 + $0x148] sm:$0xff] %v2978
        %2983 = vst [vmem:[#allocation2 + $0x150] sm:$0xff] %v2979
        %2984 = vst [vmem:[#allocation2 + $0x158] sm:$0xff] %v2980
        %2985 = vrot.lane.b32.xlu0 %v2427, 7
        %v2986 = vpop.permute.xlu0 %2985
        %2987 = vrot.lane.b32.xlu0 %v2431, 7
        %v2988 = vpop.permute.xlu0 %2987
        %2989 = vrot.lane.b32.xlu0 %v2428, 7
        %v2990 = vpop.permute.xlu0 %2989
        %2991 = vrot.lane.b32.xlu0 %v2432, 7
        %v2992 = vpop.permute.xlu0 %2991
        %2993 = vrot.lane.b32.xlu0 %v2429, 7
        %v2994 = vpop.permute.xlu0 %2993
        %2995 = vrot.lane.b32.xlu0 %v2433, 7
        %v2996 = vpop.permute.xlu0 %2995
        %2997 = vrot.lane.b32.xlu0 %v2430, 7
        %v2998 = vpop.permute.xlu0 %2997
        %2999 = vrot.lane.b32.xlu0 %v2434, 7
        %v3000 = vpop.permute.xlu0 %2999
        %v3001 = vsel %vm941, %v2994, %v2998
        %v3002 = vsel %vm941, %v2996, %v3000
        %v3003 = vsel %vm941, %v2990, %v2994
        %v3004 = vsel %vm941, %v2992, %v2996
        %v3005 = vsel %vm941, %v2986, %v2990
        %v3006 = vsel %vm941, %v2988, %v2992
        %v3007 = vsel %vm941, %v2998, %v2986
        %v3008 = vsel %vm941, %v3000, %v2988
        %v3009 = vld [vmem:[%s950] ss:$8 sm:$0xf]
        %v3011 = vperm.slane %v3009, 0
        %v3012 = vperm.slane %v3009, 1
        %v3013 = vperm.slane %v3009, 2
        %v3014 = vperm.slane %v3009, 3
        %v3019 = vmul.f32 %v3007, %v3011
        %v3020 = vmul.f32 %v3005, %v3012
        %v3021 = vmul.f32 %v3003, %v3013
        %v3022 = vmul.f32 %v3001, %v3014
        %v3023 = vmul.f32 %v3008, %v3011
        %v3024 = vmul.f32 %v3006, %v3012
        %v3025 = vmul.f32 %v3004, %v3013
        %v3026 = vmul.f32 %v3002, %v3014
        %v3027 = vpack.c.bf16 %v3020, %v3019
        %v3028 = vpack.c.bf16 %v3022, %v3021
        %v3029 = vpack.c.bf16 %v3024, %v3023
        %v3030 = vpack.c.bf16 %v3026, %v3025
        %3031 = vst [vmem:[#allocation2 + $0x160] sm:$0xff] %v3027
        %3032 = vst [vmem:[#allocation2 + $0x168] sm:$0xff] %v3028
        %3033 = vst [vmem:[#allocation2 + $0x170] sm:$0xff] %v3029
        %3034 = vst [vmem:[#allocation2 + $0x178] sm:$0xff] %v3030
        %3035 = vrot.lane.b32.xlu0 %v2427, 1
        %v3036 = vpop.permute.xlu0 %3035
        %3037 = vrot.lane.b32.xlu0 %v2431, 1
        %v3038 = vpop.permute.xlu0 %3037
        %3039 = vrot.lane.b32.xlu0 %v2428, 1
        %v3040 = vpop.permute.xlu0 %3039
        %3041 = vrot.lane.b32.xlu0 %v2432, 1
        %v3042 = vpop.permute.xlu0 %3041
        %3043 = vrot.lane.b32.xlu0 %v2429, 1
        %v3044 = vpop.permute.xlu0 %3043
        %3045 = vrot.lane.b32.xlu0 %v2433, 1
        %v3046 = vpop.permute.xlu0 %3045
        %3047 = vrot.lane.b32.xlu0 %v2430, 1
        %v3048 = vpop.permute.xlu0 %3047
        %3049 = vrot.lane.b32.xlu0 %v2434, 1
        %v3050 = vpop.permute.xlu0 %3049
        %v3051 = vsel %vm993, %v3044, %v3048
        %v3052 = vsel %vm993, %v3046, %v3050
        %v3053 = vsel %vm993, %v3040, %v3044
        %v3054 = vsel %vm993, %v3042, %v3046
        %v3055 = vsel %vm993, %v3036, %v3040
        %v3056 = vsel %vm993, %v3038, %v3042
        %v3057 = vsel %vm993, %v3048, %v3036
        %v3058 = vsel %vm993, %v3050, %v3038
        %v3059 = vld [vmem:[%s1002] ss:$8 sm:$0xf]
        %v3061 = vperm.slane %v3059, 0
        %v3062 = vperm.slane %v3059, 1
        %v3063 = vperm.slane %v3059, 2
        %v3064 = vperm.slane %v3059, 3
        %v3069 = vmul.f32 %v3057, %v3061
        %v3070 = vmul.f32 %v3055, %v3062
        %v3071 = vmul.f32 %v3053, %v3063
        %v3072 = vmul.f32 %v3051, %v3064
        %v3073 = vmul.f32 %v3058, %v3061
        %v3074 = vmul.f32 %v3056, %v3062
        %v3075 = vmul.f32 %v3054, %v3063
        %v3076 = vmul.f32 %v3052, %v3064
        %v3077 = vpack.c.bf16 %v3070, %v3069
        %v3078 = vpack.c.bf16 %v3072, %v3071
        %v3079 = vpack.c.bf16 %v3074, %v3073
        %v3080 = vpack.c.bf16 %v3076, %v3075
        %3081 = vst [vmem:[#allocation2 + $0x180] sm:$0xff] %v3077
        %3082 = vst [vmem:[#allocation2 + $0x188] sm:$0xff] %v3078
        %3083 = vst [vmem:[#allocation2 + $0x190] sm:$0xff] %v3079
        %3084 = vst [vmem:[#allocation2 + $0x198] sm:$0xff] %v3080
        %v3085 = vpack.c.bf16 %v2428, %v2427
        %v3086 = vpack.c.bf16 %v2430, %v2429
        %v3087 = vpack.c.bf16 %v2432, %v2431
        %v3088 = vpack.c.bf16 %v2434, %v2433
        %3089 = vst [vmem:[#allocation2 + $0x1a0] sm:$0xff] %v3085
        %3090 = vst [vmem:[#allocation2 + $0x1a8] sm:$0xff] %v3086
        %3091 = vst [vmem:[#allocation2 + $0x1b0] sm:$0xff] %v3087
        %3092 = vst [vmem:[#allocation2 + $0x1b8] sm:$0xff] %v3088
        %3093 = vrot.lane.b32.xlu0 %v2427, 127
        %v3094 = vpop.permute.xlu0 %3093
        %3095 = vrot.lane.b32.xlu0 %v2431, 127
        %v3096 = vpop.permute.xlu0 %3095
        %3097 = vrot.lane.b32.xlu0 %v2428, 127
        %v3098 = vpop.permute.xlu0 %3097
        %3099 = vrot.lane.b32.xlu0 %v2432, 127
        %v3100 = vpop.permute.xlu0 %3099
        %3101 = vrot.lane.b32.xlu0 %v2429, 127
        %v3102 = vpop.permute.xlu0 %3101
        %3103 = vrot.lane.b32.xlu0 %v2433, 127
        %v3104 = vpop.permute.xlu0 %3103
        %3105 = vrot.lane.b32.xlu0 %v2430, 127
        %v3106 = vpop.permute.xlu0 %3105
        %3107 = vrot.lane.b32.xlu0 %v2434, 127
        %v3108 = vpop.permute.xlu0 %3107
        %v3109 = vsel %vm1053, %v3102, %v3106
        %v3110 = vsel %vm1053, %v3104, %v3108
        %v3111 = vsel %vm1053, %v3098, %v3102
        %v3112 = vsel %vm1053, %v3100, %v3104
        %v3113 = vsel %vm1053, %v3094, %v3098
        %v3114 = vsel %vm1053, %v3096, %v3100
        %v3115 = vsel %vm1053, %v3106, %v3094
        %v3116 = vsel %vm1053, %v3108, %v3096
        %v3117 = vld [vmem:[%s1062] ss:$8 sm:$0xf]
        %v3119 = vperm.slane %v3117, 0
        %v3120 = vperm.slane %v3117, 1
        %v3121 = vperm.slane %v3117, 2
        %v3122 = vperm.slane %v3117, 3
        %v3127 = vmul.f32 %v3113, %v3119
        %v3128 = vmul.f32 %v3111, %v3120
        %v3129 = vmul.f32 %v3109, %v3121
        %v3130 = vmul.f32 %v3115, %v3122
        %v3131 = vmul.f32 %v3114, %v3119
        %v3132 = vmul.f32 %v3112, %v3120
        %v3133 = vmul.f32 %v3110, %v3121
        %v3134 = vmul.f32 %v3116, %v3122
        %v3135 = vpack.c.bf16 %v3128, %v3127
        %v3136 = vpack.c.bf16 %v3130, %v3129
        %v3137 = vpack.c.bf16 %v3132, %v3131
        %v3138 = vpack.c.bf16 %v3134, %v3133
        %3139 = vst [vmem:[#allocation2 + $0x1c0] sm:$0xff] %v3135
        %3140 = vst [vmem:[#allocation2 + $0x1c8] sm:$0xff] %v3136
        %3141 = vst [vmem:[#allocation2 + $0x1d0] sm:$0xff] %v3137
        %3142 = vst [vmem:[#allocation2 + $0x1d8] sm:$0xff] %v3138
        %3143 = vrot.lane.b32.xlu0 %v2427, 121
        %v3144 = vpop.permute.xlu0 %3143
        %3145 = vrot.lane.b32.xlu0 %v2431, 121
        %v3146 = vpop.permute.xlu0 %3145
        %3147 = vrot.lane.b32.xlu0 %v2428, 121
        %v3148 = vpop.permute.xlu0 %3147
        %3149 = vrot.lane.b32.xlu0 %v2432, 121
        %v3150 = vpop.permute.xlu0 %3149
        %3151 = vrot.lane.b32.xlu0 %v2429, 121
        %v3152 = vpop.permute.xlu0 %3151
        %3153 = vrot.lane.b32.xlu0 %v2433, 121
        %v3154 = vpop.permute.xlu0 %3153
        %3155 = vrot.lane.b32.xlu0 %v2430, 121
        %v3156 = vpop.permute.xlu0 %3155
        %3157 = vrot.lane.b32.xlu0 %v2434, 121
        %v3158 = vpop.permute.xlu0 %3157
        %v3159 = vsel %vm1105, %v3152, %v3156
        %v3160 = vsel %vm1105, %v3154, %v3158
        %v3161 = vsel %vm1105, %v3148, %v3152
        %v3162 = vsel %vm1105, %v3150, %v3154
        %v3163 = vsel %vm1105, %v3144, %v3148
        %v3164 = vsel %vm1105, %v3146, %v3150
        %v3165 = vsel %vm1105, %v3156, %v3144
        %v3166 = vsel %vm1105, %v3158, %v3146
        %v3167 = vld [vmem:[%s1114] ss:$8 sm:$0xf]
        %v3169 = vperm.slane %v3167, 0
        %v3170 = vperm.slane %v3167, 1
        %v3171 = vperm.slane %v3167, 2
        %v3172 = vperm.slane %v3167, 3
        %v3177 = vmul.f32 %v3163, %v3169
        %v3178 = vmul.f32 %v3161, %v3170
        %v3179 = vmul.f32 %v3159, %v3171
        %v3180 = vmul.f32 %v3165, %v3172
        %v3181 = vmul.f32 %v3164, %v3169
        %v3182 = vmul.f32 %v3162, %v3170
        %v3183 = vmul.f32 %v3160, %v3171
        %v3184 = vmul.f32 %v3166, %v3172
        %v3185 = vpack.c.bf16 %v3178, %v3177
        %v3186 = vpack.c.bf16 %v3180, %v3179
        %v3187 = vpack.c.bf16 %v3182, %v3181
        %v3188 = vpack.c.bf16 %v3184, %v3183
        %3189 = vst [vmem:[#allocation2 + $0x1e0] sm:$0xff] %v3185
        %3190 = vst [vmem:[#allocation2 + $0x1e8] sm:$0xff] %v3186
        %3191 = vst [vmem:[#allocation2 + $0x1f0] sm:$0xff] %v3187
        %3192 = vst [vmem:[#allocation2 + $0x1f8] sm:$0xff] %v3188
        %3193 = vrot.lane.b32.xlu0 %v2427, 120
        %v3194 = vpop.permute.xlu0 %3193
        %3195 = vrot.lane.b32.xlu0 %v2431, 120
        %v3196 = vpop.permute.xlu0 %3195
        %3197 = vrot.lane.b32.xlu0 %v2428, 120
        %v3198 = vpop.permute.xlu0 %3197
        %3199 = vrot.lane.b32.xlu0 %v2432, 120
        %v3200 = vpop.permute.xlu0 %3199
        %3201 = vrot.lane.b32.xlu0 %v2429, 120
        %v3202 = vpop.permute.xlu0 %3201
        %3203 = vrot.lane.b32.xlu0 %v2433, 120
        %v3204 = vpop.permute.xlu0 %3203
        %3205 = vrot.lane.b32.xlu0 %v2430, 120
        %v3206 = vpop.permute.xlu0 %3205
        %3207 = vrot.lane.b32.xlu0 %v2434, 120
        %v3208 = vpop.permute.xlu0 %3207
        %v3209 = vsel %vm1157, %v3202, %v3206
        %v3210 = vsel %vm1157, %v3204, %v3208
        %v3211 = vsel %vm1157, %v3198, %v3202
        %v3212 = vsel %vm1157, %v3200, %v3204
        %v3213 = vsel %vm1157, %v3194, %v3198
        %v3214 = vsel %vm1157, %v3196, %v3200
        %v3215 = vsel %vm1157, %v3206, %v3194
        %v3216 = vsel %vm1157, %v3208, %v3196
        %v3217 = vld [vmem:[%s1166] ss:$8 sm:$0xf]
        %v3219 = vperm.slane %v3217, 0
        %v3220 = vperm.slane %v3217, 1
        %v3221 = vperm.slane %v3217, 2
        %v3222 = vperm.slane %v3217, 3
        %v3227 = vmul.f32 %v3213, %v3219
        %v3228 = vmul.f32 %v3211, %v3220
        %v3229 = vmul.f32 %v3209, %v3221
        %v3230 = vmul.f32 %v3215, %v3222
        %v3231 = vmul.f32 %v3214, %v3219
        %v3232 = vmul.f32 %v3212, %v3220
        %v3233 = vmul.f32 %v3210, %v3221
        %v3234 = vmul.f32 %v3216, %v3222
        %v3235 = vpack.c.bf16 %v3228, %v3227
        %v3236 = vpack.c.bf16 %v3230, %v3229
        %v3237 = vpack.c.bf16 %v3232, %v3231
        %v3238 = vpack.c.bf16 %v3234, %v3233
        %3239 = vst [vmem:[#allocation2 + $0x200] sm:$0xff] %v3235
        %3240 = vst [vmem:[#allocation2 + $0x208] sm:$0xff] %v3236
        %3241 = vst [vmem:[#allocation2 + $0x210] sm:$0xff] %v3237
        %3242 = vst [vmem:[#allocation2 + $0x218] sm:$0xff] %v3238
        %3243 = vrot.lane.b32.xlu0 %v2427, 119
        %v3244 = vpop.permute.xlu0 %3243
        %3245 = vrot.lane.b32.xlu0 %v2431, 119
        %v3246 = vpop.permute.xlu0 %3245
        %3247 = vrot.lane.b32.xlu0 %v2428, 119
        %v3248 = vpop.permute.xlu0 %3247
        %3249 = vrot.lane.b32.xlu0 %v2432, 119
        %v3250 = vpop.permute.xlu0 %3249
        %3251 = vrot.lane.b32.xlu0 %v2429, 119
        %v3252 = vpop.permute.xlu0 %3251
        %3253 = vrot.lane.b32.xlu0 %v2433, 119
        %v3254 = vpop.permute.xlu0 %3253
        %3255 = vrot.lane.b32.xlu0 %v2430, 119
        %v3256 = vpop.permute.xlu0 %3255
        %3257 = vrot.lane.b32.xlu0 %v2434, 119
        %v3258 = vpop.permute.xlu0 %3257
        %v3259 = vsel %vm1209, %v3252, %v3256
        %v3260 = vsel %vm1209, %v3254, %v3258
        %v3261 = vsel %vm1209, %v3248, %v3252
        %v3262 = vsel %vm1209, %v3250, %v3254
        %v3263 = vsel %vm1209, %v3244, %v3248
        %v3264 = vsel %vm1209, %v3246, %v3250
        %v3265 = vsel %vm1209, %v3256, %v3244
        %v3266 = vsel %vm1209, %v3258, %v3246
        %v3267 = vld [vmem:[%s1218] ss:$8 sm:$0xf]
        %v3269 = vperm.slane %v3267, 0
        %v3270 = vperm.slane %v3267, 1
        %v3271 = vperm.slane %v3267, 2
        %v3272 = vperm.slane %v3267, 3
        %v3277 = vmul.f32 %v3263, %v3269
        %v3278 = vmul.f32 %v3261, %v3270
        %v3279 = vmul.f32 %v3259, %v3271
        %v3280 = vmul.f32 %v3265, %v3272
        %v3281 = vmul.f32 %v3264, %v3269
        %v3282 = vmul.f32 %v3262, %v3270
        %v3283 = vmul.f32 %v3260, %v3271
        %v3284 = vmul.f32 %v3266, %v3272
        %v3285 = vpack.c.bf16 %v3278, %v3277
        %v3286 = vpack.c.bf16 %v3280, %v3279
        %v3287 = vpack.c.bf16 %v3282, %v3281
        %v3288 = vpack.c.bf16 %v3284, %v3283
        %3289 = vst [vmem:[#allocation2 + $0x220] sm:$0xff] %v3285
        %3290 = vst [vmem:[#allocation2 + $0x228] sm:$0xff] %v3286
        %3291 = vst [vmem:[#allocation2 + $0x230] sm:$0xff] %v3287
        %3292 = vst [vmem:[#allocation2 + $0x238] sm:$0xff] %v3288
        %v3293 = vld [vmem:[%s1245] ss:$8 sm:$0xf]
        %v3295 = vperm.slane %v3293, 0
        %v3296 = vperm.slane %v3293, 1
        %v3297 = vperm.slane %v3293, 2
        %v3298 = vperm.slane %v3293, 3
        %v3303 = vmul.f32 %v2455, %v3295
        %v3304 = vmul.f32 %v2453, %v3296
        %v3305 = vmul.f32 %v2451, %v3297
        %v3306 = vmul.f32 %v2457, %v3298
        %v3307 = vmul.f32 %v2456, %v3295
        %v3308 = vmul.f32 %v2454, %v3296
        %v3309 = vmul.f32 %v2452, %v3297
        %v3310 = vmul.f32 %v2458, %v3298
        %v3311 = vpack.c.bf16 %v3304, %v3303
        %v3312 = vpack.c.bf16 %v3306, %v3305
        %v3313 = vpack.c.bf16 %v3308, %v3307
        %v3314 = vpack.c.bf16 %v3310, %v3309
        %3315 = vst [vmem:[#allocation2 + $0x240] sm:$0xff] %v3311
        %3316 = vst [vmem:[#allocation2 + $0x248] sm:$0xff] %v3312
        %3317 = vst [vmem:[#allocation2 + $0x250] sm:$0xff] %v3313
        %3318 = vst [vmem:[#allocation2 + $0x258] sm:$0xff] %v3314
        %v3319 = vld [vmem:[%s1272] ss:$8 sm:$0xf]
        %v3321 = vperm.slane %v3319, 0
        %v3322 = vperm.slane %v3319, 1
        %v3323 = vperm.slane %v3319, 2
        %v3324 = vperm.slane %v3319, 3
        %v3329 = vmul.f32 %v2505, %v3321
        %v3330 = vmul.f32 %v2503, %v3322
        %v3331 = vmul.f32 %v2501, %v3323
        %v3332 = vmul.f32 %v2507, %v3324
        %v3333 = vmul.f32 %v2506, %v3321
        %v3334 = vmul.f32 %v2504, %v3322
        %v3335 = vmul.f32 %v2502, %v3323
        %v3336 = vmul.f32 %v2508, %v3324
        %v3337 = vpack.c.bf16 %v3330, %v3329
        %v3338 = vpack.c.bf16 %v3332, %v3331
        %v3339 = vpack.c.bf16 %v3334, %v3333
        %v3340 = vpack.c.bf16 %v3336, %v3335
        %3341 = vst [vmem:[#allocation2 + $0x260] sm:$0xff] %v3337
        %3342 = vst [vmem:[#allocation2 + $0x268] sm:$0xff] %v3338
        %3343 = vst [vmem:[#allocation2 + $0x270] sm:$0xff] %v3339
        %3344 = vst [vmem:[#allocation2 + $0x278] sm:$0xff] %v3340
        %v3345 = vld [vmem:[%s1299] ss:$8 sm:$0xf]
        %v3347 = vperm.slane %v3345, 0
        %v3348 = vperm.slane %v3345, 1
        %v3349 = vperm.slane %v3345, 2
        %v3350 = vperm.slane %v3345, 3
        %v3355 = vmul.f32 %v2555, %v3347
        %v3356 = vmul.f32 %v2553, %v3348
        %v3357 = vmul.f32 %v2551, %v3349
        %v3358 = vmul.f32 %v2557, %v3350
        %v3359 = vmul.f32 %v2556, %v3347
        %v3360 = vmul.f32 %v2554, %v3348
        %v3361 = vmul.f32 %v2552, %v3349
        %v3362 = vmul.f32 %v2558, %v3350
        %v3363 = vpack.c.bf16 %v3356, %v3355
        %v3364 = vpack.c.bf16 %v3358, %v3357
        %v3365 = vpack.c.bf16 %v3360, %v3359
        %v3366 = vpack.c.bf16 %v3362, %v3361
        %3367 = vst [vmem:[#allocation2 + $0x280] sm:$0xff] %v3363
        %3368 = vst [vmem:[#allocation2 + $0x288] sm:$0xff] %v3364
        %3369 = vst [vmem:[#allocation2 + $0x290] sm:$0xff] %v3365
        %3370 = vst [vmem:[#allocation2 + $0x298] sm:$0xff] %v3366
        %v3371 = vld [vmem:[%s1326] ss:$8 sm:$0xf]
        %v3373 = vperm.slane %v3371, 0
        %v3374 = vperm.slane %v3371, 1
        %v3375 = vperm.slane %v3371, 2
        %v3376 = vperm.slane %v3371, 3
        %v3381 = vmul.f32 %v2605, %v3373
        %v3382 = vmul.f32 %v2603, %v3374
        %v3383 = vmul.f32 %v2601, %v3375
        %v3384 = vmul.f32 %v2607, %v3376
        %v3385 = vmul.f32 %v2606, %v3373
        %v3386 = vmul.f32 %v2604, %v3374
        %v3387 = vmul.f32 %v2602, %v3375
        %v3388 = vmul.f32 %v2608, %v3376
        %v3389 = vpack.c.bf16 %v3382, %v3381
        %v3390 = vpack.c.bf16 %v3384, %v3383
        %v3391 = vpack.c.bf16 %v3386, %v3385
        %v3392 = vpack.c.bf16 %v3388, %v3387
        %3393 = vst [vmem:[#allocation2 + $0x2a0] sm:$0xff] %v3389
        %3394 = vst [vmem:[#allocation2 + $0x2a8] sm:$0xff] %v3390
        %3395 = vst [vmem:[#allocation2 + $0x2b0] sm:$0xff] %v3391
        %3396 = vst [vmem:[#allocation2 + $0x2b8] sm:$0xff] %v3392
        %v3397 = vld [vmem:[%s1353] ss:$8 sm:$0xf]
        %v3399 = vperm.slane %v3397, 0
        %v3400 = vperm.slane %v3397, 1
        %v3401 = vperm.slane %v3397, 2
        %v3402 = vperm.slane %v3397, 3
        %v3407 = vmul.f32 %v2655, %v3399
        %v3408 = vmul.f32 %v2653, %v3400
        %v3409 = vmul.f32 %v2651, %v3401
        %v3410 = vmul.f32 %v2657, %v3402
        %v3411 = vmul.f32 %v2656, %v3399
        %v3412 = vmul.f32 %v2654, %v3400
        %v3413 = vmul.f32 %v2652, %v3401
        %v3414 = vmul.f32 %v2658, %v3402
        %v3415 = vpack.c.bf16 %v3408, %v3407
        %v3416 = vpack.c.bf16 %v3410, %v3409
        %v3417 = vpack.c.bf16 %v3412, %v3411
        %v3418 = vpack.c.bf16 %v3414, %v3413
        %3419 = vst [vmem:[#allocation2 + $0x2c0] sm:$0xff] %v3415
        %3420 = vst [vmem:[#allocation2 + $0x2c8] sm:$0xff] %v3416
        %3421 = vst [vmem:[#allocation2 + $0x2d0] sm:$0xff] %v3417
        %3422 = vst [vmem:[#allocation2 + $0x2d8] sm:$0xff] %v3418
        %v3423 = vld [vmem:[%s1380] ss:$8 sm:$0xf]
        %v3425 = vperm.slane %v3423, 0
        %v3426 = vperm.slane %v3423, 1
        %v3427 = vperm.slane %v3423, 2
        %v3428 = vperm.slane %v3423, 3
        %v3433 = vmul.f32 %v2705, %v3425
        %v3434 = vmul.f32 %v2703, %v3426
        %v3435 = vmul.f32 %v2701, %v3427
        %v3436 = vmul.f32 %v2707, %v3428
        %v3437 = vmul.f32 %v2706, %v3425
        %v3438 = vmul.f32 %v2704, %v3426
        %v3439 = vmul.f32 %v2702, %v3427
        %v3440 = vmul.f32 %v2708, %v3428
        %v3441 = vpack.c.bf16 %v3434, %v3433
        %v3442 = vpack.c.bf16 %v3436, %v3435
        %v3443 = vpack.c.bf16 %v3438, %v3437
        %v3444 = vpack.c.bf16 %v3440, %v3439
        %3445 = vst [vmem:[#allocation2 + $0x2e0] sm:$0xff] %v3441
        %3446 = vst [vmem:[#allocation2 + $0x2e8] sm:$0xff] %v3442
        %3447 = vst [vmem:[#allocation2 + $0x2f0] sm:$0xff] %v3443
        %3448 = vst [vmem:[#allocation2 + $0x2f8] sm:$0xff] %v3444
        %v3449 = vld [vmem:[%s1407] ss:$8 sm:$0xf]
        %v3451 = vperm.slane %v3449, 0
        %v3452 = vperm.slane %v3449, 1
        %v3453 = vperm.slane %v3449, 2
        %v3454 = vperm.slane %v3449, 3
        %v3459 = vmul.f32 %v2755, %v3451
        %v3460 = vmul.f32 %v2753, %v3452
        %v3461 = vmul.f32 %v2751, %v3453
        %v3462 = vmul.f32 %v2757, %v3454
        %v3463 = vmul.f32 %v2756, %v3451
        %v3464 = vmul.f32 %v2754, %v3452
        %v3465 = vmul.f32 %v2752, %v3453
        %v3466 = vmul.f32 %v2758, %v3454
        %v3467 = vpack.c.bf16 %v3460, %v3459
        %v3468 = vpack.c.bf16 %v3462, %v3461
        %v3469 = vpack.c.bf16 %v3464, %v3463
        %v3470 = vpack.c.bf16 %v3466, %v3465
        %3471 = vst [vmem:[#allocation2 + $0x300] sm:$0xff] %v3467
        %3472 = vst [vmem:[#allocation2 + $0x308] sm:$0xff] %v3468
        %3473 = vst [vmem:[#allocation2 + $0x310] sm:$0xff] %v3469
        %3474 = vst [vmem:[#allocation2 + $0x318] sm:$0xff] %v3470
        %v3475 = vld [vmem:[%s1434] ss:$8 sm:$0xf]
        %v3477 = vperm.slane %v3475, 0
        %v3478 = vperm.slane %v3475, 1
        %v3479 = vperm.slane %v3475, 2
        %v3480 = vperm.slane %v3475, 3
        %v3485 = vmul.f32 %v2805, %v3477
        %v3486 = vmul.f32 %v2803, %v3478
        %v3487 = vmul.f32 %v2801, %v3479
        %v3488 = vmul.f32 %v2807, %v3480
        %v3489 = vmul.f32 %v2806, %v3477
        %v3490 = vmul.f32 %v2804, %v3478
        %v3491 = vmul.f32 %v2802, %v3479
        %v3492 = vmul.f32 %v2808, %v3480
        %v3493 = vpack.c.bf16 %v3486, %v3485
        %v3494 = vpack.c.bf16 %v3488, %v3487
        %v3495 = vpack.c.bf16 %v3490, %v3489
        %v3496 = vpack.c.bf16 %v3492, %v3491
        %3497 = vst [vmem:[#allocation2 + $0x320] sm:$0xff] %v3493
        %3498 = vst [vmem:[#allocation2 + $0x328] sm:$0xff] %v3494
        %3499 = vst [vmem:[#allocation2 + $0x330] sm:$0xff] %v3495
        %3500 = vst [vmem:[#allocation2 + $0x338] sm:$0xff] %v3496
        %v3501 = vld [vmem:[%s1461] ss:$8 sm:$0xf]
        %v3503 = vperm.slane %v3501, 0
        %v3504 = vperm.slane %v3501, 1
        %v3505 = vperm.slane %v3501, 2
        %v3506 = vperm.slane %v3501, 3
        %v3511 = vmul.f32 %v2855, %v3503
        %v3512 = vmul.f32 %v2853, %v3504
        %v3513 = vmul.f32 %v2851, %v3505
        %v3514 = vmul.f32 %v2857, %v3506
        %v3515 = vmul.f32 %v2856, %v3503
        %v3516 = vmul.f32 %v2854, %v3504
        %v3517 = vmul.f32 %v2852, %v3505
        %v3518 = vmul.f32 %v2858, %v3506
        %v3519 = vpack.c.bf16 %v3512, %v3511
        %v3520 = vpack.c.bf16 %v3514, %v3513
        %v3521 = vpack.c.bf16 %v3516, %v3515
        %v3522 = vpack.c.bf16 %v3518, %v3517
        %3523 = vst [vmem:[#allocation2 + $0x340] sm:$0xff] %v3519
        %3524 = vst [vmem:[#allocation2 + $0x348] sm:$0xff] %v3520
        %3525 = vst [vmem:[#allocation2 + $0x350] sm:$0xff] %v3521
        %3526 = vst [vmem:[#allocation2 + $0x358] sm:$0xff] %v3522
        %v3527 = vld [vmem:[#allocation2] sm:$0xff]
        %v3528 = vld [vmem:[#allocation2 + $0x8] sm:$0xff]
        %v3529 = vld [vmem:[#allocation2 + $0x10] sm:$0xff]
        %v3530 = vld [vmem:[#allocation2 + $0x18] sm:$0xff]
        %v3531 = vld [vmem:[#allocation2 + $0x20] sm:$0xff]
        %v3532 = vld [vmem:[#allocation2 + $0x28] sm:$0xff]
        %v3533 = vld [vmem:[#allocation2 + $0x30] sm:$0xff]
        %v3534 = vld [vmem:[#allocation2 + $0x38] sm:$0xff]
        %v3535 = vld [vmem:[#allocation2 + $0x40] sm:$0xff]
        %v3536 = vld [vmem:[#allocation2 + $0x48] sm:$0xff]
        %v3537 = vld [vmem:[#allocation2 + $0x50] sm:$0xff]
        %v3538 = vld [vmem:[#allocation2 + $0x58] sm:$0xff]
        %v3539 = vld [vmem:[#allocation2 + $0x60] sm:$0xff]
        %v3540 = vld [vmem:[#allocation2 + $0x68] sm:$0xff]
        %v3541 = vld [vmem:[#allocation2 + $0x70] sm:$0xff]
        %v3542 = vld [vmem:[#allocation2 + $0x78] sm:$0xff]
        %v3543 = vld [vmem:[#allocation2 + $0x80] sm:$0xff]
        %v3544 = vld [vmem:[#allocation2 + $0x88] sm:$0xff]
        %v3545 = vld [vmem:[#allocation2 + $0x90] sm:$0xff]
        %v3546 = vld [vmem:[#allocation2 + $0x98] sm:$0xff]
        %v3547 = vld [vmem:[#allocation2 + $0xa0] sm:$0xff]
        %v3548 = vld [vmem:[#allocation2 + $0xa8] sm:$0xff]
        %v3549 = vld [vmem:[#allocation2 + $0xb0] sm:$0xff]
        %v3550 = vld [vmem:[#allocation2 + $0xb8] sm:$0xff]
        %v3551 = vld [vmem:[#allocation2 + $0xc0] sm:$0xff]
        %v3552 = vld [vmem:[#allocation2 + $0xc8] sm:$0xff]
        %v3553 = vld [vmem:[#allocation2 + $0xd0] sm:$0xff]
        %v3554 = vld [vmem:[#allocation2 + $0xd8] sm:$0xff]
        %v3555 = vld [vmem:[#allocation2 + $0xe0] sm:$0xff]
        %v3556 = vld [vmem:[#allocation2 + $0xe8] sm:$0xff]
        %v3557 = vld [vmem:[#allocation2 + $0xf0] sm:$0xff]
        %v3558 = vld [vmem:[#allocation2 + $0xf8] sm:$0xff]
        %v3559 = vld [vmem:[#allocation2 + $0x100] sm:$0xff]
        %v3560 = vld [vmem:[#allocation2 + $0x108] sm:$0xff]
        %v3561 = vld [vmem:[#allocation2 + $0x110] sm:$0xff]
        %v3562 = vld [vmem:[#allocation2 + $0x118] sm:$0xff]
        %v3563 = vld [vmem:[#allocation2 + $0x120] sm:$0xff]
        %v3564 = vld [vmem:[#allocation2 + $0x128] sm:$0xff]
        %v3565 = vld [vmem:[#allocation2 + $0x130] sm:$0xff]
        %v3566 = vld [vmem:[#allocation2 + $0x138] sm:$0xff]
        %v3567 = vld [vmem:[#allocation2 + $0x140] sm:$0xff]
        %v3568 = vld [vmem:[#allocation2 + $0x148] sm:$0xff]
        %v3569 = vld [vmem:[#allocation2 + $0x150] sm:$0xff]
        %v3570 = vld [vmem:[#allocation2 + $0x158] sm:$0xff]
        %v3571 = vld [vmem:[#allocation2 + $0x160] sm:$0xff]
        %v3572 = vld [vmem:[#allocation2 + $0x168] sm:$0xff]
        %v3573 = vld [vmem:[#allocation2 + $0x170] sm:$0xff]
        %v3574 = vld [vmem:[#allocation2 + $0x178] sm:$0xff]
        %v3575 = vld [vmem:[#allocation2 + $0x180] sm:$0xff]
        %v3576 = vld [vmem:[#allocation2 + $0x188] sm:$0xff]
        %v3577 = vld [vmem:[#allocation2 + $0x190] sm:$0xff]
        %v3578 = vld [vmem:[#allocation2 + $0x198] sm:$0xff]
        %v3579 = vld [vmem:[#allocation2 + $0x1a0] sm:$0xff]
        %v3580 = vld [vmem:[#allocation2 + $0x1a8] sm:$0xff]
        %v3581 = vld [vmem:[#allocation2 + $0x1b0] sm:$0xff]
        %v3582 = vld [vmem:[#allocation2 + $0x1b8] sm:$0xff]
        %v3583 = vld [vmem:[#allocation2 + $0x1c0] sm:$0xff]
        %v3584 = vld [vmem:[#allocation2 + $0x1c8] sm:$0xff]
        %v3585 = vld [vmem:[#allocation2 + $0x1d0] sm:$0xff]
        %v3586 = vld [vmem:[#allocation2 + $0x1d8] sm:$0xff]
        %v3587 = vld [vmem:[#allocation2 + $0x1e0] sm:$0xff]
        %v3588 = vld [vmem:[#allocation2 + $0x1e8] sm:$0xff]
        %v3589 = vld [vmem:[#allocation2 + $0x1f0] sm:$0xff]
        %v3590 = vld [vmem:[#allocation2 + $0x1f8] sm:$0xff]
        %v3591 = vld [vmem:[#allocation2 + $0x200] sm:$0xff]
        %v3592 = vld [vmem:[#allocation2 + $0x208] sm:$0xff]
        %v3593 = vld [vmem:[#allocation2 + $0x210] sm:$0xff]
        %v3594 = vld [vmem:[#allocation2 + $0x218] sm:$0xff]
        %v3595 = vld [vmem:[#allocation2 + $0x220] sm:$0xff]
        %v3596 = vld [vmem:[#allocation2 + $0x228] sm:$0xff]
        %v3597 = vld [vmem:[#allocation2 + $0x230] sm:$0xff]
        %v3598 = vld [vmem:[#allocation2 + $0x238] sm:$0xff]
        %v3599 = vld [vmem:[#allocation2 + $0x240] sm:$0xff]
        %v3600 = vld [vmem:[#allocation2 + $0x248] sm:$0xff]
        %v3601 = vld [vmem:[#allocation2 + $0x250] sm:$0xff]
        %v3602 = vld [vmem:[#allocation2 + $0x258] sm:$0xff]
        %v3603 = vld [vmem:[#allocation2 + $0x260] sm:$0xff]
        %v3604 = vld [vmem:[#allocation2 + $0x268] sm:$0xff]
        %v3605 = vld [vmem:[#allocation2 + $0x270] sm:$0xff]
        %v3606 = vld [vmem:[#allocation2 + $0x278] sm:$0xff]
        %v3607 = vld [vmem:[#allocation2 + $0x280] sm:$0xff]
        %v3608 = vld [vmem:[#allocation2 + $0x288] sm:$0xff]
        %v3609 = vld [vmem:[#allocation2 + $0x290] sm:$0xff]
        %v3610 = vld [vmem:[#allocation2 + $0x298] sm:$0xff]
        %v3611 = vld [vmem:[#allocation2 + $0x2a0] sm:$0xff]
        %v3612 = vld [vmem:[#allocation2 + $0x2a8] sm:$0xff]
        %v3613 = vld [vmem:[#allocation2 + $0x2b0] sm:$0xff]
        %v3614 = vld [vmem:[#allocation2 + $0x2b8] sm:$0xff]
        %v3615 = vld [vmem:[#allocation2 + $0x2c0] sm:$0xff]
        %v3616 = vld [vmem:[#allocation2 + $0x2c8] sm:$0xff]
        %v3617 = vld [vmem:[#allocation2 + $0x2d0] sm:$0xff]
        %v3618 = vld [vmem:[#allocation2 + $0x2d8] sm:$0xff]
        %v3619 = vld [vmem:[#allocation2 + $0x2e0] sm:$0xff]
        %v3620 = vld [vmem:[#allocation2 + $0x2e8] sm:$0xff]
        %v3621 = vld [vmem:[#allocation2 + $0x2f0] sm:$0xff]
        %v3622 = vld [vmem:[#allocation2 + $0x2f8] sm:$0xff]
        %v3623 = vld [vmem:[#allocation2 + $0x300] sm:$0xff]
        %v3624 = vld [vmem:[#allocation2 + $0x308] sm:$0xff]
        %v3625 = vld [vmem:[#allocation2 + $0x310] sm:$0xff]
        %v3626 = vld [vmem:[#allocation2 + $0x318] sm:$0xff]
        %v3627 = vld [vmem:[#allocation2 + $0x320] sm:$0xff]
        %v3628 = vld [vmem:[#allocation2 + $0x328] sm:$0xff]
        %v3629 = vld [vmem:[#allocation2 + $0x330] sm:$0xff]
        %v3630 = vld [vmem:[#allocation2 + $0x338] sm:$0xff]
        %v3631 = vld [vmem:[#allocation2 + $0x340] sm:$0xff]
        %v3632 = vld [vmem:[#allocation2 + $0x348] sm:$0xff]
        %v3633 = vld [vmem:[#allocation2 + $0x350] sm:$0xff]
        %v3634 = vld [vmem:[#allocation2 + $0x358] sm:$0xff]
        %v3635 = vld [vmem:[%s5] sm:$0xff]
        %v3636 = vld [vmem:[%s5 + $0x8] sm:$0xff]
        %v3637 = vld [vmem:[%s5 + $0x10] sm:$0xff]
        %v3638 = vld [vmem:[%s5 + $0x18] sm:$0xff]
        %v3643 = vunpack.c.l.b16 %v3635
        %v3644 = vunpack.c.h.b16 %v3635
        %v3645 = vunpack.c.l.b16 %v3636
        %v3646 = vunpack.c.h.b16 %v3636
        %v3647 = vunpack.c.l.b16 %v3637
        %v3648 = vunpack.c.h.b16 %v3637
        %v3649 = vunpack.c.l.b16 %v3638
        %v3650 = vunpack.c.h.b16 %v3638
        %v3651 = vpack.c.b16 %v3647, %v3643
        %v3652 = vpack.c.b16 %v3648, %v3644
        %v3653 = vpack.c.b16 %v3649, %v3645
        %v3654 = vpack.c.b16 %v3650, %v3646
        %v3766 = vunpack.c.l.b16 %v3527
        %v3767 = vunpack.c.h.b16 %v3527
        %v3768 = vunpack.c.l.b16 %v3528
        %v3769 = vunpack.c.h.b16 %v3528
        %v3770 = vunpack.c.l.b16 %v3529
        %v3771 = vunpack.c.h.b16 %v3529
        %v3772 = vunpack.c.l.b16 %v3530
        %v3773 = vunpack.c.h.b16 %v3530
        %v3774 = vunpack.c.l.b16 %v3531
        %v3775 = vunpack.c.h.b16 %v3531
        %v3776 = vunpack.c.l.b16 %v3532
        %v3777 = vunpack.c.h.b16 %v3532
        %v3778 = vunpack.c.l.b16 %v3533
        %v3779 = vunpack.c.h.b16 %v3533
        %v3780 = vunpack.c.l.b16 %v3534
        %v3781 = vunpack.c.h.b16 %v3534
        %v3782 = vunpack.c.l.b16 %v3535
        %v3783 = vunpack.c.h.b16 %v3535
        %v3784 = vunpack.c.l.b16 %v3536
        %v3785 = vunpack.c.h.b16 %v3536
        %v3786 = vunpack.c.l.b16 %v3537
        %v3787 = vunpack.c.h.b16 %v3537
        %v3788 = vunpack.c.l.b16 %v3538
        %v3789 = vunpack.c.h.b16 %v3538
        %v3790 = vunpack.c.l.b16 %v3539
        %v3791 = vunpack.c.h.b16 %v3539
        %v3792 = vunpack.c.l.b16 %v3540
        %v3793 = vunpack.c.h.b16 %v3540
        %v3794 = vunpack.c.l.b16 %v3541
        %v3795 = vunpack.c.h.b16 %v3541
        %v3796 = vunpack.c.l.b16 %v3542
        %v3797 = vunpack.c.h.b16 %v3542
        %v3798 = vunpack.c.l.b16 %v3543
        %v3799 = vunpack.c.h.b16 %v3543
        %v3800 = vunpack.c.l.b16 %v3544
        %v3801 = vunpack.c.h.b16 %v3544
        %v3802 = vunpack.c.l.b16 %v3545
        %v3803 = vunpack.c.h.b16 %v3545
        %v3804 = vunpack.c.l.b16 %v3546
        %v3805 = vunpack.c.h.b16 %v3546
        %v3806 = vunpack.c.l.b16 %v3547
        %v3807 = vunpack.c.h.b16 %v3547
        %v3808 = vunpack.c.l.b16 %v3548
        %v3809 = vunpack.c.h.b16 %v3548
        %v3810 = vunpack.c.l.b16 %v3549
        %v3811 = vunpack.c.h.b16 %v3549
        %v3812 = vunpack.c.l.b16 %v3550
        %v3813 = vunpack.c.h.b16 %v3550
        %v3814 = vunpack.c.l.b16 %v3551
        %v3815 = vunpack.c.h.b16 %v3551
        %v3816 = vunpack.c.l.b16 %v3552
        %v3817 = vunpack.c.h.b16 %v3552
        %v3818 = vunpack.c.l.b16 %v3553
        %v3819 = vunpack.c.h.b16 %v3553
        %v3820 = vunpack.c.l.b16 %v3554
        %v3821 = vunpack.c.h.b16 %v3554
        %v3822 = vunpack.c.l.b16 %v3555
        %v3823 = vunpack.c.h.b16 %v3555
        %v3824 = vunpack.c.l.b16 %v3556
        %v3825 = vunpack.c.h.b16 %v3556
        %v3826 = vunpack.c.l.b16 %v3557
        %v3827 = vunpack.c.h.b16 %v3557
        %v3828 = vunpack.c.l.b16 %v3558
        %v3829 = vunpack.c.h.b16 %v3558
        %v3830 = vunpack.c.l.b16 %v3559
        %v3831 = vunpack.c.h.b16 %v3559
        %v3832 = vunpack.c.l.b16 %v3560
        %v3833 = vunpack.c.h.b16 %v3560
        %v3834 = vunpack.c.l.b16 %v3561
        %v3835 = vunpack.c.h.b16 %v3561
        %v3836 = vunpack.c.l.b16 %v3562
        %v3837 = vunpack.c.h.b16 %v3562
        %v3838 = vunpack.c.l.b16 %v3563
        %v3839 = vunpack.c.h.b16 %v3563
        %v3840 = vunpack.c.l.b16 %v3564
        %v3841 = vunpack.c.h.b16 %v3564
        %v3842 = vunpack.c.l.b16 %v3565
        %v3843 = vunpack.c.h.b16 %v3565
        %v3844 = vunpack.c.l.b16 %v3566
        %v3845 = vunpack.c.h.b16 %v3566
        %v3846 = vunpack.c.l.b16 %v3567
        %v3847 = vunpack.c.h.b16 %v3567
        %v3848 = vunpack.c.l.b16 %v3568
        %v3849 = vunpack.c.h.b16 %v3568
        %v3850 = vunpack.c.l.b16 %v3569
        %v3851 = vunpack.c.h.b16 %v3569
        %v3852 = vunpack.c.l.b16 %v3570
        %v3853 = vunpack.c.h.b16 %v3570
        %v3854 = vunpack.c.l.b16 %v3571
        %v3855 = vunpack.c.h.b16 %v3571
        %v3856 = vunpack.c.l.b16 %v3572
        %v3857 = vunpack.c.h.b16 %v3572
        %v3858 = vunpack.c.l.b16 %v3573
        %v3859 = vunpack.c.h.b16 %v3573
        %v3860 = vunpack.c.l.b16 %v3574
        %v3861 = vunpack.c.h.b16 %v3574
        %v3862 = vunpack.c.l.b16 %v3575
        %v3863 = vunpack.c.h.b16 %v3575
        %v3864 = vunpack.c.l.b16 %v3576
        %v3865 = vunpack.c.h.b16 %v3576
        %v3866 = vunpack.c.l.b16 %v3577
        %v3867 = vunpack.c.h.b16 %v3577
        %v3868 = vunpack.c.l.b16 %v3578
        %v3869 = vunpack.c.h.b16 %v3578
        %v3870 = vunpack.c.l.b16 %v3579
        %v3871 = vunpack.c.h.b16 %v3579
        %v3872 = vunpack.c.l.b16 %v3580
        %v3873 = vunpack.c.h.b16 %v3580
        %v3874 = vunpack.c.l.b16 %v3581
        %v3875 = vunpack.c.h.b16 %v3581
        %v3876 = vunpack.c.l.b16 %v3582
        %v3877 = vunpack.c.h.b16 %v3582
        %v3878 = vunpack.c.l.b16 %v3583
        %v3879 = vunpack.c.h.b16 %v3583
        %v3880 = vunpack.c.l.b16 %v3584
        %v3881 = vunpack.c.h.b16 %v3584
        %v3882 = vunpack.c.l.b16 %v3585
        %v3883 = vunpack.c.h.b16 %v3585
        %v3884 = vunpack.c.l.b16 %v3586
        %v3885 = vunpack.c.h.b16 %v3586
        %v3886 = vunpack.c.l.b16 %v3587
        %v3887 = vunpack.c.h.b16 %v3587
        %v3888 = vunpack.c.l.b16 %v3588
        %v3889 = vunpack.c.h.b16 %v3588
        %v3890 = vunpack.c.l.b16 %v3589
        %v3891 = vunpack.c.h.b16 %v3589
        %v3892 = vunpack.c.l.b16 %v3590
        %v3893 = vunpack.c.h.b16 %v3590
        %v3894 = vunpack.c.l.b16 %v3591
        %v3895 = vunpack.c.h.b16 %v3591
        %v3896 = vunpack.c.l.b16 %v3592
        %v3897 = vunpack.c.h.b16 %v3592
        %v3898 = vunpack.c.l.b16 %v3593
        %v3899 = vunpack.c.h.b16 %v3593
        %v3900 = vunpack.c.l.b16 %v3594
        %v3901 = vunpack.c.h.b16 %v3594
        %v3902 = vunpack.c.l.b16 %v3595
        %v3903 = vunpack.c.h.b16 %v3595
        %v3904 = vunpack.c.l.b16 %v3596
        %v3905 = vunpack.c.h.b16 %v3596
        %v3906 = vunpack.c.l.b16 %v3597
        %v3907 = vunpack.c.h.b16 %v3597
        %v3908 = vunpack.c.l.b16 %v3598
        %v3909 = vunpack.c.h.b16 %v3598
        %v3910 = vunpack.c.l.b16 %v3599
        %v3911 = vunpack.c.h.b16 %v3599
        %v3912 = vunpack.c.l.b16 %v3600
        %v3913 = vunpack.c.h.b16 %v3600
        %v3914 = vunpack.c.l.b16 %v3601
        %v3915 = vunpack.c.h.b16 %v3601
        %v3916 = vunpack.c.l.b16 %v3602
        %v3917 = vunpack.c.h.b16 %v3602
        %v3918 = vunpack.c.l.b16 %v3603
        %v3919 = vunpack.c.h.b16 %v3603
        %v3920 = vunpack.c.l.b16 %v3604
        %v3921 = vunpack.c.h.b16 %v3604
        %v3922 = vunpack.c.l.b16 %v3605
        %v3923 = vunpack.c.h.b16 %v3605
        %v3924 = vunpack.c.l.b16 %v3606
        %v3925 = vunpack.c.h.b16 %v3606
        %v3926 = vunpack.c.l.b16 %v3607
        %v3927 = vunpack.c.h.b16 %v3607
        %v3928 = vunpack.c.l.b16 %v3608
        %v3929 = vunpack.c.h.b16 %v3608
        %v3930 = vunpack.c.l.b16 %v3609
        %v3931 = vunpack.c.h.b16 %v3609
        %v3932 = vunpack.c.l.b16 %v3610
        %v3933 = vunpack.c.h.b16 %v3610
        %v3934 = vunpack.c.l.b16 %v3611
        %v3935 = vunpack.c.h.b16 %v3611
        %v3936 = vunpack.c.l.b16 %v3612
        %v3937 = vunpack.c.h.b16 %v3612
        %v3938 = vunpack.c.l.b16 %v3613
        %v3939 = vunpack.c.h.b16 %v3613
        %v3940 = vunpack.c.l.b16 %v3614
        %v3941 = vunpack.c.h.b16 %v3614
        %v3942 = vunpack.c.l.b16 %v3615
        %v3943 = vunpack.c.h.b16 %v3615
        %v3944 = vunpack.c.l.b16 %v3616
        %v3945 = vunpack.c.h.b16 %v3616
        %v3946 = vunpack.c.l.b16 %v3617
        %v3947 = vunpack.c.h.b16 %v3617
        %v3948 = vunpack.c.l.b16 %v3618
        %v3949 = vunpack.c.h.b16 %v3618
        %v3950 = vunpack.c.l.b16 %v3619
        %v3951 = vunpack.c.h.b16 %v3619
        %v3952 = vunpack.c.l.b16 %v3620
        %v3953 = vunpack.c.h.b16 %v3620
        %v3954 = vunpack.c.l.b16 %v3621
        %v3955 = vunpack.c.h.b16 %v3621
        %v3956 = vunpack.c.l.b16 %v3622
        %v3957 = vunpack.c.h.b16 %v3622
        %v3958 = vunpack.c.l.b16 %v3623
        %v3959 = vunpack.c.h.b16 %v3623
        %v3960 = vunpack.c.l.b16 %v3624
        %v3961 = vunpack.c.h.b16 %v3624
        %v3962 = vunpack.c.l.b16 %v3625
        %v3963 = vunpack.c.h.b16 %v3625
        %v3964 = vunpack.c.l.b16 %v3626
        %v3965 = vunpack.c.h.b16 %v3626
        %v3966 = vunpack.c.l.b16 %v3627
        %v3967 = vunpack.c.h.b16 %v3627
        %v3968 = vunpack.c.l.b16 %v3628
        %v3969 = vunpack.c.h.b16 %v3628
        %v3970 = vunpack.c.l.b16 %v3629
        %v3971 = vunpack.c.h.b16 %v3629
        %v3972 = vunpack.c.l.b16 %v3630
        %v3973 = vunpack.c.h.b16 %v3630
        %v3974 = vunpack.c.l.b16 %v3631
        %v3975 = vunpack.c.h.b16 %v3631
        %v3976 = vunpack.c.l.b16 %v3632
        %v3977 = vunpack.c.h.b16 %v3632
        %v3978 = vunpack.c.l.b16 %v3633
        %v3979 = vunpack.c.h.b16 %v3633
        %v3980 = vunpack.c.l.b16 %v3634
        %v3981 = vunpack.c.h.b16 %v3634
        %v3982 = vpack.c.b16 %v3770, %v3766
        %v3983 = vpack.c.b16 %v3771, %v3767
        %v3984 = vpack.c.b16 %v3772, %v3768
        %v3985 = vpack.c.b16 %v3773, %v3769
        %v3986 = vpack.c.b16 %v3778, %v3774
        %v3987 = vpack.c.b16 %v3779, %v3775
        %v3988 = vpack.c.b16 %v3780, %v3776
        %v3989 = vpack.c.b16 %v3781, %v3777
        %v3990 = vpack.c.b16 %v3786, %v3782
        %v3991 = vpack.c.b16 %v3787, %v3783
        %v3992 = vpack.c.b16 %v3788, %v3784
        %v3993 = vpack.c.b16 %v3789, %v3785
        %v3994 = vpack.c.b16 %v3794, %v3790
        %v3995 = vpack.c.b16 %v3795, %v3791
        %v3996 = vpack.c.b16 %v3796, %v3792
        %v3997 = vpack.c.b16 %v3797, %v3793
        %v3998 = vpack.c.b16 %v3802, %v3798
        %v3999 = vpack.c.b16 %v3803, %v3799
        %v4000 = vpack.c.b16 %v3804, %v3800
        %v4001 = vpack.c.b16 %v3805, %v3801
        %v4002 = vpack.c.b16 %v3810, %v3806
        %v4003 = vpack.c.b16 %v3811, %v3807
        %v4004 = vpack.c.b16 %v3812, %v3808
        %v4005 = vpack.c.b16 %v3813, %v3809
        %v4006 = vpack.c.b16 %v3818, %v3814
        %v4007 = vpack.c.b16 %v3819, %v3815
        %v4008 = vpack.c.b16 %v3820, %v3816
        %v4009 = vpack.c.b16 %v3821, %v3817
        %v4010 = vpack.c.b16 %v3826, %v3822
        %v4011 = vpack.c.b16 %v3827, %v3823
        %v4012 = vpack.c.b16 %v3828, %v3824
        %v4013 = vpack.c.b16 %v3829, %v3825
        %v4014 = vpack.c.b16 %v3834, %v3830
        %v4015 = vpack.c.b16 %v3835, %v3831
        %v4016 = vpack.c.b16 %v3836, %v3832
        %v4017 = vpack.c.b16 %v3837, %v3833
        %v4018 = vpack.c.b16 %v3842, %v3838
        %v4019 = vpack.c.b16 %v3843, %v3839
        %v4020 = vpack.c.b16 %v3844, %v3840
        %v4021 = vpack.c.b16 %v3845, %v3841
        %v4022 = vpack.c.b16 %v3850, %v3846
        %v4023 = vpack.c.b16 %v3851, %v3847
        %v4024 = vpack.c.b16 %v3852, %v3848
        %v4025 = vpack.c.b16 %v3853, %v3849
        %v4026 = vpack.c.b16 %v3858, %v3854
        %v4027 = vpack.c.b16 %v3859, %v3855
        %v4028 = vpack.c.b16 %v3860, %v3856
        %v4029 = vpack.c.b16 %v3861, %v3857
        %v4030 = vpack.c.b16 %v3866, %v3862
        %v4031 = vpack.c.b16 %v3867, %v3863
        %v4032 = vpack.c.b16 %v3868, %v3864
        %v4033 = vpack.c.b16 %v3869, %v3865
        %v4034 = vpack.c.b16 %v3874, %v3870
        %v4035 = vpack.c.b16 %v3875, %v3871
        %v4036 = vpack.c.b16 %v3876, %v3872
        %v4037 = vpack.c.b16 %v3877, %v3873
        %v4038 = vpack.c.b16 %v3882, %v3878
        %v4039 = vpack.c.b16 %v3883, %v3879
        %v4040 = vpack.c.b16 %v3884, %v3880
        %v4041 = vpack.c.b16 %v3885, %v3881
        %v4042 = vpack.c.b16 %v3890, %v3886
        %v4043 = vpack.c.b16 %v3891, %v3887
        %v4044 = vpack.c.b16 %v3892, %v3888
        %v4045 = vpack.c.b16 %v3893, %v3889
        %v4046 = vpack.c.b16 %v3898, %v3894
        %v4047 = vpack.c.b16 %v3899, %v3895
        %v4048 = vpack.c.b16 %v3900, %v3896
        %v4049 = vpack.c.b16 %v3901, %v3897
        %v4050 = vpack.c.b16 %v3906, %v3902
        %v4051 = vpack.c.b16 %v3907, %v3903
        %v4052 = vpack.c.b16 %v3908, %v3904
        %v4053 = vpack.c.b16 %v3909, %v3905
        %v4054 = vpack.c.b16 %v3914, %v3910
        %v4055 = vpack.c.b16 %v3915, %v3911
        %v4056 = vpack.c.b16 %v3916, %v3912
        %v4057 = vpack.c.b16 %v3917, %v3913
        %v4058 = vpack.c.b16 %v3922, %v3918
        %v4059 = vpack.c.b16 %v3923, %v3919
        %v4060 = vpack.c.b16 %v3924, %v3920
        %v4061 = vpack.c.b16 %v3925, %v3921
        %v4062 = vpack.c.b16 %v3930, %v3926
        %v4063 = vpack.c.b16 %v3931, %v3927
        %v4064 = vpack.c.b16 %v3932, %v3928
        %v4065 = vpack.c.b16 %v3933, %v3929
        %v4066 = vpack.c.b16 %v3938, %v3934
        %v4067 = vpack.c.b16 %v3939, %v3935
        %v4068 = vpack.c.b16 %v3940, %v3936
        %v4069 = vpack.c.b16 %v3941, %v3937
        %v4070 = vpack.c.b16 %v3946, %v3942
        %v4071 = vpack.c.b16 %v3947, %v3943
        %v4072 = vpack.c.b16 %v3948, %v3944
        %v4073 = vpack.c.b16 %v3949, %v3945
        %v4074 = vpack.c.b16 %v3954, %v3950
        %v4075 = vpack.c.b16 %v3955, %v3951
        %v4076 = vpack.c.b16 %v3956, %v3952
        %v4077 = vpack.c.b16 %v3957, %v3953
        %v4078 = vpack.c.b16 %v3962, %v3958
        %v4079 = vpack.c.b16 %v3963, %v3959
        %v4080 = vpack.c.b16 %v3964, %v3960
        %v4081 = vpack.c.b16 %v3965, %v3961
        %v4082 = vpack.c.b16 %v3970, %v3966
        %v4083 = vpack.c.b16 %v3971, %v3967
        %v4084 = vpack.c.b16 %v3972, %v3968
        %v4085 = vpack.c.b16 %v3973, %v3969
        %v4086 = vpack.c.b16 %v3978, %v3974
        %v4087 = vpack.c.b16 %v3979, %v3975
        %v4088 = vpack.c.b16 %v3980, %v3976
        %v4089 = vpack.c.b16 %v3981, %v3977
        %v4199 = vsel %vm2159, %v3654, 0
        %4201 = vmatpush.bf16.msra.mxu0 %v4010
        %4202 = vmatpush.bf16.msra.mxu0 %v4006
        %4203 = vmatpush.bf16.msra.mxu0 %v4002
        %4204 = vmatpush.bf16.msra.mxu0 %v3998
        %4205 = vmatpush.bf16.msra.mxu0 %v3994
        %4206 = vmatpush.bf16.msra.mxu0 %v3990
        %4207 = vmatpush.bf16.msra.mxu0 %v3986
        %4208 = vmatpush.bf16.msra.mxu0 %v3982
        %4209 = vmatmul.bf16.gmra.mxu0 %v3651
        %v4210 = vpop.f32.mrf.mxu0
        %v4211 = vadd.f32 0.0, %v4210
        %v4212 = vpop.f32.mrf.mxu0
        %v4213 = vadd.f32 0.0, %v4212
        %4214 = vdwg.mxu0
        %4215 = vmatpush.bf16.msra.mxu0 %v4042
        %4216 = vmatpush.bf16.msra.mxu0 %v4038
        %4217 = vmatpush.bf16.msra.mxu0 %v4034
        %4218 = vmatpush.bf16.msra.mxu0 %v4030
        %4219 = vmatpush.bf16.msra.mxu0 %v4026
        %4220 = vmatpush.bf16.msra.mxu0 %v4022
        %4221 = vmatpush.bf16.msra.mxu0 %v4018
        %4222 = vmatpush.bf16.msra.mxu0 %v4014
        %4223 = vmatmul.bf16.gmra.mxu0 %v3652
        %v4224 = vpop.f32.mrf.mxu0
        %v4225 = vadd.f32 %v4211, %v4224
        %v4226 = vpop.f32.mrf.mxu0
        %v4227 = vadd.f32 %v4213, %v4226
        %4228 = vdwg.mxu0
        %4229 = vmatpush.bf16.msra.mxu0 %v4074
        %4230 = vmatpush.bf16.msra.mxu0 %v4070
        %4231 = vmatpush.bf16.msra.mxu0 %v4066
        %4232 = vmatpush.bf16.msra.mxu0 %v4062
        %4233 = vmatpush.bf16.msra.mxu0 %v4058
        %4234 = vmatpush.bf16.msra.mxu0 %v4054
        %4235 = vmatpush.bf16.msra.mxu0 %v4050
        %4236 = vmatpush.bf16.msra.mxu0 %v4046
        %4237 = vmatmul.bf16.gmra.mxu0 %v3653
        %v4238 = vpop.f32.mrf.mxu0
        %v4239 = vadd.f32 %v4225, %v4238
        %v4240 = vpop.f32.mrf.mxu0
        %v4241 = vadd.f32 %v4227, %v4240
        %4242 = vdwg.mxu0
        %4243 = vmatpush.bf16.msra.mxu0 0
        %4244 = vmatpush.bf16.msra.mxu0 0
        %4245 = vmatpush.bf16.msra.mxu0 0
        %4246 = vmatpush.bf16.msra.mxu0 0
        %4247 = vmatpush.bf16.msra.mxu0 0
        %4248 = vmatpush.bf16.msra.mxu0 %v4086
        %4249 = vmatpush.bf16.msra.mxu0 %v4082
        %4250 = vmatpush.bf16.msra.mxu0 %v4078
        %4251 = vmatmul.bf16.gmra.mxu0 %v4199
        %v4252 = vpop.f32.mrf.mxu0
        %v4253 = vadd.f32 %v4239, %v4252
        %v4254 = vpop.f32.mrf.mxu0
        %v4255 = vadd.f32 %v4241, %v4254
        %4256 = vdwg.mxu0
        %4257 = vmatpush.bf16.msra.mxu0 %v4011
        %4258 = vmatpush.bf16.msra.mxu0 %v4007
        %4259 = vmatpush.bf16.msra.mxu0 %v4003
        %4260 = vmatpush.bf16.msra.mxu0 %v3999
        %4261 = vmatpush.bf16.msra.mxu0 %v3995
        %4262 = vmatpush.bf16.msra.mxu0 %v3991
        %4263 = vmatpush.bf16.msra.mxu0 %v3987
        %4264 = vmatpush.bf16.msra.mxu0 %v3983
        %4265 = vmatmul.bf16.gmra.mxu0 %v3651
        %v4266 = vpop.f32.mrf.mxu0
        %v4267 = vadd.f32 0.0, %v4266
        %v4268 = vpop.f32.mrf.mxu0
        %v4269 = vadd.f32 0.0, %v4268
        %4270 = vdwg.mxu0
        %4271 = vmatpush.bf16.msra.mxu0 %v4043
        %4272 = vmatpush.bf16.msra.mxu0 %v4039
        %4273 = vmatpush.bf16.msra.mxu0 %v4035
        %4274 = vmatpush.bf16.msra.mxu0 %v4031
        %4275 = vmatpush.bf16.msra.mxu0 %v4027
        %4276 = vmatpush.bf16.msra.mxu0 %v4023
        %4277 = vmatpush.bf16.msra.mxu0 %v4019
        %4278 = vmatpush.bf16.msra.mxu0 %v4015
        %4279 = vmatmul.bf16.gmra.mxu0 %v3652
        %v4280 = vpop.f32.mrf.mxu0
        %v4281 = vadd.f32 %v4267, %v4280
        %v4282 = vpop.f32.mrf.mxu0
        %v4283 = vadd.f32 %v4269, %v4282
        %4284 = vdwg.mxu0
        %4285 = vmatpush.bf16.msra.mxu0 %v4075
        %4286 = vmatpush.bf16.msra.mxu0 %v4071
        %4287 = vmatpush.bf16.msra.mxu0 %v4067
        %4288 = vmatpush.bf16.msra.mxu0 %v4063
        %4289 = vmatpush.bf16.msra.mxu0 %v4059
        %4290 = vmatpush.bf16.msra.mxu0 %v4055
        %4291 = vmatpush.bf16.msra.mxu0 %v4051
        %4292 = vmatpush.bf16.msra.mxu0 %v4047
        %4293 = vmatmul.bf16.gmra.mxu0 %v3653
        %v4294 = vpop.f32.mrf.mxu0
        %v4295 = vadd.f32 %v4281, %v4294
        %v4296 = vpop.f32.mrf.mxu0
        %v4297 = vadd.f32 %v4283, %v4296
        %4298 = vdwg.mxu0
        %4299 = vmatpush.bf16.msra.mxu0 0
        %4300 = vmatpush.bf16.msra.mxu0 0
        %4301 = vmatpush.bf16.msra.mxu0 0
        %4302 = vmatpush.bf16.msra.mxu0 0
        %4303 = vmatpush.bf16.msra.mxu0 0
        %4304 = vmatpush.bf16.msra.mxu0 %v4087
        %4305 = vmatpush.bf16.msra.mxu0 %v4083
        %4306 = vmatpush.bf16.msra.mxu0 %v4079
        %4307 = vmatmul.bf16.gmra.mxu0 %v4199
        %v4308 = vpop.f32.mrf.mxu0
        %v4309 = vadd.f32 %v4295, %v4308
        %v4310 = vpop.f32.mrf.mxu0
        %v4311 = vadd.f32 %v4297, %v4310
        %4312 = vdwg.mxu0
        %4313 = vmatpush.bf16.msra.mxu0 %v4012
        %4314 = vmatpush.bf16.msra.mxu0 %v4008
        %4315 = vmatpush.bf16.msra.mxu0 %v4004
        %4316 = vmatpush.bf16.msra.mxu0 %v4000
        %4317 = vmatpush.bf16.msra.mxu0 %v3996
        %4318 = vmatpush.bf16.msra.mxu0 %v3992
        %4319 = vmatpush.bf16.msra.mxu0 %v3988
        %4320 = vmatpush.bf16.msra.mxu0 %v3984
        %4321 = vmatmul.bf16.gmra.mxu0 %v3651
        %v4322 = vpop.f32.mrf.mxu0
        %v4323 = vadd.f32 0.0, %v4322
        %v4324 = vpop.f32.mrf.mxu0
        %v4325 = vadd.f32 0.0, %v4324
        %4326 = vdwg.mxu0
        %4327 = vmatpush.bf16.msra.mxu0 %v4044
        %4328 = vmatpush.bf16.msra.mxu0 %v4040
        %4329 = vmatpush.bf16.msra.mxu0 %v4036
        %4330 = vmatpush.bf16.msra.mxu0 %v4032
        %4331 = vmatpush.bf16.msra.mxu0 %v4028
        %4332 = vmatpush.bf16.msra.mxu0 %v4024
        %4333 = vmatpush.bf16.msra.mxu0 %v4020
        %4334 = vmatpush.bf16.msra.mxu0 %v4016
        %4335 = vmatmul.bf16.gmra.mxu0 %v3652
        %v4336 = vpop.f32.mrf.mxu0
        %v4337 = vadd.f32 %v4323, %v4336
        %v4338 = vpop.f32.mrf.mxu0
        %v4339 = vadd.f32 %v4325, %v4338
        %4340 = vdwg.mxu0
        %4341 = vmatpush.bf16.msra.mxu0 %v4076
        %4342 = vmatpush.bf16.msra.mxu0 %v4072
        %4343 = vmatpush.bf16.msra.mxu0 %v4068
        %4344 = vmatpush.bf16.msra.mxu0 %v4064
        %4345 = vmatpush.bf16.msra.mxu0 %v4060
        %4346 = vmatpush.bf16.msra.mxu0 %v4056
        %4347 = vmatpush.bf16.msra.mxu0 %v4052
        %4348 = vmatpush.bf16.msra.mxu0 %v4048
        %4349 = vmatmul.bf16.gmra.mxu0 %v3653
        %v4350 = vpop.f32.mrf.mxu0
        %v4351 = vadd.f32 %v4337, %v4350
        %v4352 = vpop.f32.mrf.mxu0
        %v4353 = vadd.f32 %v4339, %v4352
        %4354 = vdwg.mxu0
        %4355 = vmatpush.bf16.msra.mxu0 0
        %4356 = vmatpush.bf16.msra.mxu0 0
        %4357 = vmatpush.bf16.msra.mxu0 0
        %4358 = vmatpush.bf16.msra.mxu0 0
        %4359 = vmatpush.bf16.msra.mxu0 0
        %4360 = vmatpush.bf16.msra.mxu0 %v4088
        %4361 = vmatpush.bf16.msra.mxu0 %v4084
        %4362 = vmatpush.bf16.msra.mxu0 %v4080
        %4363 = vmatmul.bf16.gmra.mxu0 %v4199
        %v4364 = vpop.f32.mrf.mxu0
        %v4365 = vadd.f32 %v4351, %v4364
        %v4366 = vpop.f32.mrf.mxu0
        %v4367 = vadd.f32 %v4353, %v4366
        %4368 = vdwg.mxu0
        %4369 = vmatpush.bf16.msra.mxu0 %v4013
        %4370 = vmatpush.bf16.msra.mxu0 %v4009
        %4371 = vmatpush.bf16.msra.mxu0 %v4005
        %4372 = vmatpush.bf16.msra.mxu0 %v4001
        %4373 = vmatpush.bf16.msra.mxu0 %v3997
        %4374 = vmatpush.bf16.msra.mxu0 %v3993
        %4375 = vmatpush.bf16.msra.mxu0 %v3989
        %4376 = vmatpush.bf16.msra.mxu0 %v3985
        %4377 = vmatmul.bf16.gmra.mxu0 %v3651
        %v4378 = vpop.f32.mrf.mxu0
        %v4379 = vadd.f32 0.0, %v4378
        %v4380 = vpop.f32.mrf.mxu0
        %v4381 = vadd.f32 0.0, %v4380
        %4382 = vdwg.mxu0
        %4383 = vmatpush.bf16.msra.mxu0 %v4045
        %4384 = vmatpush.bf16.msra.mxu0 %v4041
        %4385 = vmatpush.bf16.msra.mxu0 %v4037
        %4386 = vmatpush.bf16.msra.mxu0 %v4033
        %4387 = vmatpush.bf16.msra.mxu0 %v4029
        %4388 = vmatpush.bf16.msra.mxu0 %v4025
        %4389 = vmatpush.bf16.msra.mxu0 %v4021
        %4390 = vmatpush.bf16.msra.mxu0 %v4017
        %4391 = vmatmul.bf16.gmra.mxu0 %v3652
        %v4392 = vpop.f32.mrf.mxu0
        %v4393 = vadd.f32 %v4379, %v4392
        %v4394 = vpop.f32.mrf.mxu0
        %v4395 = vadd.f32 %v4381, %v4394
        %4396 = vdwg.mxu0
        %4397 = vmatpush.bf16.msra.mxu0 %v4077
        %4398 = vmatpush.bf16.msra.mxu0 %v4073
        %4399 = vmatpush.bf16.msra.mxu0 %v4069
        %4400 = vmatpush.bf16.msra.mxu0 %v4065
        %4401 = vmatpush.bf16.msra.mxu0 %v4061
        %4402 = vmatpush.bf16.msra.mxu0 %v4057
        %4403 = vmatpush.bf16.msra.mxu0 %v4053
        %4404 = vmatpush.bf16.msra.mxu0 %v4049
        %4405 = vmatmul.bf16.gmra.mxu0 %v3653
        %v4406 = vpop.f32.mrf.mxu0
        %v4407 = vadd.f32 %v4393, %v4406
        %v4408 = vpop.f32.mrf.mxu0
        %v4409 = vadd.f32 %v4395, %v4408
        %4410 = vdwg.mxu0
        %4411 = vmatpush.bf16.msra.mxu0 0
        %4412 = vmatpush.bf16.msra.mxu0 0
        %4413 = vmatpush.bf16.msra.mxu0 0
        %4414 = vmatpush.bf16.msra.mxu0 0
        %4415 = vmatpush.bf16.msra.mxu0 0
        %4416 = vmatpush.bf16.msra.mxu0 %v4089
        %4417 = vmatpush.bf16.msra.mxu0 %v4085
        %4418 = vmatpush.bf16.msra.mxu0 %v4081
        %4419 = vmatmul.bf16.gmra.mxu0 %v4199
        %v4420 = vpop.f32.mrf.mxu0
        %v4421 = vadd.f32 %v4407, %v4420
        %v4422 = vpop.f32.mrf.mxu0
        %v4423 = vadd.f32 %v4409, %v4422
        %4424 = vdwg.mxu0
        %v4425 = vld [vmem:[%s6] sm:$0xff]
        %v4426 = vld [vmem:[%s6 + $0x8] sm:$0xff]
        %4428 = vset.pattern.permute.xlu0 0
        %4429 = vperm.xlu0 %4428, %v4425
        %v4430 = vpop.permute.xlu0 %4429
        %4433 = vset.pattern.permute.xlu0 0
        %4434 = vperm.xlu0 %4433, %v4426
        %v4435 = vpop.permute.xlu0 %4434
        %v4437 = vmul.f32 %v4253, %v4430
        %v4438 = vmul.f32 %v4309, %v4430
        %v4439 = vmul.f32 %v4365, %v4430
        %v4440 = vmul.f32 %v4421, %v4430
        %v4441 = vmul.f32 %v4255, %v4435
        %v4442 = vmul.f32 %v4311, %v4435
        %v4443 = vmul.f32 %v4367, %v4435
        %v4444 = vmul.f32 %v4423, %v4435
        %v4445 = vld [vmem:[%s7] sm:$0xff]
        %v4446 = vld [vmem:[%s7 + $0x8] sm:$0xff]
        %4448 = vset.pattern.permute.xlu0 0
        %4449 = vperm.xlu0 %4448, %v4445
        %v4450 = vpop.permute.xlu0 %4449
        %4453 = vset.pattern.permute.xlu0 0
        %4454 = vperm.xlu0 %4453, %v4446
        %v4455 = vpop.permute.xlu0 %4454
        %v4457 = vadd.f32 %v4437, %v4450
        %v4458 = vadd.f32 %v4438, %v4450
        %v4459 = vadd.f32 %v4439, %v4450
        %v4460 = vadd.f32 %v4440, %v4450
        %v4461 = vadd.f32 %v4441, %v4455
        %v4462 = vadd.f32 %v4442, %v4455
        %v4463 = vadd.f32 %v4443, %v4455
        %v4464 = vadd.f32 %v4444, %v4455
        %v4465 = vadd.f32 %v4457, %v344
        %v4466 = vadd.f32 %v4458, %v345
        %v4467 = vadd.f32 %v4459, %v346
        %v4468 = vadd.f32 %v4460, %v347
        %v4469 = vadd.f32 %v4461, %v348
        %v4470 = vadd.f32 %v4462, %v349
        %v4471 = vadd.f32 %v4463, %v350
        %v4472 = vadd.f32 %v4464, %v351
        %v4473 = vmax.f32 %v4465, 0.0
        %v4474 = vmax.f32 %v4466, 0.0
        %v4475 = vmax.f32 %v4467, 0.0
        %v4476 = vmax.f32 %v4468, 0.0
        %v4477 = vmax.f32 %v4469, 0.0
        %v4478 = vmax.f32 %v4470, 0.0
        %v4479 = vmax.f32 %v4471, 0.0
        %v4480 = vmax.f32 %v4472, 0.0
        %4481 = vst [vmem:[%s342] sm:$0xff] %v4473
        %4482 = vst [vmem:[%s342 + $0x8] sm:$0xff] %v4474
        %4483 = vst [vmem:[%s342 + $0x10] sm:$0xff] %v4475
        %4484 = vst [vmem:[%s342 + $0x18] sm:$0xff] %v4476
        %4485 = vst [vmem:[%s342 + $0x20] sm:$0xff] %v4477
        %4486 = vst [vmem:[%s342 + $0x28] sm:$0xff] %v4478
        %4487 = vst [vmem:[%s342 + $0x30] sm:$0xff] %v4479
        %4488 = vst [vmem:[%s342 + $0x38] sm:$0xff] %v4480
        %s4489 = sand.u32 %s207, 1
        %s4490 = scalar_lea.sflag [#allocation5], %s4489
        %s4491 = sand.u32 %s207, 1
        %s4492 = smul.addr %s4491, 64
        %s4493 = scalar_lea.vmem [#allocation8], %s4492
        // Predicated region
        $region61: #{tpu_custom_call.1} parent=51 // pred_check
          %p4494 = pneg %p217
        $region62: #{tpu_custom_call.1} parent=51 // pred_check_branch
          %4496 = sbr.rel (%p4494) target = $region64
        $region63: #{tpu_custom_call.1} parent=51 // pred_region
          %4498 = vsyncadd %s4490, 0
          %s4499 = smul.addr %s26, 8
          %s4500 = smul.addr %s4499, 8
          %s4501 = scalar_lea.hbm %s8, %s4500
          %s4502 = sshll.u32 %s4493, 4
          %s4503 = int_to_ptr.vmem [resolvable:$true] %s4502
          %s4504 = sshll.u32 %s4501, 4
          %s4505 = int_to_ptr.hbm [resolvable:$true] %s4504
          %4510 = dma.vmem_to_hbm [thread:$0]  %s4503, 1024, %s4505, %s4490, 512, 512, 32
        $region64: #{tpu_custom_call.1} parent=51 // pred_fallthru
          _
      $region52: #{tpu_custom_call.1} parent=5 // pred_fallthru
        _
      %p4511 = scmp.le.s32.totalorder 2, %s21
      // Predicated region
      $region65: #{tpu_custom_call.1} parent=5 // pred_check
        %p4512 = pneg %p4511
      $region66: #{tpu_custom_call.1} parent=5 // pred_check_branch
        %4514 = sbr.rel (%p4512) target = $region68
      $region67: #{tpu_custom_call.1} parent=5 // pred_region
        %s4515 = ssub.s32 %s21, 2
        // Predicated region
        $region69: #{tpu_custom_call.1} parent=67 // pred_check
          %p4516 = pneg %p223
        $region70: #{tpu_custom_call.1} parent=67 // pred_check_branch
          %4518 = sbr.rel (%p4516) target = $region72
        $region71: #{tpu_custom_call.1} parent=67 // pred_region
          %s4519 = sand.u32 %s208, 1
          %s4520 = scalar_lea.sflag [#allocation5], %s4519
          %s4521 = sand.u32 %s208, 1
          %s4522 = smul.addr %s4521, 64
          %s4523 = scalar_lea.vmem [#allocation8], %s4522
          %4525 = dma.done %s4520, 1024
        $region72: #{tpu_custom_call.1} parent=67 // pred_fallthru
          _
      $region68: #{tpu_custom_call.1} parent=5 // pred_fallthru
        _
    $region6: #{tpu_custom_call.1} parent=1 // loop_footer
      %s25 = sadd.s32 1, %s21
    $region7: #{tpu_custom_call.1} parent=1 // loop_footer_branch
      %20 = sbr.rel target = $region3
    $region8: #{tpu_custom_call.1} parent=1 // loop_exit
      _
    %4526 = vsyncpa [#allocation4], 1
    %s4527 = scalar_lea.sflag [#allocation4], 1
    %4528 = vsyncpa %s4527, 1
    %4529 = vsyncpa [#allocation7], 1
    %4530 = vsyncpa [#allocation5], 1
    %s4531 = scalar_lea.sflag [#allocation5], 1
    %4532 = vsyncpa %s4531, 1

</llo_original>
